<compile_context>
chip_gen: v6e
topology: v6e:2x2x1
jax: 0.10.0
libtpu: 0.0.40
codegen_flags: <defaults>
</compile_context>

<pallas_src>
import functools

import jax
import jax.numpy as jnp
from jax.experimental import pallas as pl
from jax.experimental.pallas import tpu as pltpu

LN_EPS = 1e-5                       # nn.LayerNorm default
_SQRT_2_OVER_PI = 0.7978845608028654

_WEIGHT_KEYS = ("convw", "convb", "lnpack", "w1", "b1", "w2")


# --------------------------- hardware-aware sizing ----------------------------

@functools.lru_cache(maxsize=1)
def _vmem_capacity_bytes():
    try:
        return int(pltpu.get_tpu_info().vmem_capacity_bytes)
    except Exception:
        return 64 << 20          # conservative (v7x-sized) fallback


@functools.lru_cache(maxsize=1)
def _num_tensorcores():
    # v7x has 2 TensorCores/chip; a 'parallel' grid axis should have >= 2 steps there.
    try:
        if "v7" in jax.devices()[0].device_kind.lower():
            return 2
    except Exception:
        pass
    return 1


def _vmem_limit_bytes():
    # ~96-100 MiB on 128-MiB chips (v5e/v6e), ~48 MiB on v7x's 64 MiB.
    return min(int(_vmem_capacity_bytes() * 0.75), 100 << 20)


def _act_tile_budget_bytes():
    # (rows, D) f32 tile budget; intermediates (notably the (rows, 4D) FFN value)
    # and double-buffering take roughly 10-12x this, hence limit // 12.
    return max(4 << 20, _vmem_limit_bytes() // 12)


# ------------------------------ tiling helpers --------------------------------

def _batch_tile(n_batch, seq_len, dim, budget_bytes, min_tiles=1, row_cap=4096):
    """Largest batch fold Bb dividing n_batch such that the (Bb*T, D) f32 tile fits
    the budget, Bb*T is sublane aligned (or the full extent), and at least
    `min_tiles` grid steps remain on the parallel batch axis (v7x megacore)."""
    min_tiles = max(1, min(min_tiles, n_batch))
    best = 1
    for cand in range(1, n_batch + 1):
        if n_batch % cand:
            continue
        if n_batch // cand < min_tiles:
            continue
        rows = cand * seq_len
        if rows * dim * 4 > budget_bytes or rows > row_cap:
            continue
        if rows % 8 == 0 or cand == n_batch:
            best = cand
    return best


def _vocab_tile(n_vocab, cap=1024):
    """Vocab tile: full V if small, else the largest multiple-of-128 divisor <= cap."""
    if n_vocab <= cap:
        return n_vocab
    for t in range(cap, 127, -128):
        if n_vocab % t == 0:
            return t
    return n_vocab


# ----------------------------- elementwise helpers -----------------------------

def _layernorm(x, g, b):
    mu = jnp.mean(x, axis=-1, keepdims=True)
    var = jnp.mean((x - mu) ** 2, axis=-1, keepdims=True)
    return (x - mu) * jax.lax.rsqrt(var + LN_EPS) * g + b


def _gelu(x):
    # tanh-approximate GELU computed in x's dtype: on the FFN path x is bf16 so the
    # polynomial runs on the bf16 VPU and the tanh on the EUP (v6e/v7x); on v5e the
    # compiler extends to f32 (neutral).
    inner = _SQRT_2_OVER_PI * (x + 0.044715 * (x * x * x))
    return 0.5 * x * (1.0 + jnp.tanh(inner))


# ----------------------------- Pallas kernels ---------------------------------

def _mixer_block_body(x, convw, convb, lnpack, w1, b1, w2):
    """One MixerBlock on a folded (Bb*T, D) f32 tile.

    convw/w1/w2 are bf16 (MXU-native); LayerNorm / residuals stay f32.
    lnpack stacks (ln1g, ln1b, ln2g, ln2b, ffn_b2) -> (5, D).
    """
    rows, d = x.shape
    t = convw.shape[0]
    n_seq = rows // t
    ln1g, ln1b, ln2g, ln2b, b2 = (lnpack[0:1], lnpack[1:2], lnpack[2:3],
                                  lnpack[3:4], lnpack[4:5])

    # token mixing: causal Conv1d(kernel=1) == tril-masked (T,T) matmul per sequence,
    # executed as ONE batched MXU contraction (no per-sequence slices / concats).
    y = _layernorm(x, ln1g, ln1b).astype(jnp.bfloat16)
    y3 = y.reshape(n_seq, t, d)
    cw = jnp.broadcast_to(convw, (n_seq, t, t))
    mixed = jnp.einsum("sft,std->sfd", cw, y3,
                       preferred_element_type=jnp.float32) + convb   # (s, t, d)
    x = mixed.reshape(rows, d) + x

    # channel mixing FFN on the folded (Bb*T, D) slab (big MXU M dimension)
    z = _layernorm(x, ln2g, ln2b).astype(jnp.bfloat16)
    h = jnp.dot(z, w1, preferred_element_type=jnp.float32) + b1
    h = _gelu(h.astype(jnp.bfloat16))
    h = jnp.dot(h, w2, preferred_element_type=jnp.float32) + b2
    return h + x


def _mixer_stack_kernel(x_ref, convw_ref, convb_ref, lnpack_ref,
                        w1_ref, b1_ref, w2_ref, o_ref):
    # grid = (batch_tile, layer); activation stays resident in o_ref across layers.
    @pl.when(pl.program_id(1) == 0)
    def _():
        o_ref[...] = x_ref[...]

    o_ref[...] = _mixer_block_body(
        o_ref[...], convw_ref[0], convb_ref[0], lnpack_ref[0],
        w1_ref[0], b1_ref[0], w2_ref[0])


def _proj_mixer_stack_kernel(s_ref, pw_ref, pb_ref,
                             convw_ref, convb_ref, lnpack_ref,
                             w1_ref, b1_ref, w2_ref, o_ref):
    # Decoder stack with the (D/2 -> D) projection fused in at layer 0 so the
    # projected activations never hit HBM.
    @pl.when(pl.program_id(1) == 0)
    def _():
        s = s_ref[...].astype(jnp.bfloat16)
        o_ref[...] = (jnp.dot(s, pw_ref[...], preferred_element_type=jnp.float32)
                      + pb_ref[...])

    o_ref[...] = _mixer_block_body(
        o_ref[...], convw_ref[0], convb_ref[0], lnpack_ref[0],
        w1_ref[0], b1_ref[0], w2_ref[0])


def _lm_head_ce_kernel(x_ref, w_ref, labels_ref, logits_ref, loss_ref,
                       m_ref, l_ref, p_ref):
    # grid = (batch_tile, vocab_tile); flash-style online LSE over vocab tiles.
    vt = pl.program_id(1)
    nv = pl.num_programs(1)
    tv = w_ref.shape[-1]

    @pl.when(vt == 0)
    def _():
        m_ref[...] = jnp.full(m_ref.shape, -jnp.inf, m_ref.dtype)
        l_ref[...] = jnp.zeros(l_ref.shape, l_ref.dtype)
        p_ref[...] = jnp.zeros(p_ref.shape, p_ref.dtype)
        loss_ref[...] = jnp.zeros(loss_ref.shape, loss_ref.dtype)

    logits = jnp.dot(x_ref[...].astype(jnp.bfloat16), w_ref[...],
                     preferred_element_type=jnp.float32)          # (R, TV) f32
    logits_ref[...] = logits.astype(logits_ref.dtype)             # bf16 to HBM

    m_prev = m_ref[...]
    m_new = jnp.maximum(m_prev, jnp.max(logits, axis=-1, keepdims=True))
    alpha = jnp.exp(m_prev - m_new)
    l_ref[...] = alpha * l_ref[...] + jnp.sum(jnp.exp(logits - m_new),
                                              axis=-1, keepdims=True)
    m_ref[...] = m_new

    # picked logit for the label class: subtract the vocab-tile offset from the
    # (R,1) labels instead of adding it to the (R,TV) iota.
    cls = jax.lax.broadcasted_iota(jnp.int32, logits.shape, 1)
    local_labels = labels_ref[...] - vt * tv
    p_ref[...] += jnp.sum(jnp.where(cls == local_labels, logits, 0.0),
                          axis=-1, keepdims=True)

    @pl.when(vt == nv - 1)
    def _():
        nll = m_ref[...] + jnp.log(l_ref[...]) - p_ref[...]       # (R, 1)
        loss_ref[...] = jnp.reshape(jnp.sum(nll), (1, 1, 1))


# ------------------------------- wrappers --------------------------------------

def mixer_stack(x2, wts, *, proj=None):
    """Run a whole stack of MixerBlocks in one pallas_call.

    x2:  (B*T, Din) f32 activations (Din == D for the encoder, D//2 for the
         decoder when `proj` is given).
    wts: dict of per-layer weights stacked on a leading layer axis.
    """
    n_layers, t, _ = wts["convw"].shape
    d = wts["w2"].shape[-1]
    rows_total, din = x2.shape
    n_batch = rows_total // t
    bb = _batch_tile(n_batch, t, d, _act_tile_budget_bytes(),
                     min_tiles=_num_tensorcores())
    nb = n_batch // bb
    rows = bb * t

    w_arrays = [wts[k] for k in _WEIGHT_KEYS]
    w_specs = [pl.BlockSpec((1,) + a.shape[1:], lambda b, l: (l, 0, 0))
               for a in w_arrays]

    in_specs = [pl.BlockSpec((rows, din), lambda b, l: (b, 0))]
    operands = [x2]
    if proj is None:
        kernel = _mixer_stack_kernel
    else:
        pw, pb = proj
        in_specs += [pl.BlockSpec(pw.shape, lambda b, l: (0, 0)),
                     pl.BlockSpec(pb.shape, lambda b, l: (0, 0))]
        operands += [pw, pb]
        kernel = _proj_mixer_stack_kernel
    in_specs += w_specs
    operands += w_arrays

    return pl.pallas_call(
        kernel,
        out_shape=jax.ShapeDtypeStruct((rows_total, d), jnp.float32),
        grid=(nb, n_layers),
        in_specs=in_specs,
        out_specs=pl.BlockSpec((rows, d), lambda b, l: (b, 0)),
        compiler_params=pltpu.CompilerParams(
            dimension_semantics=("parallel", "arbitrary"),
            vmem_limit_bytes=_vmem_limit_bytes()),
    )(*operands)


def pallas_lm_head_ce(x2, w_t, labels, n_batch, length):
    rows_total, d = x2.shape
    v = w_t.shape[1]
    vmem_limit = _vmem_limit_bytes()
    tv = _vocab_tile(v)

    # Size rows against an explicit working-set estimate so the double-buffered x /
    # bf16 weight / bf16 logits tiles plus f32 intermediates and scratch stay well
    # under the scoped VMEM limit (critical on v7x's 64 MiB).
    budget = int(vmem_limit * 0.6)
    wt_db = d * tv * 2 * 2                       # bf16 weight tile, double buffered
    per_row = d * 4 * 2 + tv * 20 + 16           # x (db) + logits (db + f32 temps) + scratch
    row_cap = max(length, (budget - wt_db) // per_row)
    bb = _batch_tile(n_batch, length, d, budget,
                     min_tiles=_num_tensorcores(), row_cap=row_cap)
    nb = n_batch // bb
    rows = bb * length
    nv = v // tv

    labels2 = labels.astype(jnp.int32).reshape(rows_total, 1)
    logits, loss_sums = pl.pallas_call(
        _lm_head_ce_kernel,
        out_shape=(jax.ShapeDtypeStruct((rows_total, v), jnp.bfloat16),
                   jax.ShapeDtypeStruct((nb, 1, 1), jnp.float32)),
        grid=(nb, nv),
        in_specs=[pl.BlockSpec((rows, d), lambda b, j: (b, 0)),
                  pl.BlockSpec((d, tv), lambda b, j: (0, j)),
                  pl.BlockSpec((rows, 1), lambda b, j: (b, 0))],
        out_specs=(pl.BlockSpec((rows, tv), lambda b, j: (b, j)),
                   pl.BlockSpec((1, 1, 1), lambda b, j: (b, 0, 0))),
        scratch_shapes=[pltpu.VMEM((rows, 1), jnp.float32)] * 3,
        compiler_params=pltpu.CompilerParams(
            dimension_semantics=("parallel", "arbitrary"),
            vmem_limit_bytes=vmem_limit),
    )(x2, w_t, labels2)
    loss = jnp.sum(loss_sums) / (n_batch * length)   # CrossEntropyLoss(reduction='mean')
    return loss, logits


# ---------------------------- model (glue + kernels) ---------------------------

def autoencoding_mixer_forward(params, input_ids, labels, dim, length):
    if dim != length:
        # the unroll sliding-window path (as used in the PyTorch module) needs dim == length
        raise ValueError("unroll path requires dim == length")
    n_batch, t = input_ids.shape

    x = jnp.take(params["wte"], input_ids, axis=0)                 # (B, T, D)
    x2 = x.reshape(n_batch * t, dim)
    x2 = mixer_stack(x2, params["enc"])                            # fused encoder stack

    e = x2.reshape(n_batch, t, dim)[:, -1, :]                      # (B, D)
    half = dim // 2
    # sliding-window unroll as a single modular gather (equivalent to the PyTorch loop)
    idx = (jnp.arange(length)[:, None] + jnp.arange(half)[None, :]) % dim
    stacked = jnp.take(e, idx, axis=1).reshape(n_batch * t, half)  # (B*T, D//2)

    # compression == 1 -> no down/up projection; decoder stack with fused projection
    x2 = mixer_stack(stacked, params["dec"],
                     proj=(params["proj_w"], params["proj_b"]))

    loss, logits2 = pallas_lm_head_ce(x2, params["lm_w_t"], labels, n_batch, t)
    logits = logits2.reshape(n_batch, t, -1)                       # (B, T, V) bf16, lane-dense
    # Match the module's 'b t e -> b e t' output layout.  The transpose runs on
    # bf16 logits (half the previous HBM cost); consumers that can accept (B,T,V)
    # should use `logits` directly and skip it.
    output = jnp.transpose(logits, (0, 2, 1))
    return loss, output


# ---------------------------- pure-JAX reference --------------------------------

def _unroll_embedding(e, dim, length):
    # e: (B, 1, D). Reproduces the PyTorch sliding-window loop exactly.
    half = dim // 2
    chunks = []
    for i in range(length):
        w = e[..., i:i + half]
        if i + half > dim:
            residual = i + half - length
            w = jnp.concatenate((w, e[..., :residual]), axis=2)
        chunks.append(w)
    return jnp.concatenate(chunks, axis=1)     # (B, length, dim//2)


def _ref_block(x, p, l):
    ln1g, ln1b, ln2g, ln2b, b2 = [p["lnpack"][l, i:i + 1] for i in range(5)]
    y = _layernorm(x, ln1g, ln1b).astype(jnp.bfloat16)
    c = jnp.einsum("ft,btd->bfd", p["convw"][l], y,
                   preferred_element_type=jnp.float32) + p["convb"][l]
    x = c + x
    z = _layernorm(x, ln2g, ln2b).astype(jnp.bfloat16)
    h = jnp.dot(z, p["w1"][l], preferred_element_type=jnp.float32) + p["b1"][l]
    h = _gelu(h.astype(jnp.bfloat16))
    h = jnp.dot(h, p["w2"][l], preferred_element_type=jnp.float32) + b2
    return h + x


def ref_forward(params, input_ids, labels, dim, length):
    depth = params["enc"]["convw"].shape[0]
    x = jnp.take(params["wte"], input_ids, axis=0)
    for l in range(depth):
        x = _ref_block(x, params["enc"], l)
    e = x[:, -1:, :]
    stacked = _unroll_embedding(e, dim, length)
    x = (jnp.dot(stacked.astype(jnp.bfloat16), params["proj_w"],
                 preferred_element_type=jnp.float32) + params["proj_b"])
    for l in range(depth):
        x = _ref_block(x, params["dec"], l)
    logits = jnp.dot(x.astype(jnp.bfloat16), params["lm_w_t"],
                     preferred_element_type=jnp.float32)
    logp = jax.nn.log_softmax(logits, axis=-1)
    nll = -jnp.take_along_axis(logp, labels[..., None], axis=-1)[..., 0]
    return jnp.mean(nll), jnp.transpose(logits, (0, 2, 1))


# ------------------------------- parameters --------------------------------------

def init_params(key, n_vocab, dim, depth, length):
    inner = 4 * dim
    half = dim // 2
    keys = iter(jax.random.split(key, 32))

    def nrm(shape, scale=0.02, dtype=jnp.float32):
        return (scale * jax.random.normal(next(keys), shape)).astype(dtype)

    def stack_params():
        ones = jnp.ones((depth, 1, dim), jnp.float32)
        zeros = jnp.zeros((depth, 1, dim), jnp.float32)
        # matmul weights stored bf16 (MXU-native); biases & LN params stay f32.
        return {
            "convw": jnp.tril(nrm((depth, length, length), 0.2)).astype(jnp.bfloat16),
            "convb": nrm((depth, length, 1), 0.1),
            # (ln1g, ln1b, ln2g, ln2b, ffn_b2) packed -> single DMA per layer step
            "lnpack": jnp.concatenate(
                [ones, zeros, ones, zeros, nrm((depth, 1, dim))], axis=1),
            "w1": nrm((depth, dim, inner), dtype=jnp.bfloat16),
            "b1": nrm((depth, 1, inner)),
            "w2": nrm((depth, inner, dim), dtype=jnp.bfloat16),
        }

    return {
        "wte": nrm((n_vocab, dim), 1.0),
        "enc": stack_params(),
        "dec": stack_params(),
        "proj_w": nrm((half, dim), dtype=jnp.bfloat16),
        "proj_b": nrm((1, dim)),
        "lm_w_t": nrm((dim, n_vocab), dtype=jnp.bfloat16),   # Linear(dim, n_vocab, bias=False), pre-transposed
    }


if __name__ == "__main__":
    # small shapes; the unroll sliding-window path requires length == dim
    B, T, D, V, DEPTH = 2, 16, 16, 32, 2

    key = jax.random.PRNGKey(0)
    kp, kin, klab = jax.random.split(key, 3)
    params = init_params(kp, V, D, DEPTH, T)
    input_ids = jax.random.randint(kin, (B, T), 0, V)
    labels = jax.random.randint(klab, (B, T), 0, V)

    fwd = jax.jit(functools.partial(autoencoding_mixer_forward, dim=D, length=T))
    loss, output = fwd(params, input_ids, labels)
    jax.block_until_ready((loss, output))

    ref_loss, ref_out = ref_forward(params, input_ids, labels, D, T)
    assert bool(jnp.isfinite(loss)), "loss is not finite"
    assert jnp.allclose(loss, ref_loss, atol=5e-2, rtol=5e-2), (loss, ref_loss)
    assert jnp.allclose(output.astype(jnp.float32), ref_out, atol=5e-2, rtol=5e-2)

    print("KERNEL_OK")
</pallas_src>

<mosaic_0001>
module attributes {stable_mosaic.version = 11 : i64} {
  func.func @_mixer_stack_kernel(%arg0: i32, %arg1: i32, %arg2: memref<32x16xf32, #tpu.memory_space<vmem>>, %arg3: memref<1x16x16xbf16, #tpu.memory_space<vmem>>, %arg4: memref<1x16x1xf32, #tpu.memory_space<vmem>>, %arg5: memref<1x5x16xf32, #tpu.memory_space<vmem>>, %arg6: memref<1x16x64xbf16, #tpu.memory_space<vmem>>, %arg7: memref<1x1x64xf32, #tpu.memory_space<vmem>>, %arg8: memref<1x64x16xbf16, #tpu.memory_space<vmem>>, %arg9: memref<32x16xf32, #tpu.memory_space<vmem>>) attributes {dimension_semantics = [#tpu.dimension_semantics<parallel>, #tpu.dimension_semantics<arbitrary>], iteration_bounds = array<i64: 1, 2>, scalar_prefetch = 0 : i64, scratch_operands = 0 : i64, tpu.core_type = #tpu.core_type<tc>, window_params = [{transform_indices = @transform_0, window_bounds = array<i64: 32, 16>}, {transform_indices = @transform_1, window_bounds = array<i64: 1, 16, 16>}, {transform_indices = @transform_2, window_bounds = array<i64: 1, 16, 1>}, {transform_indices = @transform_3, window_bounds = array<i64: 1, 5, 16>}, {transform_indices = @transform_4, window_bounds = array<i64: 1, 16, 64>}, {transform_indices = @transform_5, window_bounds = array<i64: 1, 1, 64>}, {transform_indices = @transform_6, window_bounds = array<i64: 1, 64, 16>}, {transform_indices = @transform_7, window_bounds = array<i64: 32, 16>}]} {
    %c0_i32 = arith.constant 0 : i32
    %0 = arith.cmpi eq, %arg1, %c0_i32 : i32
    %1 = arith.extui %0 : i1 to i32
    %c0_i32_0 = arith.constant 0 : i32
    %2 = arith.cmpi ne, %1, %c0_i32_0 : i32
    scf.if %2 {
      %c0_38 = arith.constant 0 : index
      %c0_39 = arith.constant 0 : index
      %98 = vector.load %arg2[%c0_38, %c0_39] : memref<32x16xf32, #tpu.memory_space<vmem>>, vector<32x16xf32>
      %c0_40 = arith.constant 0 : index
      %c0_41 = arith.constant 0 : index
      %99 = vector.load %arg9[%c0_40, %c0_41] : memref<32x16xf32, #tpu.memory_space<vmem>>, vector<32x16xf32>
      tpu.vector_store %arg9[%c0_40, %c0_41], %98 {strides = array<i32>} : memref<32x16xf32, #tpu.memory_space<vmem>>, vector<32x16xf32>,
    } else {
    }
    %c0 = arith.constant 0 : index
    %c0_1 = arith.constant 0 : index
    %3 = vector.load %arg9[%c0, %c0_1] : memref<32x16xf32, #tpu.memory_space<vmem>>, vector<32x16xf32>
    %c0_2 = arith.constant 0 : index
    %c0_3 = arith.constant 0 : index
    %c0_4 = arith.constant 0 : index
    %4 = vector.load %arg3[%c0_2, %c0_3, %c0_4] : memref<1x16x16xbf16, #tpu.memory_space<vmem>>, vector<1x16x16xbf16>
    %5 = vector.shape_cast %4 : vector<1x16x16xbf16> to vector<16x16xbf16>
    %c0_5 = arith.constant 0 : index
    %c0_6 = arith.constant 0 : index
    %c0_7 = arith.constant 0 : index
    %6 = vector.load %arg4[%c0_5, %c0_6, %c0_7] : memref<1x16x1xf32, #tpu.memory_space<vmem>>, vector<1x16x1xf32>
    %7 = vector.shape_cast %6 : vector<1x16x1xf32> to vector<16x1xf32>
    %c0_8 = arith.constant 0 : index
    %c0_9 = arith.constant 0 : index
    %c0_10 = arith.constant 0 : index
    %8 = vector.load %arg5[%c0_8, %c0_9, %c0_10] : memref<1x5x16xf32, #tpu.memory_space<vmem>>, vector<1x5x16xf32>
    %9 = vector.shape_cast %8 : vector<1x5x16xf32> to vector<5x16xf32>
    %c0_11 = arith.constant 0 : index
    %c0_12 = arith.constant 0 : index
    %c0_13 = arith.constant 0 : index
    %10 = vector.load %arg6[%c0_11, %c0_12, %c0_13] : memref<1x16x64xbf16, #tpu.memory_space<vmem>>, vector<1x16x64xbf16>
    %11 = vector.shape_cast %10 : vector<1x16x64xbf16> to vector<16x64xbf16>
    %c0_14 = arith.constant 0 : index
    %c0_15 = arith.constant 0 : index
    %c0_16 = arith.constant 0 : index
    %12 = vector.load %arg7[%c0_14, %c0_15, %c0_16] : memref<1x1x64xf32, #tpu.memory_space<vmem>>, vector<1x1x64xf32>
    %13 = vector.shape_cast %12 : vector<1x1x64xf32> to vector<1x64xf32>
    %c0_17 = arith.constant 0 : index
    %c0_18 = arith.constant 0 : index
    %c0_19 = arith.constant 0 : index
    %14 = vector.load %arg8[%c0_17, %c0_18, %c0_19] : memref<1x64x16xbf16, #tpu.memory_space<vmem>>, vector<1x64x16xbf16>
    %15 = vector.shape_cast %14 : vector<1x64x16xbf16> to vector<64x16xbf16>
    %16 = vector.extract_strided_slice %9 {offsets = [0, 0], sizes = [1, 16], strides = [1, 1]} : vector<5x16xf32> to vector<1x16xf32>
    %17 = vector.extract_strided_slice %9 {offsets = [1, 0], sizes = [1, 16], strides = [1, 1]} : vector<5x16xf32> to vector<1x16xf32>
    %18 = vector.extract_strided_slice %9 {offsets = [2, 0], sizes = [1, 16], strides = [1, 1]} : vector<5x16xf32> to vector<1x16xf32>
    %19 = vector.extract_strided_slice %9 {offsets = [3, 0], sizes = [1, 16], strides = [1, 1]} : vector<5x16xf32> to vector<1x16xf32>
    %20 = vector.extract_strided_slice %9 {offsets = [4, 0], sizes = [1, 16], strides = [1, 1]} : vector<5x16xf32> to vector<1x16xf32>
    %cst = arith.constant dense<0.000000e+00> : vector<32xf32>
    %21 = vector.multi_reduction <add>, %3, %cst [1] : vector<32x16xf32> to vector<32xf32>
    %22 = vector.shape_cast %21 : vector<32xf32> to vector<32x1xf32>
    %cst_20 = arith.constant 1.600000e+01 : f32
    %23 = vector.broadcast %cst_20 : f32 to vector<32x1xf32>
    %24 = arith.divf %22, %23 : vector<32x1xf32>
    %25 = vector.broadcast %24 : vector<32x1xf32> to vector<32x16xf32>
    %26 = arith.subf %3, %25 : vector<32x16xf32>
    %27 = arith.mulf %26, %26 : vector<32x16xf32>
    %cst_21 = arith.constant dense<0.000000e+00> : vector<32xf32>
    %28 = vector.multi_reduction <add>, %27, %cst_21 [1] : vector<32x16xf32> to vector<32xf32>
    %29 = vector.shape_cast %28 : vector<32xf32> to vector<32x1xf32>
    %cst_22 = arith.constant 1.600000e+01 : f32
    %30 = vector.broadcast %cst_22 : f32 to vector<32x1xf32>
    %31 = arith.divf %29, %30 : vector<32x1xf32>
    %32 = vector.broadcast %24 : vector<32x1xf32> to vector<32x16xf32>
    %33 = arith.subf %3, %32 : vector<32x16xf32>
    %cst_23 = arith.constant 9.99999974E-6 : f32
    %34 = vector.broadcast %cst_23 : f32 to vector<32x1xf32>
    %35 = arith.addf %31, %34 : vector<32x1xf32>
    %36 = math.rsqrt %35 : vector<32x1xf32>
    %37 = vector.broadcast %36 : vector<32x1xf32> to vector<32x16xf32>
    %38 = arith.mulf %33, %37 : vector<32x16xf32>
    %39 = vector.broadcast %16 : vector<1x16xf32> to vector<32x16xf32>
    %40 = arith.mulf %38, %39 : vector<32x16xf32>
    %41 = vector.broadcast %17 : vector<1x16xf32> to vector<32x16xf32>
    %42 = arith.addf %40, %41 : vector<32x16xf32>
    %43 = arith.truncf %42 : vector<32x16xf32> to vector<32x16xbf16>
    %44 = vector.shape_cast %43 : vector<32x16xbf16> to vector<2x16x16xbf16>
    %45 = vector.shape_cast %5 : vector<16x16xbf16> to vector<1x16x16xbf16>
    %46 = vector.broadcast %45 : vector<1x16x16xbf16> to vector<2x16x16xbf16>
    "tpu.trace_start"() <{level = 10 : i32, message = "sft,std->sfd"}> : () -> ()
    %cst_24 = arith.constant dense<0.000000e+00> : vector<2x16x16xf32>
    %47 = tpu.matmul %46, %44, %cst_24 {dimension_numbers = #tpu.dot_dimension_numbers<[2], [1], [1], [2], [0, 0, 0, 1, 1, 2], [0], [0]>} : vector<2x16x16xbf16>, vector<2x16x16xbf16>, vector<2x16x16xf32> -> vector<2x16x16xf32>
    "tpu.trace_stop"() : () -> ()
    %48 = vector.shape_cast %7 : vector<16x1xf32> to vector<1x16x1xf32>
    %49 = vector.broadcast %48 : vector<1x16x1xf32> to vector<2x16x16xf32>
    %50 = arith.addf %47, %49 : vector<2x16x16xf32>
    %51 = vector.shape_cast %50 : vector<2x16x16xf32> to vector<32x16xf32>
    %52 = arith.addf %51, %3 : vector<32x16xf32>
    %cst_25 = arith.constant dense<0.000000e+00> : vector<32xf32>
    %53 = vector.multi_reduction <add>, %52, %cst_25 [1] : vector<32x16xf32> to vector<32xf32>
    %54 = vector.shape_cast %53 : vector<32xf32> to vector<32x1xf32>
    %cst_26 = arith.constant 1.600000e+01 : f32
    %55 = vector.broadcast %cst_26 : f32 to vector<32x1xf32>
    %56 = arith.divf %54, %55 : vector<32x1xf32>
    %57 = vector.broadcast %56 : vector<32x1xf32> to vector<32x16xf32>
    %58 = arith.subf %52, %57 : vector<32x16xf32>
    %59 = arith.mulf %58, %58 : vector<32x16xf32>
    %cst_27 = arith.constant dense<0.000000e+00> : vector<32xf32>
    %60 = vector.multi_reduction <add>, %59, %cst_27 [1] : vector<32x16xf32> to vector<32xf32>
    %61 = vector.shape_cast %60 : vector<32xf32> to vector<32x1xf32>
    %cst_28 = arith.constant 1.600000e+01 : f32
    %62 = vector.broadcast %cst_28 : f32 to vector<32x1xf32>
    %63 = arith.divf %61, %62 : vector<32x1xf32>
    %64 = vector.broadcast %56 : vector<32x1xf32> to vector<32x16xf32>
    %65 = arith.subf %52, %64 : vector<32x16xf32>
    %cst_29 = arith.constant 9.99999974E-6 : f32
    %66 = vector.broadcast %cst_29 : f32 to vector<32x1xf32>
    %67 = arith.addf %63, %66 : vector<32x1xf32>
    %68 = math.rsqrt %67 : vector<32x1xf32>
    %69 = vector.broadcast %68 : vector<32x1xf32> to vector<32x16xf32>
    %70 = arith.mulf %65, %69 : vector<32x16xf32>
    %71 = vector.broadcast %18 : vector<1x16xf32> to vector<32x16xf32>
    %72 = arith.mulf %70, %71 : vector<32x16xf32>
    %73 = vector.broadcast %19 : vector<1x16xf32> to vector<32x16xf32>
    %74 = arith.addf %72, %73 : vector<32x16xf32>
    %75 = arith.truncf %74 : vector<32x16xf32> to vector<32x16xbf16>
    %cst_30 = arith.constant dense<0.000000e+00> : vector<32x64xf32>
    %76 = tpu.matmul %75, %11, %cst_30 {dimension_numbers = #tpu.dot_dimension_numbers<[1], [0], [0], [1], [0, 0, 1, 1], [], []>} : vector<32x16xbf16>, vector<16x64xbf16>, vector<32x64xf32> -> vector<32x64xf32>
    %77 = vector.broadcast %13 : vector<1x64xf32> to vector<32x64xf32>
    %78 = arith.addf %76, %77 : vector<32x64xf32>
    %79 = arith.truncf %78 : vector<32x64xf32> to vector<32x64xbf16>
    %80 = arith.mulf %79, %79 : vector<32x64xbf16>
    %81 = arith.mulf %80, %79 : vector<32x64xbf16>
    %cst_31 = arith.constant 4.467770e-02 : bf16
    %82 = vector.broadcast %cst_31 : bf16 to vector<32x64xbf16>
    %83 = arith.mulf %82, %81 : vector<32x64xbf16>
    %84 = arith.addf %79, %83 : vector<32x64xbf16>
    %cst_32 = arith.constant 7.968750e-01 : bf16
    %85 = vector.broadcast %cst_32 : bf16 to vector<32x64xbf16>
    %86 = arith.mulf %85, %84 : vector<32x64xbf16>
    %cst_33 = arith.constant 5.000000e-01 : bf16
    %87 = vector.broadcast %cst_33 : bf16 to vector<32x64xbf16>
    %88 = arith.mulf %87, %79 : vector<32x64xbf16>
    %89 = math.tanh %86 : vector<32x64xbf16>
    %cst_34 = arith.constant 1.000000e+00 : bf16
    %90 = vector.broadcast %cst_34 : bf16 to vector<32x64xbf16>
    %91 = arith.addf %90, %89 : vector<32x64xbf16>
    %92 = arith.mulf %88, %91 : vector<32x64xbf16>
    %cst_35 = arith.constant dense<0.000000e+00> : vector<32x16xf32>
    %93 = tpu.matmul %92, %15, %cst_35 {dimension_numbers = #tpu.dot_dimension_numbers<[1], [0], [0], [1], [0, 0, 1, 1], [], []>} : vector<32x64xbf16>, vector<64x16xbf16>, vector<32x16xf32> -> vector<32x16xf32>
    %94 = vector.broadcast %20 : vector<1x16xf32> to vector<32x16xf32>
    %95 = arith.addf %93, %94 : vector<32x16xf32>
    %96 = arith.addf %95, %52 : vector<32x16xf32>
    %c0_36 = arith.constant 0 : index
    %c0_37 = arith.constant 0 : index
    %97 = vector.load %arg9[%c0_36, %c0_37] : memref<32x16xf32, #tpu.memory_space<vmem>>, vector<32x16xf32>
    tpu.vector_store %arg9[%c0_36, %c0_37], %96 {strides = array<i32>} : memref<32x16xf32, #tpu.memory_space<vmem>>, vector<32x16xf32>,
    return
  }
  func.func @transform_0(%arg0: i32, %arg1: i32) -> (i32, i32) {
    %c0_i32 = arith.constant 0 : i32
    %c0_i32_0 = arith.constant 0 : i32
    return %arg0, %c0_i32 : i32, i32
  }
  func.func @transform_1(%arg0: i32, %arg1: i32) -> (i32, i32, i32) {
    %c0_i32 = arith.constant 0 : i32
    %c0_i32_0 = arith.constant 0 : i32
    %c0_i32_1 = arith.constant 0 : i32
    return %arg1, %c0_i32, %c0_i32_0 : i32, i32, i32
  }
  func.func @transform_2(%arg0: i32, %arg1: i32) -> (i32, i32, i32) {
    %c0_i32 = arith.constant 0 : i32
    %c0_i32_0 = arith.constant 0 : i32
    %c0_i32_1 = arith.constant 0 : i32
    return %arg1, %c0_i32, %c0_i32_0 : i32, i32, i32
  }
  func.func @transform_3(%arg0: i32, %arg1: i32) -> (i32, i32, i32) {
    %c0_i32 = arith.constant 0 : i32
    %c0_i32_0 = arith.constant 0 : i32
    %c0_i32_1 = arith.constant 0 : i32
    return %arg1, %c0_i32, %c0_i32_0 : i32, i32, i32
  }
  func.func @transform_4(%arg0: i32, %arg1: i32) -> (i32, i32, i32) {
    %c0_i32 = arith.constant 0 : i32
    %c0_i32_0 = arith.constant 0 : i32
    %c0_i32_1 = arith.constant 0 : i32
    return %arg1, %c0_i32, %c0_i32_0 : i32, i32, i32
  }
  func.func @transform_5(%arg0: i32, %arg1: i32) -> (i32, i32, i32) {
    %c0_i32 = arith.constant 0 : i32
    %c0_i32_0 = arith.constant 0 : i32
    %c0_i32_1 = arith.constant 0 : i32
    return %arg1, %c0_i32, %c0_i32_0 : i32, i32, i32
  }
  func.func @transform_6(%arg0: i32, %arg1: i32) -> (i32, i32, i32) {
    %c0_i32 = arith.constant 0 : i32
    %c0_i32_0 = arith.constant 0 : i32
    %c0_i32_1 = arith.constant 0 : i32
    return %arg1, %c0_i32, %c0_i32_0 : i32, i32, i32
  }
  func.func @transform_7(%arg0: i32, %arg1: i32) -> (i32, i32) {
    %c0_i32 = arith.constant 0 : i32
    %c0_i32_0 = arith.constant 0 : i32
    return %arg0, %c0_i32 : i32, i32
  }
}

module attributes {stable_mosaic.version = 11 : i64} {
  func.func @_proj_mixer_stack_kernel(%arg0: i32, %arg1: i32, %arg2: memref<32x8xf32, #tpu.memory_space<vmem>>, %arg3: memref<8x16xbf16, #tpu.memory_space<vmem>>, %arg4: memref<1x16xf32, #tpu.memory_space<vmem>>, %arg5: memref<1x16x16xbf16, #tpu.memory_space<vmem>>, %arg6: memref<1x16x1xf32, #tpu.memory_space<vmem>>, %arg7: memref<1x5x16xf32, #tpu.memory_space<vmem>>, %arg8: memref<1x16x64xbf16, #tpu.memory_space<vmem>>, %arg9: memref<1x1x64xf32, #tpu.memory_space<vmem>>, %arg10: memref<1x64x16xbf16, #tpu.memory_space<vmem>>, %arg11: memref<32x16xf32, #tpu.memory_space<vmem>>) attributes {dimension_semantics = [#tpu.dimension_semantics<parallel>, #tpu.dimension_semantics<arbitrary>], iteration_bounds = array<i64: 1, 2>, scalar_prefetch = 0 : i64, scratch_operands = 0 : i64, tpu.core_type = #tpu.core_type<tc>, window_params = [{transform_indices = @transform_0, window_bounds = array<i64: 32, 8>}, {pipeline_mode = #tpu.pipeline_mode<synchronous>, transform_indices = @transform_1, window_bounds = array<i64: 8, 16>}, {pipeline_mode = #tpu.pipeline_mode<synchronous>, transform_indices = @transform_2, window_bounds = array<i64: 1, 16>}, {transform_indices = @transform_3, window_bounds = array<i64: 1, 16, 16>}, {transform_indices = @transform_4, window_bounds = array<i64: 1, 16, 1>}, {transform_indices = @transform_5, window_bounds = array<i64: 1, 5, 16>}, {transform_indices = @transform_6, window_bounds = array<i64: 1, 16, 64>}, {transform_indices = @transform_7, window_bounds = array<i64: 1, 1, 64>}, {transform_indices = @transform_8, window_bounds = array<i64: 1, 64, 16>}, {transform_indices = @transform_9, window_bounds = array<i64: 32, 16>}]} {
    %c0_i32 = arith.constant 0 : i32
    %0 = arith.cmpi eq, %arg1, %c0_i32 : i32
    %1 = arith.extui %0 : i1 to i32
    %c0_i32_0 = arith.constant 0 : i32
    %2 = arith.cmpi ne, %1, %c0_i32_0 : i32
    scf.if %2 {
      %c0_38 = arith.constant 0 : index
      %c0_39 = arith.constant 0 : index
      %98 = vector.load %arg2[%c0_38, %c0_39] : memref<32x8xf32, #tpu.memory_space<vmem>>, vector<32x8xf32>
      %99 = arith.truncf %98 : vector<32x8xf32> to vector<32x8xbf16>
      %c0_40 = arith.constant 0 : index
      %c0_41 = arith.constant 0 : index
      %100 = vector.load %arg3[%c0_40, %c0_41] : memref<8x16xbf16, #tpu.memory_space<vmem>>, vector<8x16xbf16>
      %cst_42 = arith.constant dense<0.000000e+00> : vector<32x16xf32>
      %101 = tpu.matmul %99, %100, %cst_42 {dimension_numbers = #tpu.dot_dimension_numbers<[1], [0], [0], [1], [0, 0, 1, 1], [], []>} : vector<32x8xbf16>, vector<8x16xbf16>, vector<32x16xf32> -> vector<32x16xf32>
      %c0_43 = arith.constant 0 : index
      %c0_44 = arith.constant 0 : index
      %102 = vector.load %arg4[%c0_43, %c0_44] : memref<1x16xf32, #tpu.memory_space<vmem>>, vector<1x16xf32>
      %103 = vector.broadcast %102 : vector<1x16xf32> to vector<32x16xf32>
      %104 = arith.addf %101, %103 : vector<32x16xf32>
      %c0_45 = arith.constant 0 : index
      %c0_46 = arith.constant 0 : index
      %105 = vector.load %arg11[%c0_45, %c0_46] : memref<32x16xf32, #tpu.memory_space<vmem>>, vector<32x16xf32>
      tpu.vector_store %arg11[%c0_45, %c0_46], %104 {strides = array<i32>} : memref<32x16xf32, #tpu.memory_space<vmem>>, vector<32x16xf32>,
    } else {
    }
    %c0 = arith.constant 0 : index
    %c0_1 = arith.constant 0 : index
    %3 = vector.load %arg11[%c0, %c0_1] : memref<32x16xf32, #tpu.memory_space<vmem>>, vector<32x16xf32>
    %c0_2 = arith.constant 0 : index
    %c0_3 = arith.constant 0 : index
    %c0_4 = arith.constant 0 : index
    %4 = vector.load %arg5[%c0_2, %c0_3, %c0_4] : memref<1x16x16xbf16, #tpu.memory_space<vmem>>, vector<1x16x16xbf16>
    %5 = vector.shape_cast %4 : vector<1x16x16xbf16> to vector<16x16xbf16>
    %c0_5 = arith.constant 0 : index
    %c0_6 = arith.constant 0 : index
    %c0_7 = arith.constant 0 : index
    %6 = vector.load %arg6[%c0_5, %c0_6, %c0_7] : memref<1x16x1xf32, #tpu.memory_space<vmem>>, vector<1x16x1xf32>
    %7 = vector.shape_cast %6 : vector<1x16x1xf32> to vector<16x1xf32>
    %c0_8 = arith.constant 0 : index
    %c0_9 = arith.constant 0 : index
    %c0_10 = arith.constant 0 : index
    %8 = vector.load %arg7[%c0_8, %c0_9, %c0_10] : memref<1x5x16xf32, #tpu.memory_space<vmem>>, vector<1x5x16xf32>
    %9 = vector.shape_cast %8 : vector<1x5x16xf32> to vector<5x16xf32>
    %c0_11 = arith.constant 0 : index
    %c0_12 = arith.constant 0 : index
    %c0_13 = arith.constant 0 : index
    %10 = vector.load %arg8[%c0_11, %c0_12, %c0_13] : memref<1x16x64xbf16, #tpu.memory_space<vmem>>, vector<1x16x64xbf16>
    %11 = vector.shape_cast %10 : vector<1x16x64xbf16> to vector<16x64xbf16>
    %c0_14 = arith.constant 0 : index
    %c0_15 = arith.constant 0 : index
    %c0_16 = arith.constant 0 : index
    %12 = vector.load %arg9[%c0_14, %c0_15, %c0_16] : memref<1x1x64xf32, #tpu.memory_space<vmem>>, vector<1x1x64xf32>
    %13 = vector.shape_cast %12 : vector<1x1x64xf32> to vector<1x64xf32>
    %c0_17 = arith.constant 0 : index
    %c0_18 = arith.constant 0 : index
    %c0_19 = arith.constant 0 : index
    %14 = vector.load %arg10[%c0_17, %c0_18, %c0_19] : memref<1x64x16xbf16, #tpu.memory_space<vmem>>, vector<1x64x16xbf16>
    %15 = vector.shape_cast %14 : vector<1x64x16xbf16> to vector<64x16xbf16>
    %16 = vector.extract_strided_slice %9 {offsets = [0, 0], sizes = [1, 16], strides = [1, 1]} : vector<5x16xf32> to vector<1x16xf32>
    %17 = vector.extract_strided_slice %9 {offsets = [1, 0], sizes = [1, 16], strides = [1, 1]} : vector<5x16xf32> to vector<1x16xf32>
    %18 = vector.extract_strided_slice %9 {offsets = [2, 0], sizes = [1, 16], strides = [1, 1]} : vector<5x16xf32> to vector<1x16xf32>
    %19 = vector.extract_strided_slice %9 {offsets = [3, 0], sizes = [1, 16], strides = [1, 1]} : vector<5x16xf32> to vector<1x16xf32>
    %20 = vector.extract_strided_slice %9 {offsets = [4, 0], sizes = [1, 16], strides = [1, 1]} : vector<5x16xf32> to vector<1x16xf32>
    %cst = arith.constant dense<0.000000e+00> : vector<32xf32>
    %21 = vector.multi_reduction <add>, %3, %cst [1] : vector<32x16xf32> to vector<32xf32>
    %22 = vector.shape_cast %21 : vector<32xf32> to vector<32x1xf32>
    %cst_20 = arith.constant 1.600000e+01 : f32
    %23 = vector.broadcast %cst_20 : f32 to vector<32x1xf32>
    %24 = arith.divf %22, %23 : vector<32x1xf32>
    %25 = vector.broadcast %24 : vector<32x1xf32> to vector<32x16xf32>
    %26 = arith.subf %3, %25 : vector<32x16xf32>
    %27 = arith.mulf %26, %26 : vector<32x16xf32>
    %cst_21 = arith.constant dense<0.000000e+00> : vector<32xf32>
    %28 = vector.multi_reduction <add>, %27, %cst_21 [1] : vector<32x16xf32> to vector<32xf32>
    %29 = vector.shape_cast %28 : vector<32xf32> to vector<32x1xf32>
    %cst_22 = arith.constant 1.600000e+01 : f32
    %30 = vector.broadcast %cst_22 : f32 to vector<32x1xf32>
    %31 = arith.divf %29, %30 : vector<32x1xf32>
    %32 = vector.broadcast %24 : vector<32x1xf32> to vector<32x16xf32>
    %33 = arith.subf %3, %32 : vector<32x16xf32>
    %cst_23 = arith.constant 9.99999974E-6 : f32
    %34 = vector.broadcast %cst_23 : f32 to vector<32x1xf32>
    %35 = arith.addf %31, %34 : vector<32x1xf32>
    %36 = math.rsqrt %35 : vector<32x1xf32>
    %37 = vector.broadcast %36 : vector<32x1xf32> to vector<32x16xf32>
    %38 = arith.mulf %33, %37 : vector<32x16xf32>
    %39 = vector.broadcast %16 : vector<1x16xf32> to vector<32x16xf32>
    %40 = arith.mulf %38, %39 : vector<32x16xf32>
    %41 = vector.broadcast %17 : vector<1x16xf32> to vector<32x16xf32>
    %42 = arith.addf %40, %41 : vector<32x16xf32>
    %43 = arith.truncf %42 : vector<32x16xf32> to vector<32x16xbf16>
    %44 = vector.shape_cast %43 : vector<32x16xbf16> to vector<2x16x16xbf16>
    %45 = vector.shape_cast %5 : vector<16x16xbf16> to vector<1x16x16xbf16>
    %46 = vector.broadcast %45 : vector<1x16x16xbf16> to vector<2x16x16xbf16>
    "tpu.trace_start"() <{level = 10 : i32, message = "sft,std->sfd"}> : () -> ()
    %cst_24 = arith.constant dense<0.000000e+00> : vector<2x16x16xf32>
    %47 = tpu.matmul %46, %44, %cst_24 {dimension_numbers = #tpu.dot_dimension_numbers<[2], [1], [1], [2], [0, 0, 0, 1, 1, 2], [0], [0]>} : vector<2x16x16xbf16>, vector<2x16x16xbf16>, vector<2x16x16xf32> -> vector<2x16x16xf32>
    "tpu.trace_stop"() : () -> ()
    %48 = vector.shape_cast %7 : vector<16x1xf32> to vector<1x16x1xf32>
    %49 = vector.broadcast %48 : vector<1x16x1xf32> to vector<2x16x16xf32>
    %50 = arith.addf %47, %49 : vector<2x16x16xf32>
    %51 = vector.shape_cast %50 : vector<2x16x16xf32> to vector<32x16xf32>
    %52 = arith.addf %51, %3 : vector<32x16xf32>
    %cst_25 = arith.constant dense<0.000000e+00> : vector<32xf32>
    %53 = vector.multi_reduction <add>, %52, %cst_25 [1] : vector<32x16xf32> to vector<32xf32>
    %54 = vector.shape_cast %53 : vector<32xf32> to vector<32x1xf32>
    %cst_26 = arith.constant 1.600000e+01 : f32
    %55 = vector.broadcast %cst_26 : f32 to vector<32x1xf32>
    %56 = arith.divf %54, %55 : vector<32x1xf32>
    %57 = vector.broadcast %56 : vector<32x1xf32> to vector<32x16xf32>
    %58 = arith.subf %52, %57 : vector<32x16xf32>
    %59 = arith.mulf %58, %58 : vector<32x16xf32>
    %cst_27 = arith.constant dense<0.000000e+00> : vector<32xf32>
    %60 = vector.multi_reduction <add>, %59, %cst_27 [1] : vector<32x16xf32> to vector<32xf32>
    %61 = vector.shape_cast %60 : vector<32xf32> to vector<32x1xf32>
    %cst_28 = arith.constant 1.600000e+01 : f32
    %62 = vector.broadcast %cst_28 : f32 to vector<32x1xf32>
    %63 = arith.divf %61, %62 : vector<32x1xf32>
    %64 = vector.broadcast %56 : vector<32x1xf32> to vector<32x16xf32>
    %65 = arith.subf %52, %64 : vector<32x16xf32>
    %cst_29 = arith.constant 9.99999974E-6 : f32
    %66 = vector.broadcast %cst_29 : f32 to vector<32x1xf32>
    %67 = arith.addf %63, %66 : vector<32x1xf32>
    %68 = math.rsqrt %67 : vector<32x1xf32>
    %69 = vector.broadcast %68 : vector<32x1xf32> to vector<32x16xf32>
    %70 = arith.mulf %65, %69 : vector<32x16xf32>
    %71 = vector.broadcast %18 : vector<1x16xf32> to vector<32x16xf32>
    %72 = arith.mulf %70, %71 : vector<32x16xf32>
    %73 = vector.broadcast %19 : vector<1x16xf32> to vector<32x16xf32>
    %74 = arith.addf %72, %73 : vector<32x16xf32>
    %75 = arith.truncf %74 : vector<32x16xf32> to vector<32x16xbf16>
    %cst_30 = arith.constant dense<0.000000e+00> : vector<32x64xf32>
    %76 = tpu.matmul %75, %11, %cst_30 {dimension_numbers = #tpu.dot_dimension_numbers<[1], [0], [0], [1], [0, 0, 1, 1], [], []>} : vector<32x16xbf16>, vector<16x64xbf16>, vector<32x64xf32> -> vector<32x64xf32>
    %77 = vector.broadcast %13 : vector<1x64xf32> to vector<32x64xf32>
    %78 = arith.addf %76, %77 : vector<32x64xf32>
    %79 = arith.truncf %78 : vector<32x64xf32> to vector<32x64xbf16>
    %80 = arith.mulf %79, %79 : vector<32x64xbf16>
    %81 = arith.mulf %80, %79 : vector<32x64xbf16>
    %cst_31 = arith.constant 4.467770e-02 : bf16
    %82 = vector.broadcast %cst_31 : bf16 to vector<32x64xbf16>
    %83 = arith.mulf %82, %81 : vector<32x64xbf16>
    %84 = arith.addf %79, %83 : vector<32x64xbf16>
    %cst_32 = arith.constant 7.968750e-01 : bf16
    %85 = vector.broadcast %cst_32 : bf16 to vector<32x64xbf16>
    %86 = arith.mulf %85, %84 : vector<32x64xbf16>
    %cst_33 = arith.constant 5.000000e-01 : bf16
    %87 = vector.broadcast %cst_33 : bf16 to vector<32x64xbf16>
    %88 = arith.mulf %87, %79 : vector<32x64xbf16>
    %89 = math.tanh %86 : vector<32x64xbf16>
    %cst_34 = arith.constant 1.000000e+00 : bf16
    %90 = vector.broadcast %cst_34 : bf16 to vector<32x64xbf16>
    %91 = arith.addf %90, %89 : vector<32x64xbf16>
    %92 = arith.mulf %88, %91 : vector<32x64xbf16>
    %cst_35 = arith.constant dense<0.000000e+00> : vector<32x16xf32>
    %93 = tpu.matmul %92, %15, %cst_35 {dimension_numbers = #tpu.dot_dimension_numbers<[1], [0], [0], [1], [0, 0, 1, 1], [], []>} : vector<32x64xbf16>, vector<64x16xbf16>, vector<32x16xf32> -> vector<32x16xf32>
    %94 = vector.broadcast %20 : vector<1x16xf32> to vector<32x16xf32>
    %95 = arith.addf %93, %94 : vector<32x16xf32>
    %96 = arith.addf %95, %52 : vector<32x16xf32>
    %c0_36 = arith.constant 0 : index
    %c0_37 = arith.constant 0 : index
    %97 = vector.load %arg11[%c0_36, %c0_37] : memref<32x16xf32, #tpu.memory_space<vmem>>, vector<32x16xf32>
    tpu.vector_store %arg11[%c0_36, %c0_37], %96 {strides = array<i32>} : memref<32x16xf32, #tpu.memory_space<vmem>>, vector<32x16xf32>,
    return
  }
  func.func @transform_0(%arg0: i32, %arg1: i32) -> (i32, i32) {
    %c0_i32 = arith.constant 0 : i32
    %c0_i32_0 = arith.constant 0 : i32
    return %arg0, %c0_i32 : i32, i32
  }
  func.func @transform_1(%arg0: i32, %arg1: i32) -> (i32, i32) {
    %c0_i32 = arith.constant 0 : i32
    %c0_i32_0 = arith.constant 0 : i32
    %c0_i32_1 = arith.constant 0 : i32
    return %c0_i32, %c0_i32_0 : i32, i32
  }
  func.func @transform_2(%arg0: i32, %arg1: i32) -> (i32, i32) {
    %c0_i32 = arith.constant 0 : i32
    %c0_i32_0 = arith.constant 0 : i32
    %c0_i32_1 = arith.constant 0 : i32
    return %c0_i32, %c0_i32_0 : i32, i32
  }
  func.func @transform_3(%arg0: i32, %arg1: i32) -> (i32, i32, i32) {
    %c0_i32 = arith.constant 0 : i32
    %c0_i32_0 = arith.constant 0 : i32
    %c0_i32_1 = arith.constant 0 : i32
    return %arg1, %c0_i32, %c0_i32_0 : i32, i32, i32
  }
  func.func @transform_4(%arg0: i32, %arg1: i32) -> (i32, i32, i32) {
    %c0_i32 = arith.constant 0 : i32
    %c0_i32_0 = arith.constant 0 : i32
    %c0_i32_1 = arith.constant 0 : i32
    return %arg1, %c0_i32, %c0_i32_0 : i32, i32, i32
  }
  func.func @transform_5(%arg0: i32, %arg1: i32) -> (i32, i32, i32) {
    %c0_i32 = arith.constant 0 : i32
    %c0_i32_0 = arith.constant 0 : i32
    %c0_i32_1 = arith.constant 0 : i32
    return %arg1, %c0_i32, %c0_i32_0 : i32, i32, i32
  }
  func.func @transform_6(%arg0: i32, %arg1: i32) -> (i32, i32, i32) {
    %c0_i32 = arith.constant 0 : i32
    %c0_i32_0 = arith.constant 0 : i32
    %c0_i32_1 = arith.constant 0 : i32
    return %arg1, %c0_i32, %c0_i32_0 : i32, i32, i32
  }
  func.func @transform_7(%arg0: i32, %arg1: i32) -> (i32, i32, i32) {
    %c0_i32 = arith.constant 0 : i32
    %c0_i32_0 = arith.constant 0 : i32
    %c0_i32_1 = arith.constant 0 : i32
    return %arg1, %c0_i32, %c0_i32_0 : i32, i32, i32
  }
  func.func @transform_8(%arg0: i32, %arg1: i32) -> (i32, i32, i32) {
    %c0_i32 = arith.constant 0 : i32
    %c0_i32_0 = arith.constant 0 : i32
    %c0_i32_1 = arith.constant 0 : i32
    return %arg1, %c0_i32, %c0_i32_0 : i32, i32, i32
  }
  func.func @transform_9(%arg0: i32, %arg1: i32) -> (i32, i32) {
    %c0_i32 = arith.constant 0 : i32
    %c0_i32_0 = arith.constant 0 : i32
    return %arg0, %c0_i32 : i32, i32
  }
}

module attributes {stable_mosaic.version = 11 : i64} {
  func.func @_lm_head_ce_kernel(%arg0: i32, %arg1: i32, %arg2: memref<32x16xf32, #tpu.memory_space<vmem>>, %arg3: memref<16x32xbf16, #tpu.memory_space<vmem>>, %arg4: memref<32x1xi32, #tpu.memory_space<vmem>>, %arg5: memref<32x32xbf16, #tpu.memory_space<vmem>>, %arg6: memref<1x1x1xf32, #tpu.memory_space<vmem>>, %arg7: memref<32x1xf32, #tpu.memory_space<vmem>>, %arg8: memref<32x1xf32, #tpu.memory_space<vmem>>, %arg9: memref<32x1xf32, #tpu.memory_space<vmem>>) attributes {dimension_semantics = [#tpu.dimension_semantics<parallel>, #tpu.dimension_semantics<arbitrary>], iteration_bounds = array<i64: 1, 1>, scalar_prefetch = 0 : i64, scratch_operands = 3 : i64, tpu.core_type = #tpu.core_type<tc>, window_params = [{transform_indices = @transform_0, window_bounds = array<i64: 32, 16>}, {transform_indices = @transform_1, window_bounds = array<i64: 16, 32>}, {transform_indices = @transform_2, window_bounds = array<i64: 32, 1>}, {transform_indices = @transform_3, window_bounds = array<i64: 32, 32>}, {transform_indices = @transform_4, window_bounds = array<i64: 1, 1, 1>}]} {
    %c0_i32 = arith.constant 0 : i32
    %0 = arith.cmpi eq, %arg1, %c0_i32 : i32
    %1 = arith.extui %0 : i1 to i32
    %c0_i32_0 = arith.constant 0 : i32
    %2 = arith.cmpi ne, %1, %c0_i32_0 : i32
    scf.if %2 {
      %cst_26 = arith.constant 0xFF800000 : f32
      %42 = vector.broadcast %cst_26 : f32 to vector<32x1xf32>
      %c0_27 = arith.constant 0 : index
      %c0_28 = arith.constant 0 : index
      %43 = vector.load %arg7[%c0_27, %c0_28] : memref<32x1xf32, #tpu.memory_space<vmem>>, vector<32x1xf32>
      tpu.vector_store %arg7[%c0_27, %c0_28], %42 {strides = array<i32>} : memref<32x1xf32, #tpu.memory_space<vmem>>, vector<32x1xf32>,
      %cst_29 = arith.constant 0.000000e+00 : f32
      %44 = vector.broadcast %cst_29 : f32 to vector<32x1xf32>
      %c0_30 = arith.constant 0 : index
      %c0_31 = arith.constant 0 : index
      %45 = vector.load %arg8[%c0_30, %c0_31] : memref<32x1xf32, #tpu.memory_space<vmem>>, vector<32x1xf32>
      tpu.vector_store %arg8[%c0_30, %c0_31], %44 {strides = array<i32>} : memref<32x1xf32, #tpu.memory_space<vmem>>, vector<32x1xf32>,
      %cst_32 = arith.constant 0.000000e+00 : f32
      %46 = vector.broadcast %cst_32 : f32 to vector<32x1xf32>
      %c0_33 = arith.constant 0 : index
      %c0_34 = arith.constant 0 : index
      %47 = vector.load %arg9[%c0_33, %c0_34] : memref<32x1xf32, #tpu.memory_space<vmem>>, vector<32x1xf32>
      tpu.vector_store %arg9[%c0_33, %c0_34], %46 {strides = array<i32>} : memref<32x1xf32, #tpu.memory_space<vmem>>, vector<32x1xf32>,
      %cst_35 = arith.constant 0.000000e+00 : f32
      %48 = vector.broadcast %cst_35 : f32 to vector<1x1x1xf32>
      %c0_36 = arith.constant 0 : index
      %c0_37 = arith.constant 0 : index
      %c0_38 = arith.constant 0 : index
      %49 = vector.load %arg6[%c0_36, %c0_37, %c0_38] : memref<1x1x1xf32, #tpu.memory_space<vmem>>, vector<1x1x1xf32>
      tpu.vector_store %arg6[%c0_36, %c0_37, %c0_38], %48 {strides = array<i32>} : memref<1x1x1xf32, #tpu.memory_space<vmem>>, vector<1x1x1xf32>,
    } else {
    }
    %c0 = arith.constant 0 : index
    %c0_1 = arith.constant 0 : index
    %3 = vector.load %arg2[%c0, %c0_1] : memref<32x16xf32, #tpu.memory_space<vmem>>, vector<32x16xf32>
    %4 = arith.truncf %3 : vector<32x16xf32> to vector<32x16xbf16>
    %c0_2 = arith.constant 0 : index
    %c0_3 = arith.constant 0 : index
    %5 = vector.load %arg3[%c0_2, %c0_3] : memref<16x32xbf16, #tpu.memory_space<vmem>>, vector<16x32xbf16>
    %cst = arith.constant dense<0.000000e+00> : vector<32x32xf32>
    %6 = tpu.matmul %4, %5, %cst {dimension_numbers = #tpu.dot_dimension_numbers<[1], [0], [0], [1], [0, 0, 1, 1], [], []>} : vector<32x16xbf16>, vector<16x32xbf16>, vector<32x32xf32> -> vector<32x32xf32>
    %7 = arith.truncf %6 : vector<32x32xf32> to vector<32x32xbf16>
    %c0_4 = arith.constant 0 : index
    %c0_5 = arith.constant 0 : index
    %8 = vector.load %arg5[%c0_4, %c0_5] : memref<32x32xbf16, #tpu.memory_space<vmem>>, vector<32x32xbf16>
    tpu.vector_store %arg5[%c0_4, %c0_5], %7 {strides = array<i32>} : memref<32x32xbf16, #tpu.memory_space<vmem>>, vector<32x32xbf16>,
    %c0_6 = arith.constant 0 : index
    %c0_7 = arith.constant 0 : index
    %9 = vector.load %arg7[%c0_6, %c0_7] : memref<32x1xf32, #tpu.memory_space<vmem>>, vector<32x1xf32>
    %cst_8 = arith.constant dense<0xFF800000> : vector<32xf32>
    %10 = vector.multi_reduction <maximumf>, %6, %cst_8 [1] : vector<32x32xf32> to vector<32xf32>
    %11 = vector.shape_cast %10 : vector<32xf32> to vector<32x1xf32>
    %12 = arith.maximumf %9, %11 : vector<32x1xf32>
    %13 = arith.subf %9, %12 : vector<32x1xf32>
    %14 = math.exp %13 : vector<32x1xf32>
    %c0_9 = arith.constant 0 : index
    %c0_10 = arith.constant 0 : index
    %15 = vector.load %arg8[%c0_9, %c0_10] : memref<32x1xf32, #tpu.memory_space<vmem>>, vector<32x1xf32>
    %16 = arith.mulf %14, %15 : vector<32x1xf32>
    %17 = vector.broadcast %12 : vector<32x1xf32> to vector<32x32xf32>
    %18 = arith.subf %6, %17 : vector<32x32xf32>
    %19 = math.exp %18 : vector<32x32xf32>
    %cst_11 = arith.constant dense<0.000000e+00> : vector<32xf32>
    %20 = vector.multi_reduction <add>, %19, %cst_11 [1] : vector<32x32xf32> to vector<32xf32>
    %21 = vector.shape_cast %20 : vector<32xf32> to vector<32x1xf32>
    %22 = arith.addf %16, %21 : vector<32x1xf32>
    %c0_12 = arith.constant 0 : index
    %c0_13 = arith.constant 0 : index
    %23 = vector.load %arg8[%c0_12, %c0_13] : memref<32x1xf32, #tpu.memory_space<vmem>>, vector<32x1xf32>
    tpu.vector_store %arg8[%c0_12, %c0_13], %22 {strides = array<i32>} : memref<32x1xf32, #tpu.memory_space<vmem>>, vector<32x1xf32>,
    %c0_14 = arith.constant 0 : index
    %c0_15 = arith.constant 0 : index
    %24 = vector.load %arg7[%c0_14, %c0_15] : memref<32x1xf32, #tpu.memory_space<vmem>>, vector<32x1xf32>
    tpu.vector_store %arg7[%c0_14, %c0_15], %12 {strides = array<i32>} : memref<32x1xf32, #tpu.memory_space<vmem>>, vector<32x1xf32>,
    %25 = tpu.iota {dimensions = array<i32: 1>} : vector<32x32xi32>
    %c0_16 = arith.constant 0 : index
    %c0_17 = arith.constant 0 : index
    %26 = vector.load %arg4[%c0_16, %c0_17] : memref<32x1xi32, #tpu.memory_space<vmem>>, vector<32x1xi32>
    %c32_i32 = arith.constant 32 : i32
    %27 = arith.muli %arg1, %c32_i32 : i32
    %28 = vector.broadcast %27 : i32 to vector<32x1xi32>
    %29 = arith.subi %26, %28 : vector<32x1xi32>
    %c0_18 = arith.constant 0 : index
    %c0_19 = arith.constant 0 : index
    %30 = vector.load %arg9[%c0_18, %c0_19] : memref<32x1xf32, #tpu.memory_space<vmem>>, vector<32x1xf32>
    %31 = vector.broadcast %29 : vector<32x1xi32> to vector<32x32xi32>
    %32 = arith.cmpi eq, %25, %31 : vector<32x32xi32>
    %cst_20 = arith.constant 0.000000e+00 : f32
    %33 = vector.broadcast %cst_20 : f32 to vector<32x32xf32>
    %34 = arith.select %32, %6, %33 : vector<32x32xi1>, vector<32x32xf32>
    %cst_21 = arith.constant dense<0.000000e+00> : vector<32xf32>
    %35 = vector.multi_reduction <add>, %34, %cst_21 [1] : vector<32x32xf32> to vector<32xf32>
    %36 = vector.shape_cast %35 : vector<32xf32> to vector<32x1xf32>
    %37 = arith.addf %30, %36 : vector<32x1xf32>
    %c0_22 = arith.constant 0 : index
    %c0_23 = arith.constant 0 : index
    %38 = vector.load %arg9[%c0_22, %c0_23] : memref<32x1xf32, #tpu.memory_space<vmem>>, vector<32x1xf32>
    tpu.vector_store %arg9[%c0_22, %c0_23], %37 {strides = array<i32>} : memref<32x1xf32, #tpu.memory_space<vmem>>, vector<32x1xf32>,
    %c0_i32_24 = arith.constant 0 : i32
    %39 = arith.cmpi eq, %arg1, %c0_i32_24 : i32
    %40 = arith.extui %39 : i1 to i32
    %c0_i32_25 = arith.constant 0 : i32
    %41 = arith.cmpi ne, %40, %c0_i32_25 : i32
    scf.if %41 {
      %c0_26 = arith.constant 0 : index
      %c0_27 = arith.constant 0 : index
      %42 = vector.load %arg7[%c0_26, %c0_27] : memref<32x1xf32, #tpu.memory_space<vmem>>, vector<32x1xf32>
      %c0_28 = arith.constant 0 : index
      %c0_29 = arith.constant 0 : index
      %43 = vector.load %arg8[%c0_28, %c0_29] : memref<32x1xf32, #tpu.memory_space<vmem>>, vector<32x1xf32>
      %44 = math.log %43 : vector<32x1xf32>
      %45 = arith.addf %42, %44 : vector<32x1xf32>
      %c0_30 = arith.constant 0 : index
      %c0_31 = arith.constant 0 : index
      %46 = vector.load %arg9[%c0_30, %c0_31] : memref<32x1xf32, #tpu.memory_space<vmem>>, vector<32x1xf32>
      %47 = arith.subf %45, %46 : vector<32x1xf32>
      %48 = vector.shape_cast %47 : vector<32x1xf32> to vector<1x32x1xf32>
      %cst_32 = arith.constant dense<0.000000e+00> : vector<1xf32>
      %49 = vector.multi_reduction <add>, %48, %cst_32 [1, 2] : vector<1x32x1xf32> to vector<1xf32>
      %50 = vector.shape_cast %49 : vector<1xf32> to vector<1x1x1xf32>
      %51 = vector.extract %50[0, 0, 0] : f32 from vector<1x1x1xf32>
      %52 = vector.broadcast %51 : f32 to vector<1x1x1xf32>
      %c0_33 = arith.constant 0 : index
      %c0_34 = arith.constant 0 : index
      %c0_35 = arith.constant 0 : index
      %53 = vector.load %arg6[%c0_33, %c0_34, %c0_35] : memref<1x1x1xf32, #tpu.memory_space<vmem>>, vector<1x1x1xf32>
      tpu.vector_store %arg6[%c0_33, %c0_34, %c0_35], %52 {strides = array<i32>} : memref<1x1x1xf32, #tpu.memory_space<vmem>>, vector<1x1x1xf32>,
    } else {
    }
    return
  }
  func.func @transform_0(%arg0: i32, %arg1: i32) -> (i32, i32) {
    %c0_i32 = arith.constant 0 : i32
    %c0_i32_0 = arith.constant 0 : i32
    return %arg0, %c0_i32 : i32, i32
  }
  func.func @transform_1(%arg0: i32, %arg1: i32) -> (i32, i32) {
    %c0_i32 = arith.constant 0 : i32
    %c0_i32_0 = arith.constant 0 : i32
    return %c0_i32, %arg1 : i32, i32
  }
  func.func @transform_2(%arg0: i32, %arg1: i32) -> (i32, i32) {
    %c0_i32 = arith.constant 0 : i32
    %c0_i32_0 = arith.constant 0 : i32
    return %arg0, %c0_i32 : i32, i32
  }
  func.func @transform_3(%arg0: i32, %arg1: i32) -> (i32, i32) {
    %c0_i32 = arith.constant 0 : i32
    return %arg0, %arg1 : i32, i32
  }
  func.func @transform_4(%arg0: i32, %arg1: i32) -> (i32, i32, i32) {
    %c0_i32 = arith.constant 0 : i32
    %c0_i32_0 = arith.constant 0 : i32
    %c0_i32_1 = arith.constant 0 : i32
    return %arg0, %c0_i32, %c0_i32_0 : i32, i32, i32
  }
}

</mosaic_0001>

<llo_original>
// kernel: autoencoding_mixer_forward.5
$region0: #{autoencoding_mixer_forward.5}
  #allocation0 [shape = 'u32[]', space=smem, size = 0x4, offset = 0x4, fixed_abs, tag = 'smem constant byte address 0x4 - core index']
  #allocation1 [shape = 'u32[144,128]{1,0:T(1,128)}', space=vmem, size = 0x12000, scoped, tag = 'internal scratch']
  #allocation2 [shape = 'f32[32,1]{1,0:T(8,128)}', space=vmem, size = 0x4000, scoped, tag = 'scratch operand']
  #allocation3 [shape = 'f32[32,1]{1,0:T(8,128)}', space=vmem, size = 0x4000, scoped, tag = 'scratch operand']
  #allocation4 [shape = 'f32[32,1]{1,0:T(8,128)}', space=vmem, size = 0x4000, scoped, tag = 'scratch operand']
  %s0 = inlined_call_operand.vmem [shape: f32[32,16], index: 0, kind: input, shape index: {}]
  %s1 = inlined_call_operand.vmem [shape: bf16[16,32], index: 1, kind: input, shape index: {}]
  %s2 = inlined_call_operand.vmem [shape: s32[32,1], index: 2, kind: input, shape index: {}]
  %s3 = inlined_call_operand.hbm [shape: bf16[32,32], index: 3, kind: output, shape index: {0}]
  %s4 = inlined_call_operand.hbm [shape: f32[1,1,1], index: 4, kind: output, shape index: {1}]
  %5 = xla_tuple %s3, %s4
  %s6 = sld [smem:[#allocation0]]
  $region38: #{autoencoding_mixer_forward.5} parent=0
    _
  %s8 = ssub.s32 1, %s6
  %s9 = scalar_select 0, %s8, %s6
  $region1: #{autoencoding_mixer_forward.5} parent=0
    #allocation5 [shape = 'u8[8192]{0}', space=vmem, size = 0x2000, scoped, tag = 'output window, operand 0, single buffered']
    #allocation6 [shape = 's32[1]{0}', space=sflag, size = 0x4, scoped, tag = 'scoped memory for autoencoding_mixer_forward.5']
    #allocation7 [shape = 'u8[512]{0}', space=vmem, size = 0x400, scoped, tag = 'output window, operand 1, single buffered']
    #allocation8 [shape = 's32[1]{0}', space=sflag, size = 0x4, scoped, tag = 'scoped memory for autoencoding_mixer_forward.5']
    %10 = vsyncpa [#allocation6], 0
    %11 = vsyncpa [#allocation8], 0
    // Predicated region
    $region2: #{autoencoding_mixer_forward.5} parent=1 // pred_check
      _
    $region3: #{autoencoding_mixer_forward.5} parent=1 // pred_check_branch
      %13 = sbr.rel (0) target = $region5
    $region4: #{autoencoding_mixer_forward.5} parent=1 // pred_region
      _
    $region5: #{autoencoding_mixer_forward.5} parent=1 // pred_fallthru
      _
    // Predicated region
    $region6: #{autoencoding_mixer_forward.5} parent=1 // pred_check
      _
    $region7: #{autoencoding_mixer_forward.5} parent=1 // pred_check_branch
      %15 = sbr.rel (0) target = $region9
    $region8: #{autoencoding_mixer_forward.5} parent=1 // pred_region
      _
    $region9: #{autoencoding_mixer_forward.5} parent=1 // pred_fallthru
      _
    // Predicated region
    $region10: #{autoencoding_mixer_forward.5} parent=1 // pred_check
      _
    $region11: #{autoencoding_mixer_forward.5} parent=1 // pred_check_branch
      %17 = sbr.rel (0) target = $region13
    $region12: #{autoencoding_mixer_forward.5} parent=1 // pred_region
      _
    $region13: #{autoencoding_mixer_forward.5} parent=1 // pred_fallthru
      _
    %p19 = scmp.eq.s32.totalorder 0, 0
    // Predicated region
    $region14: #{autoencoding_mixer_forward.5} parent=1 // pred_check
      %p20 = pneg %p19
    $region15: #{autoencoding_mixer_forward.5} parent=1 // pred_check_branch
      %22 = sbr.rel (%p20) target = $region17
    $region16: #{autoencoding_mixer_forward.5} parent=1 // pred_region
      %vm23 = vcmask 7168
      %24 = vst.msk [vmem:[#allocation2] sm:$0xff] %vm23, -inf
      %25 = vst.msk [vmem:[#allocation2 + $0x8] sm:$0xff] %vm23, -inf
      %26 = vst.msk [vmem:[#allocation2 + $0x10] sm:$0xff] %vm23, -inf
      %27 = vst.msk [vmem:[#allocation2 + $0x18] sm:$0xff] %vm23, -inf
      %28 = vst.msk [vmem:[#allocation3] sm:$0xff] %vm23, 0.0
      %29 = vst.msk [vmem:[#allocation3 + $0x8] sm:$0xff] %vm23, 0.0
      %30 = vst.msk [vmem:[#allocation3 + $0x10] sm:$0xff] %vm23, 0.0
      %31 = vst.msk [vmem:[#allocation3 + $0x18] sm:$0xff] %vm23, 0.0
      %32 = vst.msk [vmem:[#allocation4] sm:$0xff] %vm23, 0.0
      %33 = vst.msk [vmem:[#allocation4 + $0x8] sm:$0xff] %vm23, 0.0
      %34 = vst.msk [vmem:[#allocation4 + $0x10] sm:$0xff] %vm23, 0.0
      %35 = vst.msk [vmem:[#allocation4 + $0x18] sm:$0xff] %vm23, 0.0
      %vm36 = vcmask 0
      %37 = vst.msk [vmem:[#allocation7] sm:$0x1] %vm36, 0.0
    $region17: #{autoencoding_mixer_forward.5} parent=1 // pred_fallthru
      _
    %v38 = vld [vmem:[%s0] sm:$0xff]
    %v39 = vld [vmem:[%s0 + $0x8] sm:$0xff]
    %v40 = vld [vmem:[%s0 + $0x10] sm:$0xff]
    %v41 = vld [vmem:[%s0 + $0x18] sm:$0xff]
    %v42 = vpack.c.bf16 %v39, %v38
    %v43 = vpack.c.bf16 %v41, %v40
    %v44 = vld [vmem:[%s1] sm:$0xf]
    %v45 = vld [vmem:[%s1 + $0x4] sm:$0xf]
    %v48 = vunpack.c.l.b16 %v44
    %v49 = vunpack.c.l.b16 %v45
    %v50 = vpack.c.b16 %v49, %v48
    %vm52 = vcmask 130048
    %v54 = vsel %vm52, %v42, 0
    %v57 = vsel %vm52, %v43, 0
    %59 = vmatprep.subr.bf16.mxu0 0
    %60 = vmatpush1.bf16.msra.mxu0 0
    %61 = vmatprep.subr.bf16.mxu0 0
    %62 = vmatpush1.bf16.msra.mxu0 0
    %63 = vmatprep.subr.bf16.mxu0 0
    %64 = vmatpush1.bf16.msra.mxu0 0
    %65 = vmatprep.subr.bf16.mxu0 0
    %66 = vmatpush1.bf16.msra.mxu0 0
    %67 = vmatprep.subr.bf16.mxu0 0
    %68 = vmatpush1.bf16.msra.mxu0 0
    %69 = vmatprep.subr.bf16.mxu0 0
    %70 = vmatpush1.bf16.msra.mxu0 0
    %71 = vmatprep.subr.bf16.mxu0 0
    %72 = vmatpush1.bf16.msra.mxu0 0
    %73 = vmatprep.subr.bf16.mxu0 0
    %74 = vmatpush1.bf16.msra.mxu0 %v50
    %75 = vmatprep.subr.bf16.mxu0 0
    %76 = vmatpush2.bf16.msra.mxu0 0
    %77 = vmatprep.subr.bf16.mxu0 0
    %78 = vmatpush2.bf16.msra.mxu0 0
    %79 = vmatprep.subr.bf16.mxu0 0
    %80 = vmatpush2.bf16.msra.mxu0 0
    %81 = vmatprep.subr.bf16.mxu0 0
    %82 = vmatpush2.bf16.msra.mxu0 0
    %83 = vmatprep.subr.bf16.mxu0 0
    %84 = vmatpush2.bf16.msra.mxu0 0
    %85 = vmatprep.subr.bf16.mxu0 0
    %86 = vmatpush2.bf16.msra.mxu0 0
    %87 = vmatprep.subr.bf16.mxu0 0
    %88 = vmatpush2.bf16.msra.mxu0 0
    %89 = vmatprep.subr.bf16.mxu0 0
    %90 = vmatpush2.bf16.msra.mxu0 0
    %91 = vmatprep.mubr.bf16.mxu0 0
    %92 = vmatmul.mubr.bf16.gmra.mxu0 %v54
    %v93 = vpop.f32.mrf.mxu0
    %v94 = vadd.f32 0.0, %v93
    %v95 = vpop.f32.mrf.mxu0
    %v96 = vpop.f32.mrf.mxu0
    %v97 = vadd.f32 0.0, %v96
    %v98 = vpop.f32.mrf.mxu0
    %99 = vmatprep.mubr.bf16.mxu0 0
    %100 = vmatmul.mubr.bf16.gmra.mxu0 %v57
    %v101 = vpop.f32.mrf.mxu0
    %v102 = vadd.f32 0.0, %v101
    %v103 = vpop.f32.mrf.mxu0
    %v104 = vpop.f32.mrf.mxu0
    %v105 = vadd.f32 0.0, %v104
    %v106 = vpop.f32.mrf.mxu0
    %107 = vdwg.mxu0
    %v108 = vpack.c.bf16 %v97, %v94
    %v109 = vpack.c.bf16 %v105, %v102
    %v112 = vunpack.c.l.b16 %v108
    %v113 = vunpack.c.h.b16 %v108
    %v114 = vunpack.c.l.b16 %v109
    %v115 = vunpack.c.h.b16 %v109
    %v116 = vpack.c.b16 %v112, %v112
    %v117 = vpack.c.b16 %v113, %v113
    %v118 = vpack.c.b16 %v114, %v114
    %v119 = vpack.c.b16 %v115, %v115
    %vm124 = vcmask 257024
    %125 = vst.msk [vmem:[#allocation5] sm:$0xf] %vm124, %v116
    %126 = vst.msk [vmem:[#allocation5 + $0x4] sm:$0xf] %vm124, %v117
    %127 = vst.msk [vmem:[#allocation5 + $0x8] sm:$0xf] %vm124, %v118
    %128 = vst.msk [vmem:[#allocation5 + $0xc] sm:$0xf] %vm124, %v119
    %v129 = vld [vmem:[#allocation2] sm:$0xff]
    %v130 = vld [vmem:[#allocation2 + $0x8] sm:$0xff]
    %v131 = vld [vmem:[#allocation2 + $0x10] sm:$0xff]
    %v132 = vld [vmem:[#allocation2 + $0x18] sm:$0xff]
    %vm133 = vcmask 261120
    %v134 = vsel %vm133, %v94, -inf
    %135 = vmax.xlane.f32.xlu0 %v134
    %v136 = vpop.xlane.xlu0 %135
    %v137 = vsel %vm133, %v97, -inf
    %138 = vmax.xlane.f32.xlu0 %v137
    %v139 = vpop.xlane.xlu0 %138
    %v140 = vsel %vm133, %v102, -inf
    %141 = vmax.xlane.f32.xlu0 %v140
    %v142 = vpop.xlane.xlu0 %141
    %v143 = vsel %vm133, %v105, -inf
    %144 = vmax.xlane.f32.xlu0 %v143
    %v145 = vpop.xlane.xlu0 %144
    %v146 = vmax.f32 %v129, %v136
    %v147 = vmax.f32 %v130, %v139
    %v148 = vmax.f32 %v131, %v142
    %v149 = vmax.f32 %v132, %v145
    %v150 = vsub.f32 %v129, %v146
    %v151 = vsub.f32 %v130, %v147
    %v152 = vsub.f32 %v131, %v148
    %v153 = vsub.f32 %v132, %v149
    %v154 = vmul.f32 %v150, 1.442695
    %v155 = vpow.pop %v154
    %v156 = vmul.f32 %v151, 1.442695
    %v157 = vpow.pop %v156
    %v158 = vmul.f32 %v152, 1.442695
    %v159 = vpow.pop %v158
    %v160 = vmul.f32 %v153, 1.442695
    %v161 = vpow.pop %v160
    %v162 = vld [vmem:[#allocation3] sm:$0xff]
    %v163 = vld [vmem:[#allocation3 + $0x8] sm:$0xff]
    %v164 = vld [vmem:[#allocation3 + $0x10] sm:$0xff]
    %v165 = vld [vmem:[#allocation3 + $0x18] sm:$0xff]
    %v166 = vmul.f32 %v155, %v162
    %v167 = vmul.f32 %v157, %v163
    %v168 = vmul.f32 %v159, %v164
    %v169 = vmul.f32 %v161, %v165
    %171 = vset.pattern.permute.xlu0 0
    %172 = vperm.xlu0 %171, %v146
    %v173 = vpop.permute.xlu0 %172
    %176 = vset.pattern.permute.xlu0 0
    %177 = vperm.xlu0 %176, %v147
    %v178 = vpop.permute.xlu0 %177
    %181 = vset.pattern.permute.xlu0 0
    %182 = vperm.xlu0 %181, %v148
    %v183 = vpop.permute.xlu0 %182
    %186 = vset.pattern.permute.xlu0 0
    %187 = vperm.xlu0 %186, %v149
    %v188 = vpop.permute.xlu0 %187
    %v190 = vsub.f32 %v94, %v173
    %v191 = vsub.f32 %v97, %v178
    %v192 = vsub.f32 %v102, %v183
    %v193 = vsub.f32 %v105, %v188
    %v194 = vmul.f32 %v190, 1.442695
    %v195 = vpow.pop %v194
    %v196 = vmul.f32 %v191, 1.442695
    %v197 = vpow.pop %v196
    %v198 = vmul.f32 %v192, 1.442695
    %v199 = vpow.pop %v198
    %v200 = vmul.f32 %v193, 1.442695
    %v201 = vpow.pop %v200
    %v202 = vsel %vm133, %v195, 0.0
    %203 = vadd.xlane.f32.xlu0 %v202
    %v204 = vpop.xlane.xlu0 %203
    %v205 = vsel %vm133, %v197, 0.0
    %206 = vadd.xlane.f32.xlu0 %v205
    %v207 = vpop.xlane.xlu0 %206
    %v208 = vsel %vm133, %v199, 0.0
    %209 = vadd.xlane.f32.xlu0 %v208
    %v210 = vpop.xlane.xlu0 %209
    %v211 = vsel %vm133, %v201, 0.0
    %212 = vadd.xlane.f32.xlu0 %v211
    %v213 = vpop.xlane.xlu0 %212
    %v214 = vadd.f32 %v166, %v204
    %v215 = vadd.f32 %v167, %v207
    %v216 = vadd.f32 %v168, %v210
    %v217 = vadd.f32 %v169, %v213
    %vm218 = vcmask 7168
    %219 = vst.msk [vmem:[#allocation3] sm:$0xff] %vm218, %v214
    %220 = vst.msk [vmem:[#allocation3 + $0x8] sm:$0xff] %vm218, %v215
    %221 = vst.msk [vmem:[#allocation3 + $0x10] sm:$0xff] %vm218, %v216
    %222 = vst.msk [vmem:[#allocation3 + $0x18] sm:$0xff] %vm218, %v217
    %223 = vst.msk [vmem:[#allocation2] sm:$0xff] %vm218, %v146
    %224 = vst.msk [vmem:[#allocation2 + $0x8] sm:$0xff] %vm218, %v147
    %225 = vst.msk [vmem:[#allocation2 + $0x10] sm:$0xff] %vm218, %v148
    %226 = vst.msk [vmem:[#allocation2 + $0x18] sm:$0xff] %vm218, %v149
    %v227 = vlaneseq
    %v228 = vand.u32 %v227, 127
    %v229 = vld [vmem:[%s2] sm:$0xff]
    %v230 = vld [vmem:[%s2 + $0x8] sm:$0xff]
    %v231 = vld [vmem:[%s2 + $0x10] sm:$0xff]
    %v232 = vld [vmem:[%s2 + $0x18] sm:$0xff]
    %s233 = smul.u32 0, 32
    %v234 = vstv %s233
    %v235 = vsub.s32 %v229, %v234
    %v236 = vsub.s32 %v230, %v234
    %v237 = vsub.s32 %v231, %v234
    %v238 = vsub.s32 %v232, %v234
    %v239 = vld [vmem:[#allocation4] sm:$0xff]
    %v240 = vld [vmem:[#allocation4 + $0x8] sm:$0xff]
    %v241 = vld [vmem:[#allocation4 + $0x10] sm:$0xff]
    %v242 = vld [vmem:[#allocation4 + $0x18] sm:$0xff]
    %243 = vset.pattern.permute.xlu0 0
    %244 = vperm.xlu0 %243, %v235
    %v245 = vpop.permute.xlu0 %244
    %246 = vset.pattern.permute.xlu0 0
    %247 = vperm.xlu0 %246, %v236
    %v248 = vpop.permute.xlu0 %247
    %249 = vset.pattern.permute.xlu0 0
    %250 = vperm.xlu0 %249, %v237
    %v251 = vpop.permute.xlu0 %250
    %252 = vset.pattern.permute.xlu0 0
    %253 = vperm.xlu0 %252, %v238
    %v254 = vpop.permute.xlu0 %253
    %vm255 = vcmp.eq.s32.totalorder %v228, %v245
    %vm256 = vcmp.eq.s32.totalorder %v228, %v248
    %vm257 = vcmp.eq.s32.totalorder %v228, %v251
    %vm258 = vcmp.eq.s32.totalorder %v228, %v254
    %v259 = vsel %vm255, %v94, 0.0
    %v260 = vsel %vm256, %v97, 0.0
    %v261 = vsel %vm257, %v102, 0.0
    %v262 = vsel %vm258, %v105, 0.0
    %v263 = vsel %vm133, %v259, 0.0
    %264 = vadd.xlane.f32.xlu0 %v263
    %v265 = vpop.xlane.xlu0 %264
    %v266 = vsel %vm133, %v260, 0.0
    %267 = vadd.xlane.f32.xlu0 %v266
    %v268 = vpop.xlane.xlu0 %267
    %v269 = vsel %vm133, %v261, 0.0
    %270 = vadd.xlane.f32.xlu0 %v269
    %v271 = vpop.xlane.xlu0 %270
    %v272 = vsel %vm133, %v262, 0.0
    %273 = vadd.xlane.f32.xlu0 %v272
    %v274 = vpop.xlane.xlu0 %273
    %v275 = vadd.f32 %v239, %v265
    %v276 = vadd.f32 %v240, %v268
    %v277 = vadd.f32 %v241, %v271
    %v278 = vadd.f32 %v242, %v274
    %279 = vst.msk [vmem:[#allocation4] sm:$0xff] %vm218, %v275
    %280 = vst.msk [vmem:[#allocation4 + $0x8] sm:$0xff] %vm218, %v276
    %281 = vst.msk [vmem:[#allocation4 + $0x10] sm:$0xff] %vm218, %v277
    %282 = vst.msk [vmem:[#allocation4 + $0x18] sm:$0xff] %vm218, %v278
    // Predicated region
    $region18: #{autoencoding_mixer_forward.5} parent=1 // pred_check
      %p283 = pneg %p19
    $region19: #{autoencoding_mixer_forward.5} parent=1 // pred_check_branch
      %285 = sbr.rel (%p283) target = $region21
    $region20: #{autoencoding_mixer_forward.5} parent=1 // pred_region
      %v286 = vld [vmem:[#allocation2] sm:$0xff]
      %v287 = vld [vmem:[#allocation2 + $0x8] sm:$0xff]
      %v288 = vld [vmem:[#allocation2 + $0x10] sm:$0xff]
      %v289 = vld [vmem:[#allocation2 + $0x18] sm:$0xff]
      %v290 = vld [vmem:[#allocation3] sm:$0xff]
      %v291 = vld [vmem:[#allocation3 + $0x8] sm:$0xff]
      %v292 = vld [vmem:[#allocation3 + $0x10] sm:$0xff]
      %v293 = vld [vmem:[#allocation3 + $0x18] sm:$0xff]
      %v294 = vlog2.pop %v290
      %v295 = vmul.f32 %v294, 0.6931472
      %v296 = vlog2.pop %v291
      %v297 = vmul.f32 %v296, 0.6931472
      %v298 = vlog2.pop %v292
      %v299 = vmul.f32 %v298, 0.6931472
      %v300 = vlog2.pop %v293
      %v301 = vmul.f32 %v300, 0.6931472
      %v302 = vadd.f32 %v286, %v295
      %v303 = vadd.f32 %v287, %v297
      %v304 = vadd.f32 %v288, %v299
      %v305 = vadd.f32 %v289, %v301
      %v306 = vld [vmem:[#allocation4] sm:$0xff]
      %v307 = vld [vmem:[#allocation4 + $0x8] sm:$0xff]
      %v308 = vld [vmem:[#allocation4 + $0x10] sm:$0xff]
      %v309 = vld [vmem:[#allocation4 + $0x18] sm:$0xff]
      %v310 = vsub.f32 %v302, %v306
      %v311 = vsub.f32 %v303, %v307
      %v312 = vsub.f32 %v304, %v308
      %v313 = vsub.f32 %v305, %v309
      %v314 = vsel %vm218, %v310, 0.0
      %v315 = vsel %vm218, %v311, 0.0
      %v316 = vadd.f32 %v314, %v315
      %v317 = vsel %vm218, %v312, 0.0
      %v318 = vadd.f32 %v316, %v317
      %v319 = vsel %vm218, %v313, 0.0
      %v320 = vadd.f32 %v318, %v319
      %321 = vadd.xlane.f32.xlu0 %v320
      %v322 = vpop.xlane.xlu0 %321
      %v323 = vrot.slane %v322, 4
      %v324 = vadd.f32 %v322, %v323
      %v325 = vrot.slane %v324, 2
      %v326 = vadd.f32 %v324, %v325
      %v327 = vrot.slane %v326, 1
      %v328 = vadd.f32 %v326, %v327
      %s329 = vtos %v328
      %v330 = vstv %s329
      %vm331 = vcmask 0
      %332 = vst.msk [vmem:[#allocation7] sm:$0x1] %vm331, %v330
    $region21: #{autoencoding_mixer_forward.5} parent=1 // pred_fallthru
      _
    // Predicated region
    $region22: #{autoencoding_mixer_forward.5} parent=1 // pred_check
      _
    $region23: #{autoencoding_mixer_forward.5} parent=1 // pred_check_branch
      %334 = sbr.rel (0) target = $region25
    $region24: #{autoencoding_mixer_forward.5} parent=1 // pred_region
      %s336 = ssub.s32 256, 256
      %337 = vsyncadd [#allocation6], %s336
      %s338 = sshll.u32 [#allocation5], 4
      %s339 = int_to_ptr.vmem [resolvable:$true] %s338
      %344 = dma.vmem_to_hbm [thread:$0]  %s339, 256, %s3, [#allocation6], 64, 64, 4
    $region25: #{autoencoding_mixer_forward.5} parent=1 // pred_fallthru
      _
    // Predicated region
    $region26: #{autoencoding_mixer_forward.5} parent=1 // pred_check
      _
    $region27: #{autoencoding_mixer_forward.5} parent=1 // pred_check_branch
      %346 = sbr.rel (0) target = $region29
    $region28: #{autoencoding_mixer_forward.5} parent=1 // pred_region
      %s348 = ssub.s32 16, 16
      %349 = vsyncadd [#allocation8], %s348
      %s351 = sshll.u32 [#allocation7], 4
      %s352 = int_to_ptr.vmem [resolvable:$true] %s351
      %354 = dma.vmem_to_hbm [thread:$0]  %s352, 16, %s4, [#allocation8]
    $region29: #{autoencoding_mixer_forward.5} parent=1 // pred_fallthru
      _
    // Predicated region
    $region30: #{autoencoding_mixer_forward.5} parent=1 // pred_check
      _
    $region31: #{autoencoding_mixer_forward.5} parent=1 // pred_check_branch
      %356 = sbr.rel (0) target = $region33
    $region32: #{autoencoding_mixer_forward.5} parent=1 // pred_region
      %357 = dma.done [#allocation6], 256
    $region33: #{autoencoding_mixer_forward.5} parent=1 // pred_fallthru
      _
    // Predicated region
    $region34: #{autoencoding_mixer_forward.5} parent=1 // pred_check
      _
    $region35: #{autoencoding_mixer_forward.5} parent=1 // pred_check_branch
      %359 = sbr.rel (0) target = $region37
    $region36: #{autoencoding_mixer_forward.5} parent=1 // pred_region
      %360 = dma.done [#allocation8], 16
    $region37: #{autoencoding_mixer_forward.5} parent=1 // pred_fallthru
      _
    %361 = vsyncpa [#allocation6], 1
    %362 = vsyncpa [#allocation8], 1

// kernel: autoencoding_mixer_forward.3
$region0: #{autoencoding_mixer_forward.3}
  #allocation0 [shape = 'u32[]', space=smem, size = 0x4, offset = 0x4, fixed_abs, tag = 'smem constant byte address 0x4 - core index']
  #allocation1 [shape = 'u32[144,128]{1,0:T(1,128)}', space=vmem, size = 0x12000, scoped, tag = 'internal scratch']
  %s0 = inlined_call_operand.vmem [shape: f32[32,16], index: 0, kind: input, shape index: {}]
  %s1 = inlined_call_operand.vmem [shape: bf16[2,16,16], index: 1, kind: input, shape index: {}]
  %s2 = inlined_call_operand.vmem [shape: f32[2,16,1], index: 2, kind: input, shape index: {}]
  %s3 = inlined_call_operand.vmem [shape: f32[2,5,16], index: 3, kind: input, shape index: {}]
  %s4 = inlined_call_operand.vmem [shape: bf16[2,16,64], index: 4, kind: input, shape index: {}]
  %s5 = inlined_call_operand.vmem [shape: f32[2,1,64], index: 5, kind: input, shape index: {}]
  %s6 = inlined_call_operand.vmem [shape: bf16[2,64,16], index: 6, kind: input, shape index: {}]
  %s7 = inlined_call_operand.vmem [shape: f32[32,16], index: 7, kind: output, shape index: {}]
  %s8 = sld [smem:[#allocation0]]
  $region65: #{autoencoding_mixer_forward.3} parent=0
    _
  %s10 = ssub.s32 1, %s8
  %s11 = scalar_select 0, %s10, %s8
  loop: start=0, step=1, limit=4
  $region2: #{autoencoding_mixer_forward.3} parent=0 // loop_pre_header
    _
  $region3: #{autoencoding_mixer_forward.3} parent=0 // loop_header
    %s13 = sphi 0, %s17
    %p14 = scmp.ge.s32.totalorder %s13, 4
    %s20 = sphi 0, %s32
    %s21 = sphi 0, %s28
    %s22 = sphi 0, %s20
    %s23 = sphi 0, %s21
    %s24 = sphi 0, %s22
    %s25 = sphi 0, %s23
    %s35 = sphi 0, %s37
    %s38 = sphi 0, %s35
    %s39 = sphi 0, %s38
    %s55 = sphi 0, %s39
    %s61 = sphi 0, %s63
    %s64 = sphi 0, %s61
    %s65 = sphi 0, %s64
    %s81 = sphi 0, %s65
    %s87 = sphi 0, %s89
    %s90 = sphi 0, %s87
    %s91 = sphi 0, %s90
    %s107 = sphi 0, %s91
    %s113 = sphi 0, %s115
    %s116 = sphi 0, %s113
    %s117 = sphi 0, %s116
    %s133 = sphi 0, %s117
    %s139 = sphi 0, %s141
    %s142 = sphi 0, %s139
    %s143 = sphi 0, %s142
    %s159 = sphi 0, %s143
    %s165 = sphi 0, %s167
    %s168 = sphi 0, %s165
    %s169 = sphi 0, %s168
    %s185 = sphi 0, %s169
    %s191 = sphi 0, %s193
    %s194 = sphi 0, %s191
    %s195 = sphi 0, %s194
    %s211 = sphi 0, %s195
    %s217 = sphi 0, %s219
    %s220 = sphi 0, %s217
    %s221 = sphi 0, %s220
    %s237 = sphi 0, %s221
  $region4: #{autoencoding_mixer_forward.3} parent=0 // loop_header_branch
    %16 = sbr.rel (%p14) target = $region8
  $region5: #{autoencoding_mixer_forward.3} parent=0 // loop_body
    %s18 = ssub.s32 %s13, 1
    %s19 = ssub.s32 %s13, 2
    %s26 = sadd.s32 1, %s21
    %p27 = scmp.ge.s32.totalorder %s26, 2
    %s28 = scalar_select %p27, 0, %s26
    %s29 = sadd.s32 1, %s20
    %s30 = scalar_select %p27, %s29, %s20
    %p31 = scmp.ge.s32.totalorder %s30, 1
    %s32 = scalar_select %p31, 0, %s30
    %s33 = ssub.s32 %s20, %s32
    %p34 = scmp.eq.s32.totalorder %s33, 0
    %s36 = sadd.s32 %s35, 1
    %s37 = scalar_select %p34, %s35, %s36
    %p40 = pneg %p34
    %p41 = scmp.eq.s32.totalorder %s13, 1
    %p42 = por %p40, %p41
    %p43 = scmp.ne.s32.totalorder %s35, %s38
    %p44 = scmp.eq.s32.totalorder %s13, 0
    %p45 = por %p43, %p44
    %p46 = scmp.ne.s32.totalorder %s35, %s38
    %p47 = scmp.eq.s32.totalorder %s18, 1
    %p48 = por %p46, %p47
    %p49 = scmp.ne.s32.totalorder %s38, %s39
    %p50 = scmp.eq.s32.totalorder %s18, 0
    %p51 = por %p49, %p50
    %p52 = scmp.ne.s32.totalorder %s38, %s39
    %p53 = scmp.eq.s32.totalorder %s19, 1
    %p54 = por %p52, %p53
    %p56 = scmp.ne.s32.totalorder %s39, %s55
    %p57 = scmp.eq.s32.totalorder %s19, 0
    %p58 = por %p56, %p57
    %s59 = ssub.s32 %s21, %s28
    %p60 = scmp.eq.s32.totalorder %s59, 0
    %s62 = sadd.s32 %s61, 1
    %s63 = scalar_select %p60, %s61, %s62
    %p66 = pneg %p60
    %p67 = scmp.eq.s32.totalorder %s13, 1
    %p68 = por %p66, %p67
    %p69 = scmp.ne.s32.totalorder %s61, %s64
    %p70 = scmp.eq.s32.totalorder %s13, 0
    %p71 = por %p69, %p70
    %p72 = scmp.ne.s32.totalorder %s61, %s64
    %p73 = scmp.eq.s32.totalorder %s18, 1
    %p74 = por %p72, %p73
    %p75 = scmp.ne.s32.totalorder %s64, %s65
    %p76 = scmp.eq.s32.totalorder %s18, 0
    %p77 = por %p75, %p76
    %p78 = scmp.ne.s32.totalorder %s64, %s65
    %p79 = scmp.eq.s32.totalorder %s19, 1
    %p80 = por %p78, %p79
    %p82 = scmp.ne.s32.totalorder %s65, %s81
    %p83 = scmp.eq.s32.totalorder %s19, 0
    %p84 = por %p82, %p83
    %s85 = ssub.s32 %s21, %s28
    %p86 = scmp.eq.s32.totalorder %s85, 0
    %s88 = sadd.s32 %s87, 1
    %s89 = scalar_select %p86, %s87, %s88
    %p92 = pneg %p86
    %p93 = scmp.eq.s32.totalorder %s13, 1
    %p94 = por %p92, %p93
    %p95 = scmp.ne.s32.totalorder %s87, %s90
    %p96 = scmp.eq.s32.totalorder %s13, 0
    %p97 = por %p95, %p96
    %p98 = scmp.ne.s32.totalorder %s87, %s90
    %p99 = scmp.eq.s32.totalorder %s18, 1
    %p100 = por %p98, %p99
    %p101 = scmp.ne.s32.totalorder %s90, %s91
    %p102 = scmp.eq.s32.totalorder %s18, 0
    %p103 = por %p101, %p102
    %p104 = scmp.ne.s32.totalorder %s90, %s91
    %p105 = scmp.eq.s32.totalorder %s19, 1
    %p106 = por %p104, %p105
    %p108 = scmp.ne.s32.totalorder %s91, %s107
    %p109 = scmp.eq.s32.totalorder %s19, 0
    %p110 = por %p108, %p109
    %s111 = ssub.s32 %s21, %s28
    %p112 = scmp.eq.s32.totalorder %s111, 0
    %s114 = sadd.s32 %s113, 1
    %s115 = scalar_select %p112, %s113, %s114
    %p118 = pneg %p112
    %p119 = scmp.eq.s32.totalorder %s13, 1
    %p120 = por %p118, %p119
    %p121 = scmp.ne.s32.totalorder %s113, %s116
    %p122 = scmp.eq.s32.totalorder %s13, 0
    %p123 = por %p121, %p122
    %p124 = scmp.ne.s32.totalorder %s113, %s116
    %p125 = scmp.eq.s32.totalorder %s18, 1
    %p126 = por %p124, %p125
    %p127 = scmp.ne.s32.totalorder %s116, %s117
    %p128 = scmp.eq.s32.totalorder %s18, 0
    %p129 = por %p127, %p128
    %p130 = scmp.ne.s32.totalorder %s116, %s117
    %p131 = scmp.eq.s32.totalorder %s19, 1
    %p132 = por %p130, %p131
    %p134 = scmp.ne.s32.totalorder %s117, %s133
    %p135 = scmp.eq.s32.totalorder %s19, 0
    %p136 = por %p134, %p135
    %s137 = ssub.s32 %s21, %s28
    %p138 = scmp.eq.s32.totalorder %s137, 0
    %s140 = sadd.s32 %s139, 1
    %s141 = scalar_select %p138, %s139, %s140
    %p144 = pneg %p138
    %p145 = scmp.eq.s32.totalorder %s13, 1
    %p146 = por %p144, %p145
    %p147 = scmp.ne.s32.totalorder %s139, %s142
    %p148 = scmp.eq.s32.totalorder %s13, 0
    %p149 = por %p147, %p148
    %p150 = scmp.ne.s32.totalorder %s139, %s142
    %p151 = scmp.eq.s32.totalorder %s18, 1
    %p152 = por %p150, %p151
    %p153 = scmp.ne.s32.totalorder %s142, %s143
    %p154 = scmp.eq.s32.totalorder %s18, 0
    %p155 = por %p153, %p154
    %p156 = scmp.ne.s32.totalorder %s142, %s143
    %p157 = scmp.eq.s32.totalorder %s19, 1
    %p158 = por %p156, %p157
    %p160 = scmp.ne.s32.totalorder %s143, %s159
    %p161 = scmp.eq.s32.totalorder %s19, 0
    %p162 = por %p160, %p161
    %s163 = ssub.s32 %s21, %s28
    %p164 = scmp.eq.s32.totalorder %s163, 0
    %s166 = sadd.s32 %s165, 1
    %s167 = scalar_select %p164, %s165, %s166
    %p170 = pneg %p164
    %p171 = scmp.eq.s32.totalorder %s13, 1
    %p172 = por %p170, %p171
    %p173 = scmp.ne.s32.totalorder %s165, %s168
    %p174 = scmp.eq.s32.totalorder %s13, 0
    %p175 = por %p173, %p174
    %p176 = scmp.ne.s32.totalorder %s165, %s168
    %p177 = scmp.eq.s32.totalorder %s18, 1
    %p178 = por %p176, %p177
    %p179 = scmp.ne.s32.totalorder %s168, %s169
    %p180 = scmp.eq.s32.totalorder %s18, 0
    %p181 = por %p179, %p180
    %p182 = scmp.ne.s32.totalorder %s168, %s169
    %p183 = scmp.eq.s32.totalorder %s19, 1
    %p184 = por %p182, %p183
    %p186 = scmp.ne.s32.totalorder %s169, %s185
    %p187 = scmp.eq.s32.totalorder %s19, 0
    %p188 = por %p186, %p187
    %s189 = ssub.s32 %s21, %s28
    %p190 = scmp.eq.s32.totalorder %s189, 0
    %s192 = sadd.s32 %s191, 1
    %s193 = scalar_select %p190, %s191, %s192
    %p196 = pneg %p190
    %p197 = scmp.eq.s32.totalorder %s13, 1
    %p198 = por %p196, %p197
    %p199 = scmp.ne.s32.totalorder %s191, %s194
    %p200 = scmp.eq.s32.totalorder %s13, 0
    %p201 = por %p199, %p200
    %p202 = scmp.ne.s32.totalorder %s191, %s194
    %p203 = scmp.eq.s32.totalorder %s18, 1
    %p204 = por %p202, %p203
    %p205 = scmp.ne.s32.totalorder %s194, %s195
    %p206 = scmp.eq.s32.totalorder %s18, 0
    %p207 = por %p205, %p206
    %p208 = scmp.ne.s32.totalorder %s194, %s195
    %p209 = scmp.eq.s32.totalorder %s19, 1
    %p210 = por %p208, %p209
    %p212 = scmp.ne.s32.totalorder %s195, %s211
    %p213 = scmp.eq.s32.totalorder %s19, 0
    %p214 = por %p212, %p213
    %s215 = ssub.s32 %s20, %s32
    %p216 = scmp.eq.s32.totalorder %s215, 0
    %s218 = sadd.s32 %s217, 1
    %s219 = scalar_select %p216, %s217, %s218
    %p222 = pneg %p216
    %p223 = scmp.eq.s32.totalorder %s13, 1
    %p224 = por %p222, %p223
    %p225 = scmp.ne.s32.totalorder %s217, %s220
    %p226 = scmp.eq.s32.totalorder %s13, 0
    %p227 = por %p225, %p226
    %p228 = scmp.ne.s32.totalorder %s217, %s220
    %p229 = scmp.eq.s32.totalorder %s18, 1
    %p230 = por %p228, %p229
    %p231 = scmp.ne.s32.totalorder %s220, %s221
    %p232 = scmp.eq.s32.totalorder %s18, 0
    %p233 = por %p231, %p232
    %p234 = scmp.ne.s32.totalorder %s220, %s221
    %p235 = scmp.eq.s32.totalorder %s19, 1
    %p236 = por %p234, %p235
    %p238 = scmp.ne.s32.totalorder %s221, %s237
    %p239 = scmp.eq.s32.totalorder %s19, 0
    %p240 = por %p238, %p239
    %p241 = scmp.le.s32.totalorder 1, %s13
    %p242 = scmp.lt.s32.totalorder %s13, 3
    %p243 = pnand %p241, %p242
    %p244 = pneg %p243
    // Predicated region
    $region9: #{autoencoding_mixer_forward.3} parent=5 // pred_check
      _
    $region10: #{autoencoding_mixer_forward.3} parent=5 // pred_check_branch
      %246 = sbr.rel (%p243) target = $region12
    $region11: #{autoencoding_mixer_forward.3} parent=5 // pred_region
      %s247 = ssub.s32 %s13, 1
      // Predicated region
      $region13: #{autoencoding_mixer_forward.3} parent=11 // pred_check
        %p248 = pneg %p51
      $region14: #{autoencoding_mixer_forward.3} parent=11 // pred_check_branch
        %250 = sbr.rel (%p248) target = $region16
      $region15: #{autoencoding_mixer_forward.3} parent=11 // pred_region
        %s251 = smul.u32 4, %s22
        %p252 = scmp.lt.s32.totalorder %s251, 3
        %s253 = scalar_select %p252, %s251, 3
        %s254 = smul.addr %s253, 8
        %s255 = scalar_lea.vmem %s0, %s254
        %s256 = smul.u32 4, %s22
      $region16: #{autoencoding_mixer_forward.3} parent=11 // pred_fallthru
        _
    $region12: #{autoencoding_mixer_forward.3} parent=5 // pred_fallthru
      _
    %p257 = scmp.lt.s32.totalorder %s13, 2
    // Predicated region
    $region17: #{autoencoding_mixer_forward.3} parent=5 // pred_check
      %p258 = pneg %p257
    $region18: #{autoencoding_mixer_forward.3} parent=5 // pred_check_branch
      %260 = sbr.rel (%p258) target = $region20
    $region19: #{autoencoding_mixer_forward.3} parent=5 // pred_region
      // Predicated region
      $region21: #{autoencoding_mixer_forward.3} parent=19 // pred_check
        %p261 = pneg %p71
      $region22: #{autoencoding_mixer_forward.3} parent=19 // pred_check_branch
        %263 = sbr.rel (%p261) target = $region24
      $region23: #{autoencoding_mixer_forward.3} parent=19 // pred_region
        %p264 = scmp.lt.s32.totalorder %s21, 1
        %s265 = scalar_select %p264, %s21, 1
        %s266 = smul.addr %s265, 2
        %s267 = smul.addr %s266, 4
        %s268 = scalar_lea.vmem %s1, %s267
      $region24: #{autoencoding_mixer_forward.3} parent=19 // pred_fallthru
        _
      // Predicated region
      $region25: #{autoencoding_mixer_forward.3} parent=19 // pred_check
        %p269 = pneg %p97
      $region26: #{autoencoding_mixer_forward.3} parent=19 // pred_check_branch
        %271 = sbr.rel (%p269) target = $region28
      $region27: #{autoencoding_mixer_forward.3} parent=19 // pred_region
        %p272 = scmp.lt.s32.totalorder %s21, 1
        %s273 = scalar_select %p272, %s21, 1
        %s274 = smul.addr %s273, 2
        %s275 = smul.addr %s274, 8
        %s276 = scalar_lea.vmem %s2, %s275
      $region28: #{autoencoding_mixer_forward.3} parent=19 // pred_fallthru
        _
      // Predicated region
      $region29: #{autoencoding_mixer_forward.3} parent=19 // pred_check
        %p277 = pneg %p123
      $region30: #{autoencoding_mixer_forward.3} parent=19 // pred_check_branch
        %279 = sbr.rel (%p277) target = $region32
      $region31: #{autoencoding_mixer_forward.3} parent=19 // pred_region
        %p280 = scmp.lt.s32.totalorder %s21, 1
        %s281 = scalar_select %p280, %s21, 1
        %s282 = smul.addr %s281, 8
        %s283 = scalar_lea.vmem %s3, %s282
      $region32: #{autoencoding_mixer_forward.3} parent=19 // pred_fallthru
        _
      // Predicated region
      $region33: #{autoencoding_mixer_forward.3} parent=19 // pred_check
        %p284 = pneg %p149
      $region34: #{autoencoding_mixer_forward.3} parent=19 // pred_check_branch
        %286 = sbr.rel (%p284) target = $region36
      $region35: #{autoencoding_mixer_forward.3} parent=19 // pred_region
        %p287 = scmp.lt.s32.totalorder %s21, 1
        %s288 = scalar_select %p287, %s21, 1
        %s289 = smul.addr %s288, 2
        %s290 = smul.addr %s289, 4
        %s291 = scalar_lea.vmem %s4, %s290
      $region36: #{autoencoding_mixer_forward.3} parent=19 // pred_fallthru
        _
      // Predicated region
      $region37: #{autoencoding_mixer_forward.3} parent=19 // pred_check
        %p292 = pneg %p175
      $region38: #{autoencoding_mixer_forward.3} parent=19 // pred_check_branch
        %294 = sbr.rel (%p292) target = $region40
      $region39: #{autoencoding_mixer_forward.3} parent=19 // pred_region
        %p295 = scmp.lt.s32.totalorder %s21, 1
        %s296 = scalar_select %p295, %s21, 1
        %s297 = scalar_lea.vmem %s5, %s296
      $region40: #{autoencoding_mixer_forward.3} parent=19 // pred_fallthru
        _
      // Predicated region
      $region41: #{autoencoding_mixer_forward.3} parent=19 // pred_check
        %p298 = pneg %p201
      $region42: #{autoencoding_mixer_forward.3} parent=19 // pred_check_branch
        %300 = sbr.rel (%p298) target = $region44
      $region43: #{autoencoding_mixer_forward.3} parent=19 // pred_region
        %p301 = scmp.lt.s32.totalorder %s21, 1
        %s302 = scalar_select %p301, %s21, 1
        %s303 = smul.addr %s302, 8
        %s304 = smul.addr %s303, 4
        %s305 = scalar_lea.vmem %s6, %s304
      $region44: #{autoencoding_mixer_forward.3} parent=19 // pred_fallthru
        _
    $region20: #{autoencoding_mixer_forward.3} parent=5 // pred_fallthru
      _
    %p306 = scmp.le.s32.totalorder 1, %s13
    %p307 = scmp.lt.s32.totalorder %s13, 3
    %p308 = pnand %p306, %p307
    %p309 = pneg %p308
    // Predicated region
    $region45: #{autoencoding_mixer_forward.3} parent=5 // pred_check
      _
    $region46: #{autoencoding_mixer_forward.3} parent=5 // pred_check_branch
      %311 = sbr.rel (%p308) target = $region48
    $region47: #{autoencoding_mixer_forward.3} parent=5 // pred_region
      %s312 = ssub.s32 %s13, 1
      %s313 = smul.u32 4, %s22
      %p314 = scmp.lt.s32.totalorder %s313, 3
      %s315 = scalar_select %p314, %s313, 3
      %s316 = smul.addr %s315, 8
      %s317 = scalar_lea.vmem %s0, %s316
      %p318 = pneg %p51
      %p319 = pneg %p48
      %p320 = scmp.lt.s32.totalorder %s23, 1
      %s321 = scalar_select %p320, %s23, 1
      %s322 = smul.addr %s321, 2
      %s323 = smul.addr %s322, 4
      %s324 = scalar_lea.vmem %s1, %s323
      %p325 = pneg %p77
      %p326 = pneg %p74
      %p327 = scmp.lt.s32.totalorder %s23, 1
      %s328 = scalar_select %p327, %s23, 1
      %s329 = smul.addr %s328, 2
      %s330 = smul.addr %s329, 8
      %s331 = scalar_lea.vmem %s2, %s330
      %p332 = pneg %p103
      %p333 = pneg %p100
      %p334 = scmp.lt.s32.totalorder %s23, 1
      %s335 = scalar_select %p334, %s23, 1
      %s336 = smul.addr %s335, 8
      %s337 = scalar_lea.vmem %s3, %s336
      %p338 = pneg %p129
      %p339 = pneg %p126
      %p340 = scmp.lt.s32.totalorder %s23, 1
      %s341 = scalar_select %p340, %s23, 1
      %s342 = smul.addr %s341, 2
      %s343 = smul.addr %s342, 4
      %s344 = scalar_lea.vmem %s4, %s343
      %p345 = pneg %p155
      %p346 = pneg %p152
      %p347 = scmp.lt.s32.totalorder %s23, 1
      %s348 = scalar_select %p347, %s23, 1
      %s349 = scalar_lea.vmem %s5, %s348
      %p350 = pneg %p181
      %p351 = pneg %p178
      %p352 = scmp.lt.s32.totalorder %s23, 1
      %s353 = scalar_select %p352, %s23, 1
      %s354 = smul.addr %s353, 8
      %s355 = smul.addr %s354, 4
      %s356 = scalar_lea.vmem %s6, %s355
      %p357 = pneg %p207
      %p358 = pneg %p204
      %p359 = pneg %p233
      %p360 = pneg %p230
      %s361 = smul.u32 4, %s22
      %p362 = scmp.lt.s32.totalorder %s361, 3
      %s363 = scalar_select %p362, %s361, 3
      %s364 = smul.addr %s363, 8
      %s365 = scalar_lea.vmem %s7, %s364
      %s366 = smul.u32 4, %s22
      %p367 = scmp.lt.s32.totalorder %s366, 3
      %s368 = scalar_select %p367, %s366, 3
      %s369 = smul.addr %s368, 8
      %s370 = scalar_lea.vmem %s0, %s369
      %s371 = smul.u32 4, %s22
      %p372 = scmp.lt.s32.totalorder %s23, 1
      %s373 = scalar_select %p372, %s23, 1
      %s374 = smul.addr %s373, 2
      %s375 = smul.addr %s374, 4
      %s376 = scalar_lea.vmem %s1, %s375
      %p377 = scmp.lt.s32.totalorder %s23, 1
      %s378 = scalar_select %p377, %s23, 1
      %s379 = smul.addr %s378, 2
      %s380 = smul.addr %s379, 8
      %s381 = scalar_lea.vmem %s2, %s380
      %p382 = scmp.lt.s32.totalorder %s23, 1
      %s383 = scalar_select %p382, %s23, 1
      %s384 = smul.addr %s383, 8
      %s385 = scalar_lea.vmem %s3, %s384
      %p386 = scmp.lt.s32.totalorder %s23, 1
      %s387 = scalar_select %p386, %s23, 1
      %s388 = smul.addr %s387, 2
      %s389 = smul.addr %s388, 4
      %s390 = scalar_lea.vmem %s4, %s389
      %p391 = scmp.lt.s32.totalorder %s23, 1
      %s392 = scalar_select %p391, %s23, 1
      %s393 = scalar_lea.vmem %s5, %s392
      %p394 = scmp.lt.s32.totalorder %s23, 1
      %s395 = scalar_select %p394, %s23, 1
      %s396 = smul.addr %s395, 8
      %s397 = smul.addr %s396, 4
      %s398 = scalar_lea.vmem %s6, %s397
      %s399 = smul.u32 4, %s22
      %p400 = scmp.lt.s32.totalorder %s399, 3
      %s401 = scalar_select %p400, %s399, 3
      %s402 = smul.addr %s401, 8
      %s403 = scalar_lea.vmem %s7, %s402
      %s404 = smul.u32 4, %s22
      %p410 = scmp.eq.s32.totalorder %s23, 0
      // Predicated region
      $region49: #{autoencoding_mixer_forward.3} parent=47 // pred_check
        %p411 = pneg %p410
      $region50: #{autoencoding_mixer_forward.3} parent=47 // pred_check_branch
        %413 = sbr.rel (%p411) target = $region52
      $region51: #{autoencoding_mixer_forward.3} parent=47 // pred_region
        %v414 = vld [vmem:[%s370] sm:$0xff]
        %v415 = vld [vmem:[%s370 + $0x8] sm:$0xff]
        %v416 = vld [vmem:[%s370 + $0x10] sm:$0xff]
        %v417 = vld [vmem:[%s370 + $0x18] sm:$0xff]
        %vm418 = vcmask 130048
        %419 = vst.msk [vmem:[%s403] sm:$0xff] %vm418, %v414
        %420 = vst.msk [vmem:[%s403 + $0x8] sm:$0xff] %vm418, %v415
        %421 = vst.msk [vmem:[%s403 + $0x10] sm:$0xff] %vm418, %v416
        %422 = vst.msk [vmem:[%s403 + $0x18] sm:$0xff] %vm418, %v417
      $region52: #{autoencoding_mixer_forward.3} parent=47 // pred_fallthru
        _
      %v423 = vld [vmem:[%s403] sm:$0xff]
      %v424 = vld [vmem:[%s403 + $0x8] sm:$0xff]
      %v425 = vld [vmem:[%s403 + $0x10] sm:$0xff]
      %v426 = vld [vmem:[%s403 + $0x18] sm:$0xff]
      %v427 = vld [vmem:[%s376] sm:$0xf]
      %v428 = vld [vmem:[%s376 + $0x4] sm:$0xf]
      %v429 = vld [vmem:[%s381] sm:$0xff]
      %v430 = vld [vmem:[%s381 + $0x8] sm:$0xff]
      %v431 = vld [vmem:[%s385] sm:$0x1f]
      %v432 = vld [vmem:[%s390] sm:$0xf]
      %v433 = vld [vmem:[%s390 + $0x4] sm:$0xf]
      %v434 = vld [vmem:[%s393] sm:$0x1]
      %v435 = vld [vmem:[%s398] sm:$0xf]
      %v436 = vld [vmem:[%s398 + $0x4] sm:$0xf]
      %v437 = vld [vmem:[%s398 + $0x8] sm:$0xf]
      %v438 = vld [vmem:[%s398 + $0xc] sm:$0xf]
      %v439 = vld [vmem:[%s398 + $0x10] sm:$0xf]
      %v440 = vld [vmem:[%s398 + $0x14] sm:$0xf]
      %v441 = vld [vmem:[%s398 + $0x18] sm:$0xf]
      %v442 = vld [vmem:[%s398 + $0x1c] sm:$0xf]
      %vm443 = vcmask 130048
      %v444 = vsel %vm443, %v423, 0.0
      %445 = vadd.xlane.f32.xlu0 %v444
      %v446 = vpop.xlane.xlu0 %445
      %v447 = vsel %vm443, %v424, 0.0
      %448 = vadd.xlane.f32.xlu0 %v447
      %v449 = vpop.xlane.xlu0 %448
      %v450 = vsel %vm443, %v425, 0.0
      %451 = vadd.xlane.f32.xlu0 %v450
      %v452 = vpop.xlane.xlu0 %451
      %v453 = vsel %vm443, %v426, 0.0
      %454 = vadd.xlane.f32.xlu0 %v453
      %v455 = vpop.xlane.xlu0 %454
      %v456 = vrcp.pop 16.0
      %v457 = vmul.f32 %v446, %v456
      %v458 = vmul.f32 %v449, %v456
      %v459 = vmul.f32 %v452, %v456
      %v460 = vmul.f32 %v455, %v456
      %v461 = vsub.f32 %v423, %v457
      %v462 = vsub.f32 %v424, %v458
      %v463 = vsub.f32 %v425, %v459
      %v464 = vsub.f32 %v426, %v460
      %v465 = vmul.f32 %v461, %v461
      %v466 = vmul.f32 %v462, %v462
      %v467 = vmul.f32 %v463, %v463
      %v468 = vmul.f32 %v464, %v464
      %v469 = vsel %vm443, %v465, 0.0
      %470 = vadd.xlane.f32.xlu0 %v469
      %v471 = vpop.xlane.xlu0 %470
      %v472 = vsel %vm443, %v466, 0.0
      %473 = vadd.xlane.f32.xlu0 %v472
      %v474 = vpop.xlane.xlu0 %473
      %v475 = vsel %vm443, %v467, 0.0
      %476 = vadd.xlane.f32.xlu0 %v475
      %v477 = vpop.xlane.xlu0 %476
      %v478 = vsel %vm443, %v468, 0.0
      %479 = vadd.xlane.f32.xlu0 %v478
      %v480 = vpop.xlane.xlu0 %479
      %v481 = vmul.f32 %v471, %v456
      %v482 = vmul.f32 %v474, %v456
      %v483 = vmul.f32 %v477, %v456
      %v484 = vmul.f32 %v480, %v456
      %v485 = vadd.f32 %v481, 1e-05
      %v486 = vadd.f32 %v482, 1e-05
      %v487 = vadd.f32 %v483, 1e-05
      %v488 = vadd.f32 %v484, 1e-05
      %v489 = vrsqrt.pop %v485
      %v490 = vrsqrt.pop %v486
      %v491 = vrsqrt.pop %v487
      %v492 = vrsqrt.pop %v488
      %v493 = vmul.f32 %v461, %v489
      %v494 = vmul.f32 %v462, %v490
      %v495 = vmul.f32 %v463, %v491
      %v496 = vmul.f32 %v464, %v492
      %v497 = vlaneseq
      %v498 = vshrl.u32 %v497, 7
      %v499 = vsub.s32 0, %v498
      %v500 = vrot.slane %v431, %v499
      %v501 = vmul.f32 %v493, %v500
      %v502 = vmul.f32 %v494, %v500
      %v503 = vmul.f32 %v495, %v500
      %v504 = vmul.f32 %v496, %v500
      %v505 = vlaneseq
      %v506 = vshrl.u32 %v505, 7
      %v507 = vsub.s32 1, %v506
      %v508 = vrot.slane %v431, %v507
      %v509 = vadd.f32 %v501, %v508
      %v510 = vadd.f32 %v502, %v508
      %v511 = vadd.f32 %v503, %v508
      %v512 = vadd.f32 %v504, %v508
      %v513 = vpack.c.bf16 %v510, %v509
      %v514 = vpack.c.bf16 %v512, %v511
      %516 = vset.pattern.permute.xlu0 0
      %517 = vperm.xlu0 %516, %v429
      %v518 = vpop.permute.xlu0 %517
      %521 = vset.pattern.permute.xlu0 0
      %522 = vperm.xlu0 %521, %v430
      %v523 = vpop.permute.xlu0 %522
      %v527 = vunpack.c.l.b16 %v427
      %v528 = vunpack.c.l.b16 %v428
      %v529 = vpack.c.b16 %v528, %v527
      %v531 = vsel %vm443, %v529, 0
      %533 = vmatprep.subr.bf16.mxu0 0
      %534 = vmatpush1.bf16.msra.mxu0 0
      %535 = vmatprep.subr.bf16.mxu0 0
      %536 = vmatpush1.bf16.msra.mxu0 0
      %537 = vmatprep.subr.bf16.mxu0 0
      %538 = vmatpush1.bf16.msra.mxu0 0
      %539 = vmatprep.subr.bf16.mxu0 0
      %540 = vmatpush1.bf16.msra.mxu0 0
      %541 = vmatprep.subr.bf16.mxu0 0
      %542 = vmatpush1.bf16.msra.mxu0 0
      %543 = vmatprep.subr.bf16.mxu0 0
      %544 = vmatpush1.bf16.msra.mxu0 0
      %545 = vmatprep.subr.bf16.mxu0 0
      %546 = vmatpush1.bf16.msra.mxu0 0
      %547 = vmatprep.subr.bf16.mxu0 0
      %548 = vmatpush1.bf16.msra.mxu0 %v513
      %549 = vmatprep.subr.bf16.mxu0 0
      %550 = vmatpush2.bf16.msra.mxu0 0
      %551 = vmatprep.subr.bf16.mxu0 0
      %552 = vmatpush2.bf16.msra.mxu0 0
      %553 = vmatprep.subr.bf16.mxu0 0
      %554 = vmatpush2.bf16.msra.mxu0 0
      %555 = vmatprep.subr.bf16.mxu0 0
      %556 = vmatpush2.bf16.msra.mxu0 0
      %557 = vmatprep.subr.bf16.mxu0 0
      %558 = vmatpush2.bf16.msra.mxu0 0
      %559 = vmatprep.subr.bf16.mxu0 0
      %560 = vmatpush2.bf16.msra.mxu0 0
      %561 = vmatprep.subr.bf16.mxu0 0
      %562 = vmatpush2.bf16.msra.mxu0 0
      %563 = vmatprep.subr.bf16.mxu0 0
      %564 = vmatpush2.bf16.msra.mxu0 0
      %565 = vmatprep.mubr.bf16.mxu0 0
      %566 = vmatmul.mubr.bf16.gmra.mxu0 %v531
      %v567 = vpop.f32.mrf.mxu0
      %v568 = vadd.f32 %v518, %v567
      %v569 = vpop.f32.mrf.mxu0
      %v570 = vpop.f32.mrf.mxu0
      %v571 = vadd.f32 %v523, %v570
      %v572 = vpop.f32.mrf.mxu0
      %573 = vdwg.mxu0
      %574 = vmatprep.subr.bf16.mxu0 0
      %575 = vmatpush1.bf16.msra.mxu0 0
      %576 = vmatprep.subr.bf16.mxu0 0
      %577 = vmatpush1.bf16.msra.mxu0 0
      %578 = vmatprep.subr.bf16.mxu0 0
      %579 = vmatpush1.bf16.msra.mxu0 0
      %580 = vmatprep.subr.bf16.mxu0 0
      %581 = vmatpush1.bf16.msra.mxu0 0
      %582 = vmatprep.subr.bf16.mxu0 0
      %583 = vmatpush1.bf16.msra.mxu0 0
      %584 = vmatprep.subr.bf16.mxu0 0
      %585 = vmatpush1.bf16.msra.mxu0 0
      %586 = vmatprep.subr.bf16.mxu0 0
      %587 = vmatpush1.bf16.msra.mxu0 0
      %588 = vmatprep.subr.bf16.mxu0 0
      %589 = vmatpush1.bf16.msra.mxu0 %v514
      %590 = vmatprep.subr.bf16.mxu0 0
      %591 = vmatpush2.bf16.msra.mxu0 0
      %592 = vmatprep.subr.bf16.mxu0 0
      %593 = vmatpush2.bf16.msra.mxu0 0
      %594 = vmatprep.subr.bf16.mxu0 0
      %595 = vmatpush2.bf16.msra.mxu0 0
      %596 = vmatprep.subr.bf16.mxu0 0
      %597 = vmatpush2.bf16.msra.mxu0 0
      %598 = vmatprep.subr.bf16.mxu0 0
      %599 = vmatpush2.bf16.msra.mxu0 0
      %600 = vmatprep.subr.bf16.mxu0 0
      %601 = vmatpush2.bf16.msra.mxu0 0
      %602 = vmatprep.subr.bf16.mxu0 0
      %603 = vmatpush2.bf16.msra.mxu0 0
      %604 = vmatprep.subr.bf16.mxu0 0
      %605 = vmatpush2.bf16.msra.mxu0 0
      %606 = vmatprep.mubr.bf16.mxu0 0
      %607 = vmatmul.mubr.bf16.gmra.mxu0 %v531
      %v608 = vpop.f32.mrf.mxu0
      %v609 = vadd.f32 %v518, %v608
      %v610 = vpop.f32.mrf.mxu0
      %v611 = vpop.f32.mrf.mxu0
      %v612 = vadd.f32 %v523, %v611
      %v613 = vpop.f32.mrf.mxu0
      %614 = vdwg.mxu0
      %v615 = vadd.f32 %v568, %v423
      %v616 = vadd.f32 %v571, %v424
      %v617 = vadd.f32 %v609, %v425
      %v618 = vadd.f32 %v612, %v426
      %v619 = vsel %vm443, %v615, 0.0
      %620 = vadd.xlane.f32.xlu0 %v619
      %v621 = vpop.xlane.xlu0 %620
      %v622 = vsel %vm443, %v616, 0.0
      %623 = vadd.xlane.f32.xlu0 %v622
      %v624 = vpop.xlane.xlu0 %623
      %v625 = vsel %vm443, %v617, 0.0
      %626 = vadd.xlane.f32.xlu0 %v625
      %v627 = vpop.xlane.xlu0 %626
      %v628 = vsel %vm443, %v618, 0.0
      %629 = vadd.xlane.f32.xlu0 %v628
      %v630 = vpop.xlane.xlu0 %629
      %v631 = vmul.f32 %v621, %v456
      %v632 = vmul.f32 %v624, %v456
      %v633 = vmul.f32 %v627, %v456
      %v634 = vmul.f32 %v630, %v456
      %v635 = vsub.f32 %v615, %v631
      %v636 = vsub.f32 %v616, %v632
      %v637 = vsub.f32 %v617, %v633
      %v638 = vsub.f32 %v618, %v634
      %v639 = vmul.f32 %v635, %v635
      %v640 = vmul.f32 %v636, %v636
      %v641 = vmul.f32 %v637, %v637
      %v642 = vmul.f32 %v638, %v638
      %v643 = vsel %vm443, %v639, 0.0
      %644 = vadd.xlane.f32.xlu0 %v643
      %v645 = vpop.xlane.xlu0 %644
      %v646 = vsel %vm443, %v640, 0.0
      %647 = vadd.xlane.f32.xlu0 %v646
      %v648 = vpop.xlane.xlu0 %647
      %v649 = vsel %vm443, %v641, 0.0
      %650 = vadd.xlane.f32.xlu0 %v649
      %v651 = vpop.xlane.xlu0 %650
      %v652 = vsel %vm443, %v642, 0.0
      %653 = vadd.xlane.f32.xlu0 %v652
      %v654 = vpop.xlane.xlu0 %653
      %v655 = vmul.f32 %v645, %v456
      %v656 = vmul.f32 %v648, %v456
      %v657 = vmul.f32 %v651, %v456
      %v658 = vmul.f32 %v654, %v456
      %v659 = vadd.f32 %v655, 1e-05
      %v660 = vadd.f32 %v656, 1e-05
      %v661 = vadd.f32 %v657, 1e-05
      %v662 = vadd.f32 %v658, 1e-05
      %v663 = vrsqrt.pop %v659
      %v664 = vrsqrt.pop %v660
      %v665 = vrsqrt.pop %v661
      %v666 = vrsqrt.pop %v662
      %v667 = vmul.f32 %v635, %v663
      %v668 = vmul.f32 %v636, %v664
      %v669 = vmul.f32 %v637, %v665
      %v670 = vmul.f32 %v638, %v666
      %v671 = vlaneseq
      %v672 = vshrl.u32 %v671, 7
      %v673 = vsub.s32 2, %v672
      %v674 = vrot.slane %v431, %v673
      %v675 = vmul.f32 %v667, %v674
      %v676 = vmul.f32 %v668, %v674
      %v677 = vmul.f32 %v669, %v674
      %v678 = vmul.f32 %v670, %v674
      %v679 = vlaneseq
      %v680 = vshrl.u32 %v679, 7
      %v681 = vsub.s32 3, %v680
      %v682 = vrot.slane %v431, %v681
      %v683 = vadd.f32 %v675, %v682
      %v684 = vadd.f32 %v676, %v682
      %v685 = vadd.f32 %v677, %v682
      %v686 = vadd.f32 %v678, %v682
      %v687 = vpack.c.bf16 %v684, %v683
      %v688 = vpack.c.bf16 %v686, %v685
      %v690 = vlaneseq
      %v691 = vshrl.u32 %v690, 7
      %v692 = vsub.s32 0, %v691
      %v693 = vrot.slane %v434, %v692
      %v697 = vunpack.c.l.b16 %v432
      %v698 = vunpack.c.l.b16 %v433
      %v699 = vpack.c.b16 %v698, %v697
      %v702 = vsel %vm443, %v687, 0
      %v705 = vsel %vm443, %v688, 0
      %707 = vmatprep.subr.bf16.mxu0 0
      %708 = vmatpush1.bf16.msra.mxu0 0
      %709 = vmatprep.subr.bf16.mxu0 0
      %710 = vmatpush1.bf16.msra.mxu0 0
      %711 = vmatprep.subr.bf16.mxu0 0
      %712 = vmatpush1.bf16.msra.mxu0 0
      %713 = vmatprep.subr.bf16.mxu0 0
      %714 = vmatpush1.bf16.msra.mxu0 0
      %715 = vmatprep.subr.bf16.mxu0 0
      %716 = vmatpush1.bf16.msra.mxu0 0
      %717 = vmatprep.subr.bf16.mxu0 0
      %718 = vmatpush1.bf16.msra.mxu0 0
      %719 = vmatprep.subr.bf16.mxu0 0
      %720 = vmatpush1.bf16.msra.mxu0 0
      %721 = vmatprep.subr.bf16.mxu0 0
      %722 = vmatpush1.bf16.msra.mxu0 %v699
      %723 = vmatprep.subr.bf16.mxu0 0
      %724 = vmatpush2.bf16.msra.mxu0 0
      %725 = vmatprep.subr.bf16.mxu0 0
      %726 = vmatpush2.bf16.msra.mxu0 0
      %727 = vmatprep.subr.bf16.mxu0 0
      %728 = vmatpush2.bf16.msra.mxu0 0
      %729 = vmatprep.subr.bf16.mxu0 0
      %730 = vmatpush2.bf16.msra.mxu0 0
      %731 = vmatprep.subr.bf16.mxu0 0
      %732 = vmatpush2.bf16.msra.mxu0 0
      %733 = vmatprep.subr.bf16.mxu0 0
      %734 = vmatpush2.bf16.msra.mxu0 0
      %735 = vmatprep.subr.bf16.mxu0 0
      %736 = vmatpush2.bf16.msra.mxu0 0
      %737 = vmatprep.subr.bf16.mxu0 0
      %738 = vmatpush2.bf16.msra.mxu0 0
      %739 = vmatprep.mubr.bf16.mxu0 0
      %740 = vmatmul.mubr.bf16.gmra.mxu0 %v702
      %v741 = vpop.f32.mrf.mxu0
      %v742 = vadd.f32 %v693, %v741
      %v743 = vpop.f32.mrf.mxu0
      %v744 = vpop.f32.mrf.mxu0
      %v745 = vadd.f32 %v693, %v744
      %v746 = vpop.f32.mrf.mxu0
      %747 = vmatprep.mubr.bf16.mxu0 0
      %748 = vmatmul.mubr.bf16.gmra.mxu0 %v705
      %v749 = vpop.f32.mrf.mxu0
      %v750 = vadd.f32 %v693, %v749
      %v751 = vpop.f32.mrf.mxu0
      %v752 = vpop.f32.mrf.mxu0
      %v753 = vadd.f32 %v693, %v752
      %v754 = vpop.f32.mrf.mxu0
      %755 = vdwg.mxu0
      %v756 = vpack.c.bf16 %v745, %v742
      %v757 = vpack.c.bf16 %v753, %v750
      %v758 = vmul.bf16 %v756, %v756
      %v759 = vmul.bf16 %v757, %v757
      %v760 = vmul.bf16 %v758, %v756
      %v761 = vmul.bf16 %v759, %v757
      %v762 = vmul.bf16 %v760, 1027030327
      %v763 = vmul.bf16 %v761, 1027030327
      %v764 = vadd.bf16 %v756, %v762
      %v765 = vadd.bf16 %v757, %v763
      %v766 = vmul.bf16 %v764, 1061961548
      %v767 = vmul.bf16 %v765, 1061961548
      %v768 = vmul.bf16 %v756, 1056980736
      %v769 = vmul.bf16 %v757, 1056980736
      %v770 = vtanh.bf16.pop %v766
      %v771 = vtanh.bf16.pop %v767
      %v772 = vadd.bf16 %v770, 1065369472
      %v773 = vadd.bf16 %v771, 1065369472
      %v774 = vmul.bf16 %v768, %v772
      %v775 = vmul.bf16 %v769, %v773
      %v776 = vlaneseq
      %v777 = vshrl.u32 %v776, 7
      %v778 = vsub.s32 4, %v777
      %v779 = vrot.slane %v431, %v778
      %v788 = vunpack.c.l.b16 %v435
      %v789 = vunpack.c.l.b16 %v436
      %v790 = vunpack.c.l.b16 %v437
      %v791 = vunpack.c.l.b16 %v438
      %v792 = vunpack.c.l.b16 %v439
      %v793 = vunpack.c.l.b16 %v440
      %v794 = vunpack.c.l.b16 %v441
      %v795 = vunpack.c.l.b16 %v442
      %v796 = vpack.c.b16 %v789, %v788
      %v797 = vpack.c.b16 %v791, %v790
      %v798 = vpack.c.b16 %v793, %v792
      %v799 = vpack.c.b16 %v795, %v794
      %vm804 = vcmask 523264
      %v806 = vsel %vm804, %v774, 0
      %v809 = vsel %vm804, %v775, 0
      %811 = vmatprep.subr.bf16.mxu0 0
      %812 = vmatpush1.bf16.msra.mxu0 0
      %813 = vmatprep.subr.bf16.mxu0 0
      %814 = vmatpush1.bf16.msra.mxu0 0
      %815 = vmatprep.subr.bf16.mxu0 0
      %816 = vmatpush1.bf16.msra.mxu0 0
      %817 = vmatprep.subr.bf16.mxu0 0
      %818 = vmatpush1.bf16.msra.mxu0 0
      %819 = vmatprep.subr.bf16.mxu0 0
      %820 = vmatpush1.bf16.msra.mxu0 %v799
      %821 = vmatprep.subr.bf16.mxu0 0
      %822 = vmatpush1.bf16.msra.mxu0 %v798
      %823 = vmatprep.subr.bf16.mxu0 0
      %824 = vmatpush1.bf16.msra.mxu0 %v797
      %825 = vmatprep.subr.bf16.mxu0 0
      %826 = vmatpush1.bf16.msra.mxu0 %v796
      %827 = vmatprep.subr.bf16.mxu0 0
      %828 = vmatpush2.bf16.msra.mxu0 0
      %829 = vmatprep.subr.bf16.mxu0 0
      %830 = vmatpush2.bf16.msra.mxu0 0
      %831 = vmatprep.subr.bf16.mxu0 0
      %832 = vmatpush2.bf16.msra.mxu0 0
      %833 = vmatprep.subr.bf16.mxu0 0
      %834 = vmatpush2.bf16.msra.mxu0 0
      %835 = vmatprep.subr.bf16.mxu0 0
      %836 = vmatpush2.bf16.msra.mxu0 0
      %837 = vmatprep.subr.bf16.mxu0 0
      %838 = vmatpush2.bf16.msra.mxu0 0
      %839 = vmatprep.subr.bf16.mxu0 0
      %840 = vmatpush2.bf16.msra.mxu0 0
      %841 = vmatprep.subr.bf16.mxu0 0
      %842 = vmatpush2.bf16.msra.mxu0 0
      %843 = vmatprep.mubr.bf16.mxu0 0
      %844 = vmatmul.mubr.bf16.gmra.mxu0 %v806
      %v845 = vpop.f32.mrf.mxu0
      %v846 = vadd.f32 %v779, %v845
      %v847 = vpop.f32.mrf.mxu0
      %v848 = vpop.f32.mrf.mxu0
      %v849 = vadd.f32 %v779, %v848
      %v850 = vpop.f32.mrf.mxu0
      %851 = vmatprep.mubr.bf16.mxu0 0
      %852 = vmatmul.mubr.bf16.gmra.mxu0 %v809
      %v853 = vpop.f32.mrf.mxu0
      %v854 = vadd.f32 %v779, %v853
      %v855 = vpop.f32.mrf.mxu0
      %v856 = vpop.f32.mrf.mxu0
      %v857 = vadd.f32 %v779, %v856
      %v858 = vpop.f32.mrf.mxu0
      %859 = vdwg.mxu0
      %v860 = vadd.f32 %v846, %v615
      %v861 = vadd.f32 %v849, %v616
      %v862 = vadd.f32 %v854, %v617
      %v863 = vadd.f32 %v857, %v618
      %864 = vst.msk [vmem:[%s403] sm:$0xff] %vm443, %v860
      %865 = vst.msk [vmem:[%s403 + $0x8] sm:$0xff] %vm443, %v861
      %866 = vst.msk [vmem:[%s403 + $0x10] sm:$0xff] %vm443, %v862
      %867 = vst.msk [vmem:[%s403 + $0x18] sm:$0xff] %vm443, %v863
      %s868 = smul.u32 4, %s22
      %p869 = scmp.lt.s32.totalorder %s868, 3
      %s870 = scalar_select %p869, %s868, 3
      %s871 = smul.addr %s870, 8
      %s872 = scalar_lea.vmem %s7, %s871
      // Predicated region
      $region53: #{autoencoding_mixer_forward.3} parent=47 // pred_check
        %p873 = pneg %p230
      $region54: #{autoencoding_mixer_forward.3} parent=47 // pred_check_branch
        %875 = sbr.rel (%p873) target = $region56
      $region55: #{autoencoding_mixer_forward.3} parent=47 // pred_region
        %s876 = smul.u32 4, %s22
      $region56: #{autoencoding_mixer_forward.3} parent=47 // pred_fallthru
        _
      // Predicated region
      $region57: #{autoencoding_mixer_forward.3} parent=47 // pred_check
        %p877 = pneg %p230
      $region58: #{autoencoding_mixer_forward.3} parent=47 // pred_check_branch
        %879 = sbr.rel (%p877) target = $region60
      $region59: #{autoencoding_mixer_forward.3} parent=47 // pred_region
        %s880 = smul.u32 4, %s22
        %p881 = scmp.lt.s32.totalorder %s880, 3
        %s882 = scalar_select %p881, %s880, 3
        %s883 = smul.addr %s882, 8
        %s884 = scalar_lea.vmem %s7, %s883
      $region60: #{autoencoding_mixer_forward.3} parent=47 // pred_fallthru
        _
    $region48: #{autoencoding_mixer_forward.3} parent=5 // pred_fallthru
      _
    %p885 = scmp.le.s32.totalorder 2, %s13
    // Predicated region
    $region61: #{autoencoding_mixer_forward.3} parent=5 // pred_check
      %p886 = pneg %p885
    $region62: #{autoencoding_mixer_forward.3} parent=5 // pred_check_branch
      %888 = sbr.rel (%p886) target = $region64
    $region63: #{autoencoding_mixer_forward.3} parent=5 // pred_region
      %s889 = ssub.s32 %s13, 2
    $region64: #{autoencoding_mixer_forward.3} parent=5 // pred_fallthru
      _
  $region6: #{autoencoding_mixer_forward.3} parent=0 // loop_footer
    %s17 = sadd.s32 1, %s13
  $region7: #{autoencoding_mixer_forward.3} parent=0 // loop_footer_branch
    %12 = sbr.rel target = $region3
  $region8: #{autoencoding_mixer_forward.3} parent=0 // loop_exit
    _

// kernel: autoencoding_mixer_forward.4
$region0: #{autoencoding_mixer_forward.4}
  #allocation0 [shape = 'u32[]', space=smem, size = 0x4, offset = 0x4, fixed_abs, tag = 'smem constant byte address 0x4 - core index']
  #allocation1 [shape = 'u32[144,128]{1,0:T(1,128)}', space=vmem, size = 0x12000, scoped, tag = 'internal scratch']
  %s0 = inlined_call_operand.vmem [shape: f32[32,8], index: 0, kind: input, shape index: {}]
  %s1 = inlined_call_operand.vmem [shape: bf16[8,16], index: 1, kind: input, shape index: {}]
  %s2 = inlined_call_operand.vmem [shape: f32[1,16], index: 2, kind: input, shape index: {}]
  %s3 = inlined_call_operand.vmem [shape: bf16[2,16,16], index: 3, kind: input, shape index: {}]
  %s4 = inlined_call_operand.vmem [shape: f32[2,16,1], index: 4, kind: input, shape index: {}]
  %s5 = inlined_call_operand.vmem [shape: f32[2,5,16], index: 5, kind: input, shape index: {}]
  %s6 = inlined_call_operand.vmem [shape: bf16[2,16,64], index: 6, kind: input, shape index: {}]
  %s7 = inlined_call_operand.vmem [shape: f32[2,1,64], index: 7, kind: input, shape index: {}]
  %s8 = inlined_call_operand.vmem [shape: bf16[2,64,16], index: 8, kind: input, shape index: {}]
  %s9 = inlined_call_operand.vmem [shape: f32[32,16], index: 9, kind: output, shape index: {}]
  %s10 = sld [smem:[#allocation0]]
  $region73: #{autoencoding_mixer_forward.4} parent=0
    _
  %s12 = ssub.s32 1, %s10
  %s13 = scalar_select 0, %s12, %s10
  loop: start=0, step=1, limit=4
  $region2: #{autoencoding_mixer_forward.4} parent=0 // loop_pre_header
    _
  $region3: #{autoencoding_mixer_forward.4} parent=0 // loop_header
    %s15 = sphi 0, %s19
    %p16 = scmp.ge.s32.totalorder %s15, 4
    %s22 = sphi 0, %s34
    %s23 = sphi 0, %s30
    %s24 = sphi 0, %s22
    %s25 = sphi 0, %s23
    %s26 = sphi 0, %s24
    %s27 = sphi 0, %s25
    %s37 = sphi 0, %s39
    %s40 = sphi 0, %s37
    %s41 = sphi 0, %s40
    %s57 = sphi 0, %s41
    %s61 = sphi 0, %s61
    %s63 = sphi 0, %s61
    %s64 = sphi 0, %s63
    %s78 = sphi 0, %s64
    %s82 = sphi 0, %s82
    %s84 = sphi 0, %s82
    %s85 = sphi 0, %s84
    %s99 = sphi 0, %s85
    %s105 = sphi 0, %s107
    %s108 = sphi 0, %s105
    %s109 = sphi 0, %s108
    %s125 = sphi 0, %s109
    %s131 = sphi 0, %s133
    %s134 = sphi 0, %s131
    %s135 = sphi 0, %s134
    %s151 = sphi 0, %s135
    %s157 = sphi 0, %s159
    %s160 = sphi 0, %s157
    %s161 = sphi 0, %s160
    %s177 = sphi 0, %s161
    %s183 = sphi 0, %s185
    %s186 = sphi 0, %s183
    %s187 = sphi 0, %s186
    %s203 = sphi 0, %s187
    %s209 = sphi 0, %s211
    %s212 = sphi 0, %s209
    %s213 = sphi 0, %s212
    %s229 = sphi 0, %s213
    %s235 = sphi 0, %s237
    %s238 = sphi 0, %s235
    %s239 = sphi 0, %s238
    %s255 = sphi 0, %s239
    %s261 = sphi 0, %s263
    %s264 = sphi 0, %s261
    %s265 = sphi 0, %s264
    %s281 = sphi 0, %s265
  $region4: #{autoencoding_mixer_forward.4} parent=0 // loop_header_branch
    %18 = sbr.rel (%p16) target = $region8
  $region5: #{autoencoding_mixer_forward.4} parent=0 // loop_body
    %s20 = ssub.s32 %s15, 1
    %s21 = ssub.s32 %s15, 2
    %s28 = sadd.s32 1, %s23
    %p29 = scmp.ge.s32.totalorder %s28, 2
    %s30 = scalar_select %p29, 0, %s28
    %s31 = sadd.s32 1, %s22
    %s32 = scalar_select %p29, %s31, %s22
    %p33 = scmp.ge.s32.totalorder %s32, 1
    %s34 = scalar_select %p33, 0, %s32
    %s35 = ssub.s32 %s22, %s34
    %p36 = scmp.eq.s32.totalorder %s35, 0
    %s38 = sadd.s32 %s37, 1
    %s39 = scalar_select %p36, %s37, %s38
    %p42 = pneg %p36
    %p43 = scmp.eq.s32.totalorder %s15, 1
    %p44 = por %p42, %p43
    %p45 = scmp.ne.s32.totalorder %s37, %s40
    %p46 = scmp.eq.s32.totalorder %s15, 0
    %p47 = por %p45, %p46
    %p48 = scmp.ne.s32.totalorder %s37, %s40
    %p49 = scmp.eq.s32.totalorder %s20, 1
    %p50 = por %p48, %p49
    %p51 = scmp.ne.s32.totalorder %s40, %s41
    %p52 = scmp.eq.s32.totalorder %s20, 0
    %p53 = por %p51, %p52
    %p54 = scmp.ne.s32.totalorder %s40, %s41
    %p55 = scmp.eq.s32.totalorder %s21, 1
    %p56 = por %p54, %p55
    %p58 = scmp.ne.s32.totalorder %s41, %s57
    %p59 = scmp.eq.s32.totalorder %s21, 0
    %p60 = por %p58, %p59
    %s62 = sadd.s32 %s61, 1
    %p65 = scmp.eq.s32.totalorder %s15, 1
    %p66 = scmp.ne.s32.totalorder %s61, %s63
    %p67 = scmp.eq.s32.totalorder %s15, 0
    %p68 = por %p66, %p67
    %p69 = scmp.ne.s32.totalorder %s61, %s63
    %p70 = scmp.eq.s32.totalorder %s20, 1
    %p71 = por %p69, %p70
    %p72 = scmp.ne.s32.totalorder %s63, %s64
    %p73 = scmp.eq.s32.totalorder %s20, 0
    %p74 = por %p72, %p73
    %p75 = scmp.ne.s32.totalorder %s63, %s64
    %p76 = scmp.eq.s32.totalorder %s21, 1
    %p77 = por %p75, %p76
    %p79 = scmp.ne.s32.totalorder %s64, %s78
    %p80 = scmp.eq.s32.totalorder %s21, 0
    %p81 = por %p79, %p80
    %s83 = sadd.s32 %s82, 1
    %p86 = scmp.eq.s32.totalorder %s15, 1
    %p87 = scmp.ne.s32.totalorder %s82, %s84
    %p88 = scmp.eq.s32.totalorder %s15, 0
    %p89 = por %p87, %p88
    %p90 = scmp.ne.s32.totalorder %s82, %s84
    %p91 = scmp.eq.s32.totalorder %s20, 1
    %p92 = por %p90, %p91
    %p93 = scmp.ne.s32.totalorder %s84, %s85
    %p94 = scmp.eq.s32.totalorder %s20, 0
    %p95 = por %p93, %p94
    %p96 = scmp.ne.s32.totalorder %s84, %s85
    %p97 = scmp.eq.s32.totalorder %s21, 1
    %p98 = por %p96, %p97
    %p100 = scmp.ne.s32.totalorder %s85, %s99
    %p101 = scmp.eq.s32.totalorder %s21, 0
    %p102 = por %p100, %p101
    %s103 = ssub.s32 %s23, %s30
    %p104 = scmp.eq.s32.totalorder %s103, 0
    %s106 = sadd.s32 %s105, 1
    %s107 = scalar_select %p104, %s105, %s106
    %p110 = pneg %p104
    %p111 = scmp.eq.s32.totalorder %s15, 1
    %p112 = por %p110, %p111
    %p113 = scmp.ne.s32.totalorder %s105, %s108
    %p114 = scmp.eq.s32.totalorder %s15, 0
    %p115 = por %p113, %p114
    %p116 = scmp.ne.s32.totalorder %s105, %s108
    %p117 = scmp.eq.s32.totalorder %s20, 1
    %p118 = por %p116, %p117
    %p119 = scmp.ne.s32.totalorder %s108, %s109
    %p120 = scmp.eq.s32.totalorder %s20, 0
    %p121 = por %p119, %p120
    %p122 = scmp.ne.s32.totalorder %s108, %s109
    %p123 = scmp.eq.s32.totalorder %s21, 1
    %p124 = por %p122, %p123
    %p126 = scmp.ne.s32.totalorder %s109, %s125
    %p127 = scmp.eq.s32.totalorder %s21, 0
    %p128 = por %p126, %p127
    %s129 = ssub.s32 %s23, %s30
    %p130 = scmp.eq.s32.totalorder %s129, 0
    %s132 = sadd.s32 %s131, 1
    %s133 = scalar_select %p130, %s131, %s132
    %p136 = pneg %p130
    %p137 = scmp.eq.s32.totalorder %s15, 1
    %p138 = por %p136, %p137
    %p139 = scmp.ne.s32.totalorder %s131, %s134
    %p140 = scmp.eq.s32.totalorder %s15, 0
    %p141 = por %p139, %p140
    %p142 = scmp.ne.s32.totalorder %s131, %s134
    %p143 = scmp.eq.s32.totalorder %s20, 1
    %p144 = por %p142, %p143
    %p145 = scmp.ne.s32.totalorder %s134, %s135
    %p146 = scmp.eq.s32.totalorder %s20, 0
    %p147 = por %p145, %p146
    %p148 = scmp.ne.s32.totalorder %s134, %s135
    %p149 = scmp.eq.s32.totalorder %s21, 1
    %p150 = por %p148, %p149
    %p152 = scmp.ne.s32.totalorder %s135, %s151
    %p153 = scmp.eq.s32.totalorder %s21, 0
    %p154 = por %p152, %p153
    %s155 = ssub.s32 %s23, %s30
    %p156 = scmp.eq.s32.totalorder %s155, 0
    %s158 = sadd.s32 %s157, 1
    %s159 = scalar_select %p156, %s157, %s158
    %p162 = pneg %p156
    %p163 = scmp.eq.s32.totalorder %s15, 1
    %p164 = por %p162, %p163
    %p165 = scmp.ne.s32.totalorder %s157, %s160
    %p166 = scmp.eq.s32.totalorder %s15, 0
    %p167 = por %p165, %p166
    %p168 = scmp.ne.s32.totalorder %s157, %s160
    %p169 = scmp.eq.s32.totalorder %s20, 1
    %p170 = por %p168, %p169
    %p171 = scmp.ne.s32.totalorder %s160, %s161
    %p172 = scmp.eq.s32.totalorder %s20, 0
    %p173 = por %p171, %p172
    %p174 = scmp.ne.s32.totalorder %s160, %s161
    %p175 = scmp.eq.s32.totalorder %s21, 1
    %p176 = por %p174, %p175
    %p178 = scmp.ne.s32.totalorder %s161, %s177
    %p179 = scmp.eq.s32.totalorder %s21, 0
    %p180 = por %p178, %p179
    %s181 = ssub.s32 %s23, %s30
    %p182 = scmp.eq.s32.totalorder %s181, 0
    %s184 = sadd.s32 %s183, 1
    %s185 = scalar_select %p182, %s183, %s184
    %p188 = pneg %p182
    %p189 = scmp.eq.s32.totalorder %s15, 1
    %p190 = por %p188, %p189
    %p191 = scmp.ne.s32.totalorder %s183, %s186
    %p192 = scmp.eq.s32.totalorder %s15, 0
    %p193 = por %p191, %p192
    %p194 = scmp.ne.s32.totalorder %s183, %s186
    %p195 = scmp.eq.s32.totalorder %s20, 1
    %p196 = por %p194, %p195
    %p197 = scmp.ne.s32.totalorder %s186, %s187
    %p198 = scmp.eq.s32.totalorder %s20, 0
    %p199 = por %p197, %p198
    %p200 = scmp.ne.s32.totalorder %s186, %s187
    %p201 = scmp.eq.s32.totalorder %s21, 1
    %p202 = por %p200, %p201
    %p204 = scmp.ne.s32.totalorder %s187, %s203
    %p205 = scmp.eq.s32.totalorder %s21, 0
    %p206 = por %p204, %p205
    %s207 = ssub.s32 %s23, %s30
    %p208 = scmp.eq.s32.totalorder %s207, 0
    %s210 = sadd.s32 %s209, 1
    %s211 = scalar_select %p208, %s209, %s210
    %p214 = pneg %p208
    %p215 = scmp.eq.s32.totalorder %s15, 1
    %p216 = por %p214, %p215
    %p217 = scmp.ne.s32.totalorder %s209, %s212
    %p218 = scmp.eq.s32.totalorder %s15, 0
    %p219 = por %p217, %p218
    %p220 = scmp.ne.s32.totalorder %s209, %s212
    %p221 = scmp.eq.s32.totalorder %s20, 1
    %p222 = por %p220, %p221
    %p223 = scmp.ne.s32.totalorder %s212, %s213
    %p224 = scmp.eq.s32.totalorder %s20, 0
    %p225 = por %p223, %p224
    %p226 = scmp.ne.s32.totalorder %s212, %s213
    %p227 = scmp.eq.s32.totalorder %s21, 1
    %p228 = por %p226, %p227
    %p230 = scmp.ne.s32.totalorder %s213, %s229
    %p231 = scmp.eq.s32.totalorder %s21, 0
    %p232 = por %p230, %p231
    %s233 = ssub.s32 %s23, %s30
    %p234 = scmp.eq.s32.totalorder %s233, 0
    %s236 = sadd.s32 %s235, 1
    %s237 = scalar_select %p234, %s235, %s236
    %p240 = pneg %p234
    %p241 = scmp.eq.s32.totalorder %s15, 1
    %p242 = por %p240, %p241
    %p243 = scmp.ne.s32.totalorder %s235, %s238
    %p244 = scmp.eq.s32.totalorder %s15, 0
    %p245 = por %p243, %p244
    %p246 = scmp.ne.s32.totalorder %s235, %s238
    %p247 = scmp.eq.s32.totalorder %s20, 1
    %p248 = por %p246, %p247
    %p249 = scmp.ne.s32.totalorder %s238, %s239
    %p250 = scmp.eq.s32.totalorder %s20, 0
    %p251 = por %p249, %p250
    %p252 = scmp.ne.s32.totalorder %s238, %s239
    %p253 = scmp.eq.s32.totalorder %s21, 1
    %p254 = por %p252, %p253
    %p256 = scmp.ne.s32.totalorder %s239, %s255
    %p257 = scmp.eq.s32.totalorder %s21, 0
    %p258 = por %p256, %p257
    %s259 = ssub.s32 %s22, %s34
    %p260 = scmp.eq.s32.totalorder %s259, 0
    %s262 = sadd.s32 %s261, 1
    %s263 = scalar_select %p260, %s261, %s262
    %p266 = pneg %p260
    %p267 = scmp.eq.s32.totalorder %s15, 1
    %p268 = por %p266, %p267
    %p269 = scmp.ne.s32.totalorder %s261, %s264
    %p270 = scmp.eq.s32.totalorder %s15, 0
    %p271 = por %p269, %p270
    %p272 = scmp.ne.s32.totalorder %s261, %s264
    %p273 = scmp.eq.s32.totalorder %s20, 1
    %p274 = por %p272, %p273
    %p275 = scmp.ne.s32.totalorder %s264, %s265
    %p276 = scmp.eq.s32.totalorder %s20, 0
    %p277 = por %p275, %p276
    %p278 = scmp.ne.s32.totalorder %s264, %s265
    %p279 = scmp.eq.s32.totalorder %s21, 1
    %p280 = por %p278, %p279
    %p282 = scmp.ne.s32.totalorder %s265, %s281
    %p283 = scmp.eq.s32.totalorder %s21, 0
    %p284 = por %p282, %p283
    %p285 = scmp.le.s32.totalorder 1, %s15
    %p286 = scmp.lt.s32.totalorder %s15, 3
    %p287 = pnand %p285, %p286
    %p288 = pneg %p287
    // Predicated region
    $region9: #{autoencoding_mixer_forward.4} parent=5 // pred_check
      _
    $region10: #{autoencoding_mixer_forward.4} parent=5 // pred_check_branch
      %290 = sbr.rel (%p287) target = $region12
    $region11: #{autoencoding_mixer_forward.4} parent=5 // pred_region
      %s291 = ssub.s32 %s15, 1
      // Predicated region
      $region13: #{autoencoding_mixer_forward.4} parent=11 // pred_check
        %p292 = pneg %p53
      $region14: #{autoencoding_mixer_forward.4} parent=11 // pred_check_branch
        %294 = sbr.rel (%p292) target = $region16
      $region15: #{autoencoding_mixer_forward.4} parent=11 // pred_region
        %s295 = smul.u32 4, %s24
        %p296 = scmp.lt.s32.totalorder %s295, 3
        %s297 = scalar_select %p296, %s295, 3
        %s298 = smul.addr %s297, 8
        %s299 = scalar_lea.vmem %s0, %s298
        %s300 = smul.u32 4, %s24
      $region16: #{autoencoding_mixer_forward.4} parent=11 // pred_fallthru
        _
      // Predicated region
      $region17: #{autoencoding_mixer_forward.4} parent=11 // pred_check
        %p301 = pneg %p74
      $region18: #{autoencoding_mixer_forward.4} parent=11 // pred_check_branch
        %303 = sbr.rel (%p301) target = $region20
      $region19: #{autoencoding_mixer_forward.4} parent=11 // pred_region
        _
      $region20: #{autoencoding_mixer_forward.4} parent=11 // pred_fallthru
        _
      // Predicated region
      $region21: #{autoencoding_mixer_forward.4} parent=11 // pred_check
        %p304 = pneg %p95
      $region22: #{autoencoding_mixer_forward.4} parent=11 // pred_check_branch
        %306 = sbr.rel (%p304) target = $region24
      $region23: #{autoencoding_mixer_forward.4} parent=11 // pred_region
        _
      $region24: #{autoencoding_mixer_forward.4} parent=11 // pred_fallthru
        _
    $region12: #{autoencoding_mixer_forward.4} parent=5 // pred_fallthru
      _
    %p307 = scmp.lt.s32.totalorder %s15, 2
    // Predicated region
    $region25: #{autoencoding_mixer_forward.4} parent=5 // pred_check
      %p308 = pneg %p307
    $region26: #{autoencoding_mixer_forward.4} parent=5 // pred_check_branch
      %310 = sbr.rel (%p308) target = $region28
    $region27: #{autoencoding_mixer_forward.4} parent=5 // pred_region
      // Predicated region
      $region29: #{autoencoding_mixer_forward.4} parent=27 // pred_check
        %p311 = pneg %p115
      $region30: #{autoencoding_mixer_forward.4} parent=27 // pred_check_branch
        %313 = sbr.rel (%p311) target = $region32
      $region31: #{autoencoding_mixer_forward.4} parent=27 // pred_region
        %p314 = scmp.lt.s32.totalorder %s23, 1
        %s315 = scalar_select %p314, %s23, 1
        %s316 = smul.addr %s315, 2
        %s317 = smul.addr %s316, 4
        %s318 = scalar_lea.vmem %s3, %s317
      $region32: #{autoencoding_mixer_forward.4} parent=27 // pred_fallthru
        _
      // Predicated region
      $region33: #{autoencoding_mixer_forward.4} parent=27 // pred_check
        %p319 = pneg %p141
      $region34: #{autoencoding_mixer_forward.4} parent=27 // pred_check_branch
        %321 = sbr.rel (%p319) target = $region36
      $region35: #{autoencoding_mixer_forward.4} parent=27 // pred_region
        %p322 = scmp.lt.s32.totalorder %s23, 1
        %s323 = scalar_select %p322, %s23, 1
        %s324 = smul.addr %s323, 2
        %s325 = smul.addr %s324, 8
        %s326 = scalar_lea.vmem %s4, %s325
      $region36: #{autoencoding_mixer_forward.4} parent=27 // pred_fallthru
        _
      // Predicated region
      $region37: #{autoencoding_mixer_forward.4} parent=27 // pred_check
        %p327 = pneg %p167
      $region38: #{autoencoding_mixer_forward.4} parent=27 // pred_check_branch
        %329 = sbr.rel (%p327) target = $region40
      $region39: #{autoencoding_mixer_forward.4} parent=27 // pred_region
        %p330 = scmp.lt.s32.totalorder %s23, 1
        %s331 = scalar_select %p330, %s23, 1
        %s332 = smul.addr %s331, 8
        %s333 = scalar_lea.vmem %s5, %s332
      $region40: #{autoencoding_mixer_forward.4} parent=27 // pred_fallthru
        _
      // Predicated region
      $region41: #{autoencoding_mixer_forward.4} parent=27 // pred_check
        %p334 = pneg %p193
      $region42: #{autoencoding_mixer_forward.4} parent=27 // pred_check_branch
        %336 = sbr.rel (%p334) target = $region44
      $region43: #{autoencoding_mixer_forward.4} parent=27 // pred_region
        %p337 = scmp.lt.s32.totalorder %s23, 1
        %s338 = scalar_select %p337, %s23, 1
        %s339 = smul.addr %s338, 2
        %s340 = smul.addr %s339, 4
        %s341 = scalar_lea.vmem %s6, %s340
      $region44: #{autoencoding_mixer_forward.4} parent=27 // pred_fallthru
        _
      // Predicated region
      $region45: #{autoencoding_mixer_forward.4} parent=27 // pred_check
        %p342 = pneg %p219
      $region46: #{autoencoding_mixer_forward.4} parent=27 // pred_check_branch
        %344 = sbr.rel (%p342) target = $region48
      $region47: #{autoencoding_mixer_forward.4} parent=27 // pred_region
        %p345 = scmp.lt.s32.totalorder %s23, 1
        %s346 = scalar_select %p345, %s23, 1
        %s347 = scalar_lea.vmem %s7, %s346
      $region48: #{autoencoding_mixer_forward.4} parent=27 // pred_fallthru
        _
      // Predicated region
      $region49: #{autoencoding_mixer_forward.4} parent=27 // pred_check
        %p348 = pneg %p245
      $region50: #{autoencoding_mixer_forward.4} parent=27 // pred_check_branch
        %350 = sbr.rel (%p348) target = $region52
      $region51: #{autoencoding_mixer_forward.4} parent=27 // pred_region
        %p351 = scmp.lt.s32.totalorder %s23, 1
        %s352 = scalar_select %p351, %s23, 1
        %s353 = smul.addr %s352, 8
        %s354 = smul.addr %s353, 4
        %s355 = scalar_lea.vmem %s8, %s354
      $region52: #{autoencoding_mixer_forward.4} parent=27 // pred_fallthru
        _
    $region28: #{autoencoding_mixer_forward.4} parent=5 // pred_fallthru
      _
    %p356 = scmp.le.s32.totalorder 1, %s15
    %p357 = scmp.lt.s32.totalorder %s15, 3
    %p358 = pnand %p356, %p357
    %p359 = pneg %p358
    // Predicated region
    $region53: #{autoencoding_mixer_forward.4} parent=5 // pred_check
      _
    $region54: #{autoencoding_mixer_forward.4} parent=5 // pred_check_branch
      %361 = sbr.rel (%p358) target = $region56
    $region55: #{autoencoding_mixer_forward.4} parent=5 // pred_region
      %s362 = ssub.s32 %s15, 1
      %s363 = smul.u32 4, %s24
      %p364 = scmp.lt.s32.totalorder %s363, 3
      %s365 = scalar_select %p364, %s363, 3
      %s366 = smul.addr %s365, 8
      %s367 = scalar_lea.vmem %s0, %s366
      %p368 = pneg %p53
      %p369 = pneg %p50
      %p370 = pneg %p74
      %p371 = pneg %p71
      %p372 = pneg %p95
      %p373 = pneg %p92
      %p374 = scmp.lt.s32.totalorder %s25, 1
      %s375 = scalar_select %p374, %s25, 1
      %s376 = smul.addr %s375, 2
      %s377 = smul.addr %s376, 4
      %s378 = scalar_lea.vmem %s3, %s377
      %p379 = pneg %p121
      %p380 = pneg %p118
      %p381 = scmp.lt.s32.totalorder %s25, 1
      %s382 = scalar_select %p381, %s25, 1
      %s383 = smul.addr %s382, 2
      %s384 = smul.addr %s383, 8
      %s385 = scalar_lea.vmem %s4, %s384
      %p386 = pneg %p147
      %p387 = pneg %p144
      %p388 = scmp.lt.s32.totalorder %s25, 1
      %s389 = scalar_select %p388, %s25, 1
      %s390 = smul.addr %s389, 8
      %s391 = scalar_lea.vmem %s5, %s390
      %p392 = pneg %p173
      %p393 = pneg %p170
      %p394 = scmp.lt.s32.totalorder %s25, 1
      %s395 = scalar_select %p394, %s25, 1
      %s396 = smul.addr %s395, 2
      %s397 = smul.addr %s396, 4
      %s398 = scalar_lea.vmem %s6, %s397
      %p399 = pneg %p199
      %p400 = pneg %p196
      %p401 = scmp.lt.s32.totalorder %s25, 1
      %s402 = scalar_select %p401, %s25, 1
      %s403 = scalar_lea.vmem %s7, %s402
      %p404 = pneg %p225
      %p405 = pneg %p222
      %p406 = scmp.lt.s32.totalorder %s25, 1
      %s407 = scalar_select %p406, %s25, 1
      %s408 = smul.addr %s407, 8
      %s409 = smul.addr %s408, 4
      %s410 = scalar_lea.vmem %s8, %s409
      %p411 = pneg %p251
      %p412 = pneg %p248
      %p413 = pneg %p277
      %p414 = pneg %p274
      %s415 = smul.u32 4, %s24
      %p416 = scmp.lt.s32.totalorder %s415, 3
      %s417 = scalar_select %p416, %s415, 3
      %s418 = smul.addr %s417, 8
      %s419 = scalar_lea.vmem %s9, %s418
      %s420 = smul.u32 4, %s24
      %p421 = scmp.lt.s32.totalorder %s420, 3
      %s422 = scalar_select %p421, %s420, 3
      %s423 = smul.addr %s422, 8
      %s424 = scalar_lea.vmem %s0, %s423
      %s425 = smul.u32 4, %s24
      %p426 = scmp.lt.s32.totalorder %s25, 1
      %s427 = scalar_select %p426, %s25, 1
      %s428 = smul.addr %s427, 2
      %s429 = smul.addr %s428, 4
      %s430 = scalar_lea.vmem %s3, %s429
      %p431 = scmp.lt.s32.totalorder %s25, 1
      %s432 = scalar_select %p431, %s25, 1
      %s433 = smul.addr %s432, 2
      %s434 = smul.addr %s433, 8
      %s435 = scalar_lea.vmem %s4, %s434
      %p436 = scmp.lt.s32.totalorder %s25, 1
      %s437 = scalar_select %p436, %s25, 1
      %s438 = smul.addr %s437, 8
      %s439 = scalar_lea.vmem %s5, %s438
      %p440 = scmp.lt.s32.totalorder %s25, 1
      %s441 = scalar_select %p440, %s25, 1
      %s442 = smul.addr %s441, 2
      %s443 = smul.addr %s442, 4
      %s444 = scalar_lea.vmem %s6, %s443
      %p445 = scmp.lt.s32.totalorder %s25, 1
      %s446 = scalar_select %p445, %s25, 1
      %s447 = scalar_lea.vmem %s7, %s446
      %p448 = scmp.lt.s32.totalorder %s25, 1
      %s449 = scalar_select %p448, %s25, 1
      %s450 = smul.addr %s449, 8
      %s451 = smul.addr %s450, 4
      %s452 = scalar_lea.vmem %s8, %s451
      %s453 = smul.u32 4, %s24
      %p454 = scmp.lt.s32.totalorder %s453, 3
      %s455 = scalar_select %p454, %s453, 3
      %s456 = smul.addr %s455, 8
      %s457 = scalar_lea.vmem %s9, %s456
      %s458 = smul.u32 4, %s24
      %p464 = scmp.eq.s32.totalorder %s25, 0
      // Predicated region
      $region57: #{autoencoding_mixer_forward.4} parent=55 // pred_check
        %p465 = pneg %p464
      $region58: #{autoencoding_mixer_forward.4} parent=55 // pred_check_branch
        %467 = sbr.rel (%p465) target = $region60
      $region59: #{autoencoding_mixer_forward.4} parent=55 // pred_region
        %v468 = vld [vmem:[%s424] sm:$0xff]
        %v469 = vld [vmem:[%s424 + $0x8] sm:$0xff]
        %v470 = vld [vmem:[%s424 + $0x10] sm:$0xff]
        %v471 = vld [vmem:[%s424 + $0x18] sm:$0xff]
        %v472 = vpack.c.bf16 %v469, %v468
        %v473 = vpack.c.bf16 %v471, %v470
        %v474 = vld [vmem:[%s1] sm:$0xf]
        %v475 = vld [vmem:[%s2] sm:$0x1]
        %v477 = vlaneseq
        %v478 = vshrl.u32 %v477, 7
        %v479 = vsub.s32 0, %v478
        %v480 = vrot.slane %v475, %v479
        %vm482 = vcmask 64512
        %v484 = vsel %vm482, %v472, 0
        %v487 = vsel %vm482, %v473, 0
        %vm489 = vcmask 1043456
        %v491 = vsel %vm489, %v474, 0
        %493 = vmatprep.subr.bf16.mxu0 0
        %494 = vmatpush1.bf16.msra.mxu0 0
        %495 = vmatprep.subr.bf16.mxu0 0
        %496 = vmatpush1.bf16.msra.mxu0 0
        %497 = vmatprep.subr.bf16.mxu0 0
        %498 = vmatpush1.bf16.msra.mxu0 0
        %499 = vmatprep.subr.bf16.mxu0 0
        %500 = vmatpush1.bf16.msra.mxu0 0
        %501 = vmatprep.subr.bf16.mxu0 0
        %502 = vmatpush1.bf16.msra.mxu0 0
        %503 = vmatprep.subr.bf16.mxu0 0
        %504 = vmatpush1.bf16.msra.mxu0 0
        %505 = vmatprep.subr.bf16.mxu0 0
        %506 = vmatpush1.bf16.msra.mxu0 0
        %507 = vmatprep.subr.bf16.mxu0 0
        %508 = vmatpush1.bf16.msra.mxu0 %v491
        %509 = vmatprep.subr.bf16.mxu0 0
        %510 = vmatpush2.bf16.msra.mxu0 0
        %511 = vmatprep.subr.bf16.mxu0 0
        %512 = vmatpush2.bf16.msra.mxu0 0
        %513 = vmatprep.subr.bf16.mxu0 0
        %514 = vmatpush2.bf16.msra.mxu0 0
        %515 = vmatprep.subr.bf16.mxu0 0
        %516 = vmatpush2.bf16.msra.mxu0 0
        %517 = vmatprep.subr.bf16.mxu0 0
        %518 = vmatpush2.bf16.msra.mxu0 0
        %519 = vmatprep.subr.bf16.mxu0 0
        %520 = vmatpush2.bf16.msra.mxu0 0
        %521 = vmatprep.subr.bf16.mxu0 0
        %522 = vmatpush2.bf16.msra.mxu0 0
        %523 = vmatprep.subr.bf16.mxu0 0
        %524 = vmatpush2.bf16.msra.mxu0 0
        %525 = vmatprep.mubr.bf16.mxu0 0
        %526 = vmatmul.mubr.bf16.gmra.mxu0 %v484
        %v527 = vpop.f32.mrf.mxu0
        %v528 = vadd.f32 %v480, %v527
        %v529 = vpop.f32.mrf.mxu0
        %v530 = vpop.f32.mrf.mxu0
        %v531 = vadd.f32 %v480, %v530
        %v532 = vpop.f32.mrf.mxu0
        %533 = vmatprep.mubr.bf16.mxu0 0
        %534 = vmatmul.mubr.bf16.gmra.mxu0 %v487
        %v535 = vpop.f32.mrf.mxu0
        %v536 = vadd.f32 %v480, %v535
        %v537 = vpop.f32.mrf.mxu0
        %v538 = vpop.f32.mrf.mxu0
        %v539 = vadd.f32 %v480, %v538
        %v540 = vpop.f32.mrf.mxu0
        %541 = vdwg.mxu0
        %vm542 = vcmask 130048
        %543 = vst.msk [vmem:[%s457] sm:$0xff] %vm542, %v528
        %544 = vst.msk [vmem:[%s457 + $0x8] sm:$0xff] %vm542, %v531
        %545 = vst.msk [vmem:[%s457 + $0x10] sm:$0xff] %vm542, %v536
        %546 = vst.msk [vmem:[%s457 + $0x18] sm:$0xff] %vm542, %v539
      $region60: #{autoencoding_mixer_forward.4} parent=55 // pred_fallthru
        _
      %v547 = vld [vmem:[%s457] sm:$0xff]
      %v548 = vld [vmem:[%s457 + $0x8] sm:$0xff]
      %v549 = vld [vmem:[%s457 + $0x10] sm:$0xff]
      %v550 = vld [vmem:[%s457 + $0x18] sm:$0xff]
      %v551 = vld [vmem:[%s430] sm:$0xf]
      %v552 = vld [vmem:[%s430 + $0x4] sm:$0xf]
      %v553 = vld [vmem:[%s435] sm:$0xff]
      %v554 = vld [vmem:[%s435 + $0x8] sm:$0xff]
      %v555 = vld [vmem:[%s439] sm:$0x1f]
      %v556 = vld [vmem:[%s444] sm:$0xf]
      %v557 = vld [vmem:[%s444 + $0x4] sm:$0xf]
      %v558 = vld [vmem:[%s447] sm:$0x1]
      %v559 = vld [vmem:[%s452] sm:$0xf]
      %v560 = vld [vmem:[%s452 + $0x4] sm:$0xf]
      %v561 = vld [vmem:[%s452 + $0x8] sm:$0xf]
      %v562 = vld [vmem:[%s452 + $0xc] sm:$0xf]
      %v563 = vld [vmem:[%s452 + $0x10] sm:$0xf]
      %v564 = vld [vmem:[%s452 + $0x14] sm:$0xf]
      %v565 = vld [vmem:[%s452 + $0x18] sm:$0xf]
      %v566 = vld [vmem:[%s452 + $0x1c] sm:$0xf]
      %vm567 = vcmask 130048
      %v568 = vsel %vm567, %v547, 0.0
      %569 = vadd.xlane.f32.xlu0 %v568
      %v570 = vpop.xlane.xlu0 %569
      %v571 = vsel %vm567, %v548, 0.0
      %572 = vadd.xlane.f32.xlu0 %v571
      %v573 = vpop.xlane.xlu0 %572
      %v574 = vsel %vm567, %v549, 0.0
      %575 = vadd.xlane.f32.xlu0 %v574
      %v576 = vpop.xlane.xlu0 %575
      %v577 = vsel %vm567, %v550, 0.0
      %578 = vadd.xlane.f32.xlu0 %v577
      %v579 = vpop.xlane.xlu0 %578
      %v580 = vrcp.pop 16.0
      %v581 = vmul.f32 %v570, %v580
      %v582 = vmul.f32 %v573, %v580
      %v583 = vmul.f32 %v576, %v580
      %v584 = vmul.f32 %v579, %v580
      %v585 = vsub.f32 %v547, %v581
      %v586 = vsub.f32 %v548, %v582
      %v587 = vsub.f32 %v549, %v583
      %v588 = vsub.f32 %v550, %v584
      %v589 = vmul.f32 %v585, %v585
      %v590 = vmul.f32 %v586, %v586
      %v591 = vmul.f32 %v587, %v587
      %v592 = vmul.f32 %v588, %v588
      %v593 = vsel %vm567, %v589, 0.0
      %594 = vadd.xlane.f32.xlu0 %v593
      %v595 = vpop.xlane.xlu0 %594
      %v596 = vsel %vm567, %v590, 0.0
      %597 = vadd.xlane.f32.xlu0 %v596
      %v598 = vpop.xlane.xlu0 %597
      %v599 = vsel %vm567, %v591, 0.0
      %600 = vadd.xlane.f32.xlu0 %v599
      %v601 = vpop.xlane.xlu0 %600
      %v602 = vsel %vm567, %v592, 0.0
      %603 = vadd.xlane.f32.xlu0 %v602
      %v604 = vpop.xlane.xlu0 %603
      %v605 = vmul.f32 %v595, %v580
      %v606 = vmul.f32 %v598, %v580
      %v607 = vmul.f32 %v601, %v580
      %v608 = vmul.f32 %v604, %v580
      %v609 = vadd.f32 %v605, 1e-05
      %v610 = vadd.f32 %v606, 1e-05
      %v611 = vadd.f32 %v607, 1e-05
      %v612 = vadd.f32 %v608, 1e-05
      %v613 = vrsqrt.pop %v609
      %v614 = vrsqrt.pop %v610
      %v615 = vrsqrt.pop %v611
      %v616 = vrsqrt.pop %v612
      %v617 = vmul.f32 %v585, %v613
      %v618 = vmul.f32 %v586, %v614
      %v619 = vmul.f32 %v587, %v615
      %v620 = vmul.f32 %v588, %v616
      %v621 = vlaneseq
      %v622 = vshrl.u32 %v621, 7
      %v623 = vsub.s32 0, %v622
      %v624 = vrot.slane %v555, %v623
      %v625 = vmul.f32 %v617, %v624
      %v626 = vmul.f32 %v618, %v624
      %v627 = vmul.f32 %v619, %v624
      %v628 = vmul.f32 %v620, %v624
      %v629 = vlaneseq
      %v630 = vshrl.u32 %v629, 7
      %v631 = vsub.s32 1, %v630
      %v632 = vrot.slane %v555, %v631
      %v633 = vadd.f32 %v625, %v632
      %v634 = vadd.f32 %v626, %v632
      %v635 = vadd.f32 %v627, %v632
      %v636 = vadd.f32 %v628, %v632
      %v637 = vpack.c.bf16 %v634, %v633
      %v638 = vpack.c.bf16 %v636, %v635
      %640 = vset.pattern.permute.xlu0 0
      %641 = vperm.xlu0 %640, %v553
      %v642 = vpop.permute.xlu0 %641
      %645 = vset.pattern.permute.xlu0 0
      %646 = vperm.xlu0 %645, %v554
      %v647 = vpop.permute.xlu0 %646
      %v651 = vunpack.c.l.b16 %v551
      %v652 = vunpack.c.l.b16 %v552
      %v653 = vpack.c.b16 %v652, %v651
      %v655 = vsel %vm567, %v653, 0
      %657 = vmatprep.subr.bf16.mxu0 0
      %658 = vmatpush1.bf16.msra.mxu0 0
      %659 = vmatprep.subr.bf16.mxu0 0
      %660 = vmatpush1.bf16.msra.mxu0 0
      %661 = vmatprep.subr.bf16.mxu0 0
      %662 = vmatpush1.bf16.msra.mxu0 0
      %663 = vmatprep.subr.bf16.mxu0 0
      %664 = vmatpush1.bf16.msra.mxu0 0
      %665 = vmatprep.subr.bf16.mxu0 0
      %666 = vmatpush1.bf16.msra.mxu0 0
      %667 = vmatprep.subr.bf16.mxu0 0
      %668 = vmatpush1.bf16.msra.mxu0 0
      %669 = vmatprep.subr.bf16.mxu0 0
      %670 = vmatpush1.bf16.msra.mxu0 0
      %671 = vmatprep.subr.bf16.mxu0 0
      %672 = vmatpush1.bf16.msra.mxu0 %v637
      %673 = vmatprep.subr.bf16.mxu0 0
      %674 = vmatpush2.bf16.msra.mxu0 0
      %675 = vmatprep.subr.bf16.mxu0 0
      %676 = vmatpush2.bf16.msra.mxu0 0
      %677 = vmatprep.subr.bf16.mxu0 0
      %678 = vmatpush2.bf16.msra.mxu0 0
      %679 = vmatprep.subr.bf16.mxu0 0
      %680 = vmatpush2.bf16.msra.mxu0 0
      %681 = vmatprep.subr.bf16.mxu0 0
      %682 = vmatpush2.bf16.msra.mxu0 0
      %683 = vmatprep.subr.bf16.mxu0 0
      %684 = vmatpush2.bf16.msra.mxu0 0
      %685 = vmatprep.subr.bf16.mxu0 0
      %686 = vmatpush2.bf16.msra.mxu0 0
      %687 = vmatprep.subr.bf16.mxu0 0
      %688 = vmatpush2.bf16.msra.mxu0 0
      %689 = vmatprep.mubr.bf16.mxu0 0
      %690 = vmatmul.mubr.bf16.gmra.mxu0 %v655
      %v691 = vpop.f32.mrf.mxu0
      %v692 = vadd.f32 %v642, %v691
      %v693 = vpop.f32.mrf.mxu0
      %v694 = vpop.f32.mrf.mxu0
      %v695 = vadd.f32 %v647, %v694
      %v696 = vpop.f32.mrf.mxu0
      %697 = vdwg.mxu0
      %698 = vmatprep.subr.bf16.mxu0 0
      %699 = vmatpush1.bf16.msra.mxu0 0
      %700 = vmatprep.subr.bf16.mxu0 0
      %701 = vmatpush1.bf16.msra.mxu0 0
      %702 = vmatprep.subr.bf16.mxu0 0
      %703 = vmatpush1.bf16.msra.mxu0 0
      %704 = vmatprep.subr.bf16.mxu0 0
      %705 = vmatpush1.bf16.msra.mxu0 0
      %706 = vmatprep.subr.bf16.mxu0 0
      %707 = vmatpush1.bf16.msra.mxu0 0
      %708 = vmatprep.subr.bf16.mxu0 0
      %709 = vmatpush1.bf16.msra.mxu0 0
      %710 = vmatprep.subr.bf16.mxu0 0
      %711 = vmatpush1.bf16.msra.mxu0 0
      %712 = vmatprep.subr.bf16.mxu0 0
      %713 = vmatpush1.bf16.msra.mxu0 %v638
      %714 = vmatprep.subr.bf16.mxu0 0
      %715 = vmatpush2.bf16.msra.mxu0 0
      %716 = vmatprep.subr.bf16.mxu0 0
      %717 = vmatpush2.bf16.msra.mxu0 0
      %718 = vmatprep.subr.bf16.mxu0 0
      %719 = vmatpush2.bf16.msra.mxu0 0
      %720 = vmatprep.subr.bf16.mxu0 0
      %721 = vmatpush2.bf16.msra.mxu0 0
      %722 = vmatprep.subr.bf16.mxu0 0
      %723 = vmatpush2.bf16.msra.mxu0 0
      %724 = vmatprep.subr.bf16.mxu0 0
      %725 = vmatpush2.bf16.msra.mxu0 0
      %726 = vmatprep.subr.bf16.mxu0 0
      %727 = vmatpush2.bf16.msra.mxu0 0
      %728 = vmatprep.subr.bf16.mxu0 0
      %729 = vmatpush2.bf16.msra.mxu0 0
      %730 = vmatprep.mubr.bf16.mxu0 0
      %731 = vmatmul.mubr.bf16.gmra.mxu0 %v655
      %v732 = vpop.f32.mrf.mxu0
      %v733 = vadd.f32 %v642, %v732
      %v734 = vpop.f32.mrf.mxu0
      %v735 = vpop.f32.mrf.mxu0
      %v736 = vadd.f32 %v647, %v735
      %v737 = vpop.f32.mrf.mxu0
      %738 = vdwg.mxu0
      %v739 = vadd.f32 %v692, %v547
      %v740 = vadd.f32 %v695, %v548
      %v741 = vadd.f32 %v733, %v549
      %v742 = vadd.f32 %v736, %v550
      %v743 = vsel %vm567, %v739, 0.0
      %744 = vadd.xlane.f32.xlu0 %v743
      %v745 = vpop.xlane.xlu0 %744
      %v746 = vsel %vm567, %v740, 0.0
      %747 = vadd.xlane.f32.xlu0 %v746
      %v748 = vpop.xlane.xlu0 %747
      %v749 = vsel %vm567, %v741, 0.0
      %750 = vadd.xlane.f32.xlu0 %v749
      %v751 = vpop.xlane.xlu0 %750
      %v752 = vsel %vm567, %v742, 0.0
      %753 = vadd.xlane.f32.xlu0 %v752
      %v754 = vpop.xlane.xlu0 %753
      %v755 = vmul.f32 %v745, %v580
      %v756 = vmul.f32 %v748, %v580
      %v757 = vmul.f32 %v751, %v580
      %v758 = vmul.f32 %v754, %v580
      %v759 = vsub.f32 %v739, %v755
      %v760 = vsub.f32 %v740, %v756
      %v761 = vsub.f32 %v741, %v757
      %v762 = vsub.f32 %v742, %v758
      %v763 = vmul.f32 %v759, %v759
      %v764 = vmul.f32 %v760, %v760
      %v765 = vmul.f32 %v761, %v761
      %v766 = vmul.f32 %v762, %v762
      %v767 = vsel %vm567, %v763, 0.0
      %768 = vadd.xlane.f32.xlu0 %v767
      %v769 = vpop.xlane.xlu0 %768
      %v770 = vsel %vm567, %v764, 0.0
      %771 = vadd.xlane.f32.xlu0 %v770
      %v772 = vpop.xlane.xlu0 %771
      %v773 = vsel %vm567, %v765, 0.0
      %774 = vadd.xlane.f32.xlu0 %v773
      %v775 = vpop.xlane.xlu0 %774
      %v776 = vsel %vm567, %v766, 0.0
      %777 = vadd.xlane.f32.xlu0 %v776
      %v778 = vpop.xlane.xlu0 %777
      %v779 = vmul.f32 %v769, %v580
      %v780 = vmul.f32 %v772, %v580
      %v781 = vmul.f32 %v775, %v580
      %v782 = vmul.f32 %v778, %v580
      %v783 = vadd.f32 %v779, 1e-05
      %v784 = vadd.f32 %v780, 1e-05
      %v785 = vadd.f32 %v781, 1e-05
      %v786 = vadd.f32 %v782, 1e-05
      %v787 = vrsqrt.pop %v783
      %v788 = vrsqrt.pop %v784
      %v789 = vrsqrt.pop %v785
      %v790 = vrsqrt.pop %v786
      %v791 = vmul.f32 %v759, %v787
      %v792 = vmul.f32 %v760, %v788
      %v793 = vmul.f32 %v761, %v789
      %v794 = vmul.f32 %v762, %v790
      %v795 = vlaneseq
      %v796 = vshrl.u32 %v795, 7
      %v797 = vsub.s32 2, %v796
      %v798 = vrot.slane %v555, %v797
      %v799 = vmul.f32 %v791, %v798
      %v800 = vmul.f32 %v792, %v798
      %v801 = vmul.f32 %v793, %v798
      %v802 = vmul.f32 %v794, %v798
      %v803 = vlaneseq
      %v804 = vshrl.u32 %v803, 7
      %v805 = vsub.s32 3, %v804
      %v806 = vrot.slane %v555, %v805
      %v807 = vadd.f32 %v799, %v806
      %v808 = vadd.f32 %v800, %v806
      %v809 = vadd.f32 %v801, %v806
      %v810 = vadd.f32 %v802, %v806
      %v811 = vpack.c.bf16 %v808, %v807
      %v812 = vpack.c.bf16 %v810, %v809
      %v814 = vlaneseq
      %v815 = vshrl.u32 %v814, 7
      %v816 = vsub.s32 0, %v815
      %v817 = vrot.slane %v558, %v816
      %v821 = vunpack.c.l.b16 %v556
      %v822 = vunpack.c.l.b16 %v557
      %v823 = vpack.c.b16 %v822, %v821
      %v826 = vsel %vm567, %v811, 0
      %v829 = vsel %vm567, %v812, 0
      %831 = vmatprep.subr.bf16.mxu0 0
      %832 = vmatpush1.bf16.msra.mxu0 0
      %833 = vmatprep.subr.bf16.mxu0 0
      %834 = vmatpush1.bf16.msra.mxu0 0
      %835 = vmatprep.subr.bf16.mxu0 0
      %836 = vmatpush1.bf16.msra.mxu0 0
      %837 = vmatprep.subr.bf16.mxu0 0
      %838 = vmatpush1.bf16.msra.mxu0 0
      %839 = vmatprep.subr.bf16.mxu0 0
      %840 = vmatpush1.bf16.msra.mxu0 0
      %841 = vmatprep.subr.bf16.mxu0 0
      %842 = vmatpush1.bf16.msra.mxu0 0
      %843 = vmatprep.subr.bf16.mxu0 0
      %844 = vmatpush1.bf16.msra.mxu0 0
      %845 = vmatprep.subr.bf16.mxu0 0
      %846 = vmatpush1.bf16.msra.mxu0 %v823
      %847 = vmatprep.subr.bf16.mxu0 0
      %848 = vmatpush2.bf16.msra.mxu0 0
      %849 = vmatprep.subr.bf16.mxu0 0
      %850 = vmatpush2.bf16.msra.mxu0 0
      %851 = vmatprep.subr.bf16.mxu0 0
      %852 = vmatpush2.bf16.msra.mxu0 0
      %853 = vmatprep.subr.bf16.mxu0 0
      %854 = vmatpush2.bf16.msra.mxu0 0
      %855 = vmatprep.subr.bf16.mxu0 0
      %856 = vmatpush2.bf16.msra.mxu0 0
      %857 = vmatprep.subr.bf16.mxu0 0
      %858 = vmatpush2.bf16.msra.mxu0 0
      %859 = vmatprep.subr.bf16.mxu0 0
      %860 = vmatpush2.bf16.msra.mxu0 0
      %861 = vmatprep.subr.bf16.mxu0 0
      %862 = vmatpush2.bf16.msra.mxu0 0
      %863 = vmatprep.mubr.bf16.mxu0 0
      %864 = vmatmul.mubr.bf16.gmra.mxu0 %v826
      %v865 = vpop.f32.mrf.mxu0
      %v866 = vadd.f32 %v817, %v865
      %v867 = vpop.f32.mrf.mxu0
      %v868 = vpop.f32.mrf.mxu0
      %v869 = vadd.f32 %v817, %v868
      %v870 = vpop.f32.mrf.mxu0
      %871 = vmatprep.mubr.bf16.mxu0 0
      %872 = vmatmul.mubr.bf16.gmra.mxu0 %v829
      %v873 = vpop.f32.mrf.mxu0
      %v874 = vadd.f32 %v817, %v873
      %v875 = vpop.f32.mrf.mxu0
      %v876 = vpop.f32.mrf.mxu0
      %v877 = vadd.f32 %v817, %v876
      %v878 = vpop.f32.mrf.mxu0
      %879 = vdwg.mxu0
      %v880 = vpack.c.bf16 %v869, %v866
      %v881 = vpack.c.bf16 %v877, %v874
      %v882 = vmul.bf16 %v880, %v880
      %v883 = vmul.bf16 %v881, %v881
      %v884 = vmul.bf16 %v882, %v880
      %v885 = vmul.bf16 %v883, %v881
      %v886 = vmul.bf16 %v884, 1027030327
      %v887 = vmul.bf16 %v885, 1027030327
      %v888 = vadd.bf16 %v880, %v886
      %v889 = vadd.bf16 %v881, %v887
      %v890 = vmul.bf16 %v888, 1061961548
      %v891 = vmul.bf16 %v889, 1061961548
      %v892 = vmul.bf16 %v880, 1056980736
      %v893 = vmul.bf16 %v881, 1056980736
      %v894 = vtanh.bf16.pop %v890
      %v895 = vtanh.bf16.pop %v891
      %v896 = vadd.bf16 %v894, 1065369472
      %v897 = vadd.bf16 %v895, 1065369472
      %v898 = vmul.bf16 %v892, %v896
      %v899 = vmul.bf16 %v893, %v897
      %v900 = vlaneseq
      %v901 = vshrl.u32 %v900, 7
      %v902 = vsub.s32 4, %v901
      %v903 = vrot.slane %v555, %v902
      %v912 = vunpack.c.l.b16 %v559
      %v913 = vunpack.c.l.b16 %v560
      %v914 = vunpack.c.l.b16 %v561
      %v915 = vunpack.c.l.b16 %v562
      %v916 = vunpack.c.l.b16 %v563
      %v917 = vunpack.c.l.b16 %v564
      %v918 = vunpack.c.l.b16 %v565
      %v919 = vunpack.c.l.b16 %v566
      %v920 = vpack.c.b16 %v913, %v912
      %v921 = vpack.c.b16 %v915, %v914
      %v922 = vpack.c.b16 %v917, %v916
      %v923 = vpack.c.b16 %v919, %v918
      %vm928 = vcmask 523264
      %v930 = vsel %vm928, %v898, 0
      %v933 = vsel %vm928, %v899, 0
      %935 = vmatprep.subr.bf16.mxu0 0
      %936 = vmatpush1.bf16.msra.mxu0 0
      %937 = vmatprep.subr.bf16.mxu0 0
      %938 = vmatpush1.bf16.msra.mxu0 0
      %939 = vmatprep.subr.bf16.mxu0 0
      %940 = vmatpush1.bf16.msra.mxu0 0
      %941 = vmatprep.subr.bf16.mxu0 0
      %942 = vmatpush1.bf16.msra.mxu0 0
      %943 = vmatprep.subr.bf16.mxu0 0
      %944 = vmatpush1.bf16.msra.mxu0 %v923
      %945 = vmatprep.subr.bf16.mxu0 0
      %946 = vmatpush1.bf16.msra.mxu0 %v922
      %947 = vmatprep.subr.bf16.mxu0 0
      %948 = vmatpush1.bf16.msra.mxu0 %v921
      %949 = vmatprep.subr.bf16.mxu0 0
      %950 = vmatpush1.bf16.msra.mxu0 %v920
      %951 = vmatprep.subr.bf16.mxu0 0
      %952 = vmatpush2.bf16.msra.mxu0 0
      %953 = vmatprep.subr.bf16.mxu0 0
      %954 = vmatpush2.bf16.msra.mxu0 0
      %955 = vmatprep.subr.bf16.mxu0 0
      %956 = vmatpush2.bf16.msra.mxu0 0
      %957 = vmatprep.subr.bf16.mxu0 0
      %958 = vmatpush2.bf16.msra.mxu0 0
      %959 = vmatprep.subr.bf16.mxu0 0
      %960 = vmatpush2.bf16.msra.mxu0 0
      %961 = vmatprep.subr.bf16.mxu0 0
      %962 = vmatpush2.bf16.msra.mxu0 0
      %963 = vmatprep.subr.bf16.mxu0 0
      %964 = vmatpush2.bf16.msra.mxu0 0
      %965 = vmatprep.subr.bf16.mxu0 0
      %966 = vmatpush2.bf16.msra.mxu0 0
      %967 = vmatprep.mubr.bf16.mxu0 0
      %968 = vmatmul.mubr.bf16.gmra.mxu0 %v930
      %v969 = vpop.f32.mrf.mxu0
      %v970 = vadd.f32 %v903, %v969
      %v971 = vpop.f32.mrf.mxu0
      %v972 = vpop.f32.mrf.mxu0
      %v973 = vadd.f32 %v903, %v972
      %v974 = vpop.f32.mrf.mxu0
      %975 = vmatprep.mubr.bf16.mxu0 0
      %976 = vmatmul.mubr.bf16.gmra.mxu0 %v933
      %v977 = vpop.f32.mrf.mxu0
      %v978 = vadd.f32 %v903, %v977
      %v979 = vpop.f32.mrf.mxu0
      %v980 = vpop.f32.mrf.mxu0
      %v981 = vadd.f32 %v903, %v980
      %v982 = vpop.f32.mrf.mxu0
      %983 = vdwg.mxu0
      %v984 = vadd.f32 %v970, %v739
      %v985 = vadd.f32 %v973, %v740
      %v986 = vadd.f32 %v978, %v741
      %v987 = vadd.f32 %v981, %v742
      %988 = vst.msk [vmem:[%s457] sm:$0xff] %vm567, %v984
      %989 = vst.msk [vmem:[%s457 + $0x8] sm:$0xff] %vm567, %v985
      %990 = vst.msk [vmem:[%s457 + $0x10] sm:$0xff] %vm567, %v986
      %991 = vst.msk [vmem:[%s457 + $0x18] sm:$0xff] %vm567, %v987
      %s992 = smul.u32 4, %s24
      %p993 = scmp.lt.s32.totalorder %s992, 3
      %s994 = scalar_select %p993, %s992, 3
      %s995 = smul.addr %s994, 8
      %s996 = scalar_lea.vmem %s9, %s995
      // Predicated region
      $region61: #{autoencoding_mixer_forward.4} parent=55 // pred_check
        %p997 = pneg %p274
      $region62: #{autoencoding_mixer_forward.4} parent=55 // pred_check_branch
        %999 = sbr.rel (%p997) target = $region64
      $region63: #{autoencoding_mixer_forward.4} parent=55 // pred_region
        %s1000 = smul.u32 4, %s24
      $region64: #{autoencoding_mixer_forward.4} parent=55 // pred_fallthru
        _
      // Predicated region
      $region65: #{autoencoding_mixer_forward.4} parent=55 // pred_check
        %p1001 = pneg %p274
      $region66: #{autoencoding_mixer_forward.4} parent=55 // pred_check_branch
        %1003 = sbr.rel (%p1001) target = $region68
      $region67: #{autoencoding_mixer_forward.4} parent=55 // pred_region
        %s1004 = smul.u32 4, %s24
        %p1005 = scmp.lt.s32.totalorder %s1004, 3
        %s1006 = scalar_select %p1005, %s1004, 3
        %s1007 = smul.addr %s1006, 8
        %s1008 = scalar_lea.vmem %s9, %s1007
      $region68: #{autoencoding_mixer_forward.4} parent=55 // pred_fallthru
        _
    $region56: #{autoencoding_mixer_forward.4} parent=5 // pred_fallthru
      _
    %p1009 = scmp.le.s32.totalorder 2, %s15
    // Predicated region
    $region69: #{autoencoding_mixer_forward.4} parent=5 // pred_check
      %p1010 = pneg %p1009
    $region70: #{autoencoding_mixer_forward.4} parent=5 // pred_check_branch
      %1012 = sbr.rel (%p1010) target = $region72
    $region71: #{autoencoding_mixer_forward.4} parent=5 // pred_region
      %s1013 = ssub.s32 %s15, 2
    $region72: #{autoencoding_mixer_forward.4} parent=5 // pred_fallthru
      _
  $region6: #{autoencoding_mixer_forward.4} parent=0 // loop_footer
    %s19 = sadd.s32 1, %s15
  $region7: #{autoencoding_mixer_forward.4} parent=0 // loop_footer_branch
    %14 = sbr.rel target = $region3
  $region8: #{autoencoding_mixer_forward.4} parent=0 // loop_exit
    _

</llo_original>
